<compile_context>
chip_gen: v7x
topology: tpu7x:2x2x1
jax: 0.10.0
libtpu: 0.0.40
codegen_flags: <defaults>
</compile_context>

<pallas_src>
from functools import partial

import jax
import jax.numpy as jnp
from jax.experimental import pallas as pl
from jax.experimental.pallas import tpu as pltpu

# ---------------- configuration (small, consistent with the module) ----------------
DIM = 32            # dim
MOTION_DIM = 16     # motion_dim
NUM_HEADS = 4
B = 2               # batch (e.g. two stacked frames)
H = 8
W = 8
N = H * W           # tokens
HEAD_DIM = DIM // NUM_HEADS
M_HEAD_DIM = MOTION_DIM // NUM_HEADS
SCALE = HEAD_DIM ** -0.5


# ---------------- fused Pallas kernel ----------------------------------------------
def _ifa_kernel(x1_ref, x2_ref, cor_ref,
                wq_ref, wk_ref, wv_ref, wcor_ref,
                wproj_ref, bproj_ref, wmproj_ref, bmproj_ref,
                xo_ref, mo_ref, *, nh, scale):
    f32 = jnp.float32
    x1 = x1_ref[0]                      # (N, C)
    x2 = x2_ref[0]                      # (N, C)
    cor = cor_ref[0]                    # (N, 2)
    n_tok, C = x1.shape

    # Broadcast activations over the head axis so every matmul below is a
    # plain batched dot_general (no in-kernel reshapes / transposes).
    x1b = jnp.broadcast_to(x1[None], (nh, n_tok, C))
    x2b = jnp.broadcast_to(x2[None], (nh, n_tok, C))
    corb = jnp.broadcast_to(cor[None], (nh, n_tok, cor.shape[-1]))

    # Per-head projections: weights arrive pre-reshaped as (nh, in, head_out).
    qh = jnp.einsum('hnc,hcd->hnd', x1b, wq_ref[...], preferred_element_type=f32)
    kh = jnp.einsum('hnc,hcd->hnd', x2b, wk_ref[...], preferred_element_type=f32)
    vh = jnp.einsum('hnc,hcd->hnd', x2b, wv_ref[...], preferred_element_type=f32)
    ceh = jnp.einsum('hnc,hcd->hnd', corb, wcor_ref[...], preferred_element_type=f32)

    # Attention logits + softmax (batched over heads).
    logits = jnp.einsum('hnd,hmd->hnm', qh, kh, preferred_element_type=f32) * scale
    logits = logits - jnp.max(logits, axis=-1, keepdims=True)
    p = jnp.exp(logits)
    p = p * pl.reciprocal(jnp.sum(p, axis=-1, keepdims=True), approx=False)

    # Attention-weighted values / coordinate embeddings.
    xo = jnp.einsum('hnm,hmd->hnd', p, vh, preferred_element_type=f32)    # (nh, N, hd)
    co = jnp.einsum('hnm,hmd->hnd', p, ceh, preferred_element_type=f32)   # (nh, N, mhd)

    # Head-concat + output projections, expressed as per-head matmul + sum-over-heads.
    x_out = jnp.sum(
        jnp.einsum('hnd,hdc->hnc', xo, wproj_ref[...], preferred_element_type=f32),
        axis=0) + bproj_ref[...]
    m_out = jnp.sum(
        jnp.einsum('hnd,hdm->hnm', co - ceh, wmproj_ref[...], preferred_element_type=f32),
        axis=0) + bmproj_ref[...]

    xo_ref[0] = x_out
    mo_ref[0] = m_out


def interframe_attention(x1, x2, cor, params):
    Bn, n_tok, C = x1.shape
    md = MOTION_DIM
    nh = NUM_HEADS
    hd = C // nh
    mhd = md // nh

    # One-time per-head weight reshapes (tiny, outside the kernel).
    wq_h = params["wq"].reshape(C, nh, hd).transpose(1, 0, 2)            # (nh, C, hd)
    wk_h = params["wkv"][:, :C].reshape(C, nh, hd).transpose(1, 0, 2)    # (nh, C, hd)
    wv_h = params["wkv"][:, C:].reshape(C, nh, hd).transpose(1, 0, 2)    # (nh, C, hd)
    wcor_h = params["wcor"].reshape(2, nh, mhd).transpose(1, 0, 2)       # (nh, 2, mhd)
    wproj_h = params["wproj"].reshape(nh, hd, C)                         # (nh, hd, C)
    wmproj_h = params["wmproj"].reshape(nh, mhd, md)                     # (nh, mhd, md)
    bproj = params["bproj"].reshape(1, C)
    bmproj = params["bmproj"].reshape(1, md)

    kernel = partial(_ifa_kernel, nh=nh, scale=SCALE)
    grid_spec = pltpu.PrefetchScalarGridSpec(
        num_scalar_prefetch=0,
        grid=(Bn,),
        in_specs=[
            pl.BlockSpec((1, n_tok, C), lambda b: (b, 0, 0)),      # x1
            pl.BlockSpec((1, n_tok, C), lambda b: (b, 0, 0)),      # x2
            pl.BlockSpec((1, n_tok, 2), lambda b: (b, 0, 0)),      # cor
            pl.BlockSpec((nh, C, hd), lambda b: (0, 0, 0)),        # Wq per-head
            pl.BlockSpec((nh, C, hd), lambda b: (0, 0, 0)),        # Wk per-head
            pl.BlockSpec((nh, C, hd), lambda b: (0, 0, 0)),        # Wv per-head
            pl.BlockSpec((nh, 2, mhd), lambda b: (0, 0, 0)),       # Wcor per-head
            pl.BlockSpec((nh, hd, C), lambda b: (0, 0, 0)),        # Wproj per-head
            pl.BlockSpec((1, C), lambda b: (0, 0)),                # bproj
            pl.BlockSpec((nh, mhd, md), lambda b: (0, 0, 0)),      # Wmproj per-head
            pl.BlockSpec((1, md), lambda b: (0, 0)),               # bmproj
        ],
        out_specs=[
            pl.BlockSpec((1, n_tok, C), lambda b: (b, 0, 0)),
            pl.BlockSpec((1, n_tok, md), lambda b: (b, 0, 0)),
        ],
    )
    return pl.pallas_call(
        kernel,
        grid_spec=grid_spec,
        out_shape=(jax.ShapeDtypeStruct((Bn, n_tok, C), jnp.float32),
                   jax.ShapeDtypeStruct((Bn, n_tok, md), jnp.float32)),
        compiler_params=pltpu.CompilerParams(dimension_semantics=("parallel",)),
    )(x1, x2, cor, wq_h, wk_h, wv_h, wcor_h, wproj_h, bproj, wmproj_h, bmproj)


# ---------------- pure-JAX reference (mirrors the PyTorch forward) -------------------
def reference_forward(x1, x2, cor, params):
    Bn, n_tok, C = x1.shape
    nh, hd = NUM_HEADS, C // NUM_HEADS
    md, mhd = MOTION_DIM, MOTION_DIM // NUM_HEADS

    q = x1 @ params["wq"]
    kv = x2 @ params["wkv"]
    k, v = kv[..., :C], kv[..., C:]
    ce = cor @ params["wcor"]                                 # cor_embed_

    def heads(t, d):
        return t.reshape(Bn, n_tok, nh, d).transpose(0, 2, 1, 3)

    qh, kh, vh, ceh = heads(q, hd), heads(k, hd), heads(v, hd), heads(ce, mhd)
    attn = jax.nn.softmax(jnp.einsum('bhnd,bhmd->bhnm', qh, kh) * SCALE, axis=-1)
    xo = jnp.einsum('bhnm,bhmd->bhnd', attn, vh).transpose(0, 2, 1, 3).reshape(Bn, n_tok, C)
    co = jnp.einsum('bhnm,bhmd->bhnd', attn, ceh).transpose(0, 2, 1, 3).reshape(Bn, n_tok, md)
    x = xo @ params["wproj"] + params["bproj"]
    motion = (co - ce) @ params["wmproj"] + params["bmproj"]
    return x, motion


# ---------------- deterministic parameter init ---------------------------------------
def make_params(key):
    ks = jax.random.split(key, 7)

    def rnd(k, shape, scale):
        return jax.random.normal(k, shape, jnp.float32) * scale

    # Linear weights stored as (in_features, out_features) = PyTorch W.T
    return {
        "wq": rnd(ks[0], (DIM, DIM), 0.1),                 # q (bias=False)
        "wkv": rnd(ks[1], (DIM, 2 * DIM), 0.1),            # kv (bias=False)
        "wcor": rnd(ks[2], (2, MOTION_DIM), 0.1),          # cor_embed (bias=False)
        "wproj": rnd(ks[3], (DIM, DIM), 0.1),              # proj
        "bproj": rnd(ks[4], (DIM,), 0.05),
        "wmproj": rnd(ks[5], (MOTION_DIM, MOTION_DIM), 0.1),   # motion_proj
        "bmproj": rnd(ks[6], (MOTION_DIM,), 0.05),
    }


if __name__ == "__main__":
    key = jax.random.PRNGKey(0)
    k1, k2, k3, kp = jax.random.split(key, 4)
    x1 = jax.random.normal(k1, (B, N, DIM), jnp.float32)   # frame-A tokens
    x2 = jax.random.normal(k2, (B, N, DIM), jnp.float32)   # frame-B tokens
    cor = jax.random.normal(k3, (B, N, 2), jnp.float32)    # coordinates
    params = make_params(kp)

    out_x, out_motion = jax.jit(interframe_attention)(x1, x2, cor, params)
    jax.block_until_ready(out_x)
    jax.block_until_ready(out_motion)

    ref_x, ref_motion = reference_forward(x1, x2, cor, params)
    assert bool(jnp.allclose(out_x, ref_x, atol=5e-4, rtol=5e-4)), "x mismatch"
    assert bool(jnp.allclose(out_motion, ref_motion, atol=5e-4, rtol=5e-4)), "motion mismatch"

    print("KERNEL_OK")
</pallas_src>

<mosaic_0001>
module attributes {stable_mosaic.version = 11 : i64} {
  func.func @_ifa_kernel(%arg0: i32, %arg1: memref<1x64x32xf32, #tpu.memory_space<vmem>>, %arg2: memref<1x64x32xf32, #tpu.memory_space<vmem>>, %arg3: memref<1x64x2xf32, #tpu.memory_space<vmem>>, %arg4: memref<4x32x8xf32, #tpu.memory_space<vmem>>, %arg5: memref<4x32x8xf32, #tpu.memory_space<vmem>>, %arg6: memref<4x32x8xf32, #tpu.memory_space<vmem>>, %arg7: memref<4x2x4xf32, #tpu.memory_space<vmem>>, %arg8: memref<4x8x32xf32, #tpu.memory_space<vmem>>, %arg9: memref<1x32xf32, #tpu.memory_space<vmem>>, %arg10: memref<4x4x16xf32, #tpu.memory_space<vmem>>, %arg11: memref<1x16xf32, #tpu.memory_space<vmem>>, %arg12: memref<1x64x32xf32, #tpu.memory_space<vmem>>, %arg13: memref<1x64x16xf32, #tpu.memory_space<vmem>>) attributes {dimension_semantics = [#tpu.dimension_semantics<parallel>], iteration_bounds = array<i64: 2>, scalar_prefetch = 0 : i64, scratch_operands = 0 : i64, tpu.core_type = #tpu.core_type<tc>, window_params = [{transform_indices = @transform_0, window_bounds = array<i64: 1, 64, 32>}, {transform_indices = @transform_1, window_bounds = array<i64: 1, 64, 32>}, {transform_indices = @transform_2, window_bounds = array<i64: 1, 64, 2>}, {pipeline_mode = #tpu.pipeline_mode<synchronous>, transform_indices = @transform_3, window_bounds = array<i64: 4, 32, 8>}, {pipeline_mode = #tpu.pipeline_mode<synchronous>, transform_indices = @transform_4, window_bounds = array<i64: 4, 32, 8>}, {pipeline_mode = #tpu.pipeline_mode<synchronous>, transform_indices = @transform_5, window_bounds = array<i64: 4, 32, 8>}, {pipeline_mode = #tpu.pipeline_mode<synchronous>, transform_indices = @transform_6, window_bounds = array<i64: 4, 2, 4>}, {pipeline_mode = #tpu.pipeline_mode<synchronous>, transform_indices = @transform_7, window_bounds = array<i64: 4, 8, 32>}, {pipeline_mode = #tpu.pipeline_mode<synchronous>, transform_indices = @transform_8, window_bounds = array<i64: 1, 32>}, {pipeline_mode = #tpu.pipeline_mode<synchronous>, transform_indices = @transform_9, window_bounds = array<i64: 4, 4, 16>}, {pipeline_mode = #tpu.pipeline_mode<synchronous>, transform_indices = @transform_10, window_bounds = array<i64: 1, 16>}, {transform_indices = @transform_11, window_bounds = array<i64: 1, 64, 32>}, {transform_indices = @transform_12, window_bounds = array<i64: 1, 64, 16>}]} {
    %c0 = arith.constant 0 : index
    %c0_0 = arith.constant 0 : index
    %c0_1 = arith.constant 0 : index
    %0 = vector.load %arg1[%c0, %c0_0, %c0_1] : memref<1x64x32xf32, #tpu.memory_space<vmem>>, vector<1x64x32xf32>
    %1 = vector.shape_cast %0 : vector<1x64x32xf32> to vector<64x32xf32>
    %c0_2 = arith.constant 0 : index
    %c0_3 = arith.constant 0 : index
    %c0_4 = arith.constant 0 : index
    %2 = vector.load %arg2[%c0_2, %c0_3, %c0_4] : memref<1x64x32xf32, #tpu.memory_space<vmem>>, vector<1x64x32xf32>
    %3 = vector.shape_cast %2 : vector<1x64x32xf32> to vector<64x32xf32>
    %c0_5 = arith.constant 0 : index
    %c0_6 = arith.constant 0 : index
    %c0_7 = arith.constant 0 : index
    %4 = vector.load %arg3[%c0_5, %c0_6, %c0_7] : memref<1x64x2xf32, #tpu.memory_space<vmem>>, vector<1x64x2xf32>
    %5 = vector.shape_cast %4 : vector<1x64x2xf32> to vector<64x2xf32>
    %6 = vector.shape_cast %1 : vector<64x32xf32> to vector<1x64x32xf32>
    %7 = vector.shape_cast %6 : vector<1x64x32xf32> to vector<1x64x32xf32>
    %8 = vector.broadcast %7 : vector<1x64x32xf32> to vector<4x64x32xf32>
    %9 = vector.shape_cast %3 : vector<64x32xf32> to vector<1x64x32xf32>
    %10 = vector.shape_cast %9 : vector<1x64x32xf32> to vector<1x64x32xf32>
    %11 = vector.broadcast %10 : vector<1x64x32xf32> to vector<4x64x32xf32>
    %12 = vector.shape_cast %5 : vector<64x2xf32> to vector<1x64x2xf32>
    %13 = vector.shape_cast %12 : vector<1x64x2xf32> to vector<1x64x2xf32>
    %14 = vector.broadcast %13 : vector<1x64x2xf32> to vector<4x64x2xf32>
    %c0_8 = arith.constant 0 : index
    %c0_9 = arith.constant 0 : index
    %c0_10 = arith.constant 0 : index
    %15 = vector.load %arg4[%c0_8, %c0_9, %c0_10] : memref<4x32x8xf32, #tpu.memory_space<vmem>>, vector<4x32x8xf32>
    "tpu.trace_start"() <{level = 10 : i32, message = "hnc,hcd->hnd"}> : () -> ()
    %cst = arith.constant dense<0.000000e+00> : vector<4x64x8xf32>
    %16 = tpu.matmul %8, %15, %cst {dimension_numbers = #tpu.dot_dimension_numbers<[2], [1], [1], [2], [0, 0, 0, 1, 1, 2], [0], [0]>} : vector<4x64x32xf32>, vector<4x32x8xf32>, vector<4x64x8xf32> -> vector<4x64x8xf32>
    "tpu.trace_stop"() : () -> ()
    %c0_11 = arith.constant 0 : index
    %c0_12 = arith.constant 0 : index
    %c0_13 = arith.constant 0 : index
    %17 = vector.load %arg5[%c0_11, %c0_12, %c0_13] : memref<4x32x8xf32, #tpu.memory_space<vmem>>, vector<4x32x8xf32>
    "tpu.trace_start"() <{level = 10 : i32, message = "hnc,hcd->hnd"}> : () -> ()
    %cst_14 = arith.constant dense<0.000000e+00> : vector<4x64x8xf32>
    %18 = tpu.matmul %11, %17, %cst_14 {dimension_numbers = #tpu.dot_dimension_numbers<[2], [1], [1], [2], [0, 0, 0, 1, 1, 2], [0], [0]>} : vector<4x64x32xf32>, vector<4x32x8xf32>, vector<4x64x8xf32> -> vector<4x64x8xf32>
    "tpu.trace_stop"() : () -> ()
    %c0_15 = arith.constant 0 : index
    %c0_16 = arith.constant 0 : index
    %c0_17 = arith.constant 0 : index
    %19 = vector.load %arg6[%c0_15, %c0_16, %c0_17] : memref<4x32x8xf32, #tpu.memory_space<vmem>>, vector<4x32x8xf32>
    "tpu.trace_start"() <{level = 10 : i32, message = "hnc,hcd->hnd"}> : () -> ()
    %cst_18 = arith.constant dense<0.000000e+00> : vector<4x64x8xf32>
    %20 = tpu.matmul %11, %19, %cst_18 {dimension_numbers = #tpu.dot_dimension_numbers<[2], [1], [1], [2], [0, 0, 0, 1, 1, 2], [0], [0]>} : vector<4x64x32xf32>, vector<4x32x8xf32>, vector<4x64x8xf32> -> vector<4x64x8xf32>
    "tpu.trace_stop"() : () -> ()
    %c0_19 = arith.constant 0 : index
    %c0_20 = arith.constant 0 : index
    %c0_21 = arith.constant 0 : index
    %21 = vector.load %arg7[%c0_19, %c0_20, %c0_21] : memref<4x2x4xf32, #tpu.memory_space<vmem>>, vector<4x2x4xf32>
    "tpu.trace_start"() <{level = 10 : i32, message = "hnc,hcd->hnd"}> : () -> ()
    %cst_22 = arith.constant dense<0.000000e+00> : vector<4x64x4xf32>
    %22 = tpu.matmul %14, %21, %cst_22 {dimension_numbers = #tpu.dot_dimension_numbers<[2], [1], [1], [2], [0, 0, 0, 1, 1, 2], [0], [0]>} : vector<4x64x2xf32>, vector<4x2x4xf32>, vector<4x64x4xf32> -> vector<4x64x4xf32>
    "tpu.trace_stop"() : () -> ()
    "tpu.trace_start"() <{level = 10 : i32, message = "hnd,hmd->hnm"}> : () -> ()
    %cst_23 = arith.constant dense<0.000000e+00> : vector<4x64x64xf32>
    %23 = tpu.matmul %16, %18, %cst_23 {dimension_numbers = #tpu.dot_dimension_numbers<[2], [2], [1], [1], [0, 0, 0, 1, 1, 1], [0], [0]>} : vector<4x64x8xf32>, vector<4x64x8xf32>, vector<4x64x64xf32> -> vector<4x64x64xf32>
    "tpu.trace_stop"() : () -> ()
    %cst_24 = arith.constant 0.353553385 : f32
    %24 = vector.broadcast %cst_24 : f32 to vector<4x64x64xf32>
    %25 = arith.mulf %23, %24 : vector<4x64x64xf32>
    %cst_25 = arith.constant dense<0xFF800000> : vector<4x64xf32>
    %26 = vector.multi_reduction <maximumf>, %25, %cst_25 [2] : vector<4x64x64xf32> to vector<4x64xf32>
    %27 = vector.shape_cast %26 : vector<4x64xf32> to vector<4x64x1xf32>
    %28 = vector.broadcast %27 : vector<4x64x1xf32> to vector<4x64x64xf32>
    %29 = arith.subf %25, %28 : vector<4x64x64xf32>
    %30 = math.exp %29 : vector<4x64x64xf32>
    %cst_26 = arith.constant dense<0.000000e+00> : vector<4x64xf32>
    %31 = vector.multi_reduction <add>, %30, %cst_26 [2] : vector<4x64x64xf32> to vector<4x64xf32>
    %32 = vector.shape_cast %31 : vector<4x64xf32> to vector<4x64x1xf32>
    %33 = tpu.reciprocal %32 : vector<4x64x1xf32> -> vector<4x64x1xf32>
    %34 = vector.broadcast %33 : vector<4x64x1xf32> to vector<4x64x64xf32>
    %35 = arith.mulf %30, %34 : vector<4x64x64xf32>
    "tpu.trace_start"() <{level = 10 : i32, message = "hnm,hmd->hnd"}> : () -> ()
    %cst_27 = arith.constant dense<0.000000e+00> : vector<4x64x8xf32>
    %36 = tpu.matmul %35, %20, %cst_27 {dimension_numbers = #tpu.dot_dimension_numbers<[2], [1], [1], [2], [0, 0, 0, 1, 1, 2], [0], [0]>} : vector<4x64x64xf32>, vector<4x64x8xf32>, vector<4x64x8xf32> -> vector<4x64x8xf32>
    %cst_28 = arith.constant dense<0.000000e+00> : vector<4x64x4xf32>
    %37 = tpu.matmul %35, %22, %cst_28 {dimension_numbers = #tpu.dot_dimension_numbers<[2], [1], [1], [2], [0, 0, 0, 1, 1, 2], [0], [0]>} : vector<4x64x64xf32>, vector<4x64x4xf32>, vector<4x64x4xf32> -> vector<4x64x4xf32>
    "tpu.trace_stop"() : () -> ()
    %c0_29 = arith.constant 0 : index
    %c0_30 = arith.constant 0 : index
    %c0_31 = arith.constant 0 : index
    %38 = vector.load %arg8[%c0_29, %c0_30, %c0_31] : memref<4x8x32xf32, #tpu.memory_space<vmem>>, vector<4x8x32xf32>
    "tpu.trace_start"() <{level = 10 : i32, message = "hnd,hdc->hnc"}> : () -> ()
    %cst_32 = arith.constant dense<0.000000e+00> : vector<4x64x32xf32>
    %39 = tpu.matmul %36, %38, %cst_32 {dimension_numbers = #tpu.dot_dimension_numbers<[2], [1], [1], [2], [0, 0, 0, 1, 1, 2], [0], [0]>} : vector<4x64x8xf32>, vector<4x8x32xf32>, vector<4x64x32xf32> -> vector<4x64x32xf32>
    "tpu.trace_stop"() : () -> ()
    %cst_33 = arith.constant dense<0.000000e+00> : vector<64x32xf32>
    %40 = vector.multi_reduction <add>, %39, %cst_33 [0] : vector<4x64x32xf32> to vector<64x32xf32>
    %c0_34 = arith.constant 0 : index
    %c0_35 = arith.constant 0 : index
    %41 = vector.load %arg9[%c0_34, %c0_35] : memref<1x32xf32, #tpu.memory_space<vmem>>, vector<1x32xf32>
    %42 = vector.broadcast %41 : vector<1x32xf32> to vector<64x32xf32>
    %43 = arith.addf %40, %42 : vector<64x32xf32>
    %44 = arith.subf %37, %22 : vector<4x64x4xf32>
    %c0_36 = arith.constant 0 : index
    %c0_37 = arith.constant 0 : index
    %c0_38 = arith.constant 0 : index
    %45 = vector.load %arg10[%c0_36, %c0_37, %c0_38] : memref<4x4x16xf32, #tpu.memory_space<vmem>>, vector<4x4x16xf32>
    "tpu.trace_start"() <{level = 10 : i32, message = "hnd,hdm->hnm"}> : () -> ()
    %cst_39 = arith.constant dense<0.000000e+00> : vector<4x64x16xf32>
    %46 = tpu.matmul %44, %45, %cst_39 {dimension_numbers = #tpu.dot_dimension_numbers<[2], [1], [1], [2], [0, 0, 0, 1, 1, 2], [0], [0]>} : vector<4x64x4xf32>, vector<4x4x16xf32>, vector<4x64x16xf32> -> vector<4x64x16xf32>
    "tpu.trace_stop"() : () -> ()
    %cst_40 = arith.constant dense<0.000000e+00> : vector<64x16xf32>
    %47 = vector.multi_reduction <add>, %46, %cst_40 [0] : vector<4x64x16xf32> to vector<64x16xf32>
    %c0_41 = arith.constant 0 : index
    %c0_42 = arith.constant 0 : index
    %48 = vector.load %arg11[%c0_41, %c0_42] : memref<1x16xf32, #tpu.memory_space<vmem>>, vector<1x16xf32>
    %49 = vector.broadcast %48 : vector<1x16xf32> to vector<64x16xf32>
    %50 = arith.addf %47, %49 : vector<64x16xf32>
    %c0_43 = arith.constant 0 : index
    %c0_44 = arith.constant 0 : index
    %c0_45 = arith.constant 0 : index
    %51 = vector.load %arg12[%c0_43, %c0_44, %c0_45] : memref<1x64x32xf32, #tpu.memory_space<vmem>>, vector<1x64x32xf32>
    %52 = vector.shape_cast %51 : vector<1x64x32xf32> to vector<64x32xf32>
    %53 = vector.shape_cast %43 : vector<64x32xf32> to vector<1x64x32xf32>
    tpu.vector_store %arg12[%c0_43, %c0_44, %c0_45], %53 {strides = array<i32>} : memref<1x64x32xf32, #tpu.memory_space<vmem>>, vector<1x64x32xf32>,
    %c0_46 = arith.constant 0 : index
    %c0_47 = arith.constant 0 : index
    %c0_48 = arith.constant 0 : index
    %54 = vector.load %arg13[%c0_46, %c0_47, %c0_48] : memref<1x64x16xf32, #tpu.memory_space<vmem>>, vector<1x64x16xf32>
    %55 = vector.shape_cast %54 : vector<1x64x16xf32> to vector<64x16xf32>
    %56 = vector.shape_cast %50 : vector<64x16xf32> to vector<1x64x16xf32>
    tpu.vector_store %arg13[%c0_46, %c0_47, %c0_48], %56 {strides = array<i32>} : memref<1x64x16xf32, #tpu.memory_space<vmem>>, vector<1x64x16xf32>,
    return
  }
  func.func @transform_0(%arg0: i32) -> (i32, i32, i32) {
    %c0_i32 = arith.constant 0 : i32
    %c0_i32_0 = arith.constant 0 : i32
    %c0_i32_1 = arith.constant 0 : i32
    return %arg0, %c0_i32, %c0_i32_0 : i32, i32, i32
  }
  func.func @transform_1(%arg0: i32) -> (i32, i32, i32) {
    %c0_i32 = arith.constant 0 : i32
    %c0_i32_0 = arith.constant 0 : i32
    %c0_i32_1 = arith.constant 0 : i32
    return %arg0, %c0_i32, %c0_i32_0 : i32, i32, i32
  }
  func.func @transform_2(%arg0: i32) -> (i32, i32, i32) {
    %c0_i32 = arith.constant 0 : i32
    %c0_i32_0 = arith.constant 0 : i32
    %c0_i32_1 = arith.constant 0 : i32
    return %arg0, %c0_i32, %c0_i32_0 : i32, i32, i32
  }
  func.func @transform_3(%arg0: i32) -> (i32, i32, i32) {
    %c0_i32 = arith.constant 0 : i32
    %c0_i32_0 = arith.constant 0 : i32
    %c0_i32_1 = arith.constant 0 : i32
    %c0_i32_2 = arith.constant 0 : i32
    return %c0_i32, %c0_i32_0, %c0_i32_1 : i32, i32, i32
  }
  func.func @transform_4(%arg0: i32) -> (i32, i32, i32) {
    %c0_i32 = arith.constant 0 : i32
    %c0_i32_0 = arith.constant 0 : i32
    %c0_i32_1 = arith.constant 0 : i32
    %c0_i32_2 = arith.constant 0 : i32
    return %c0_i32, %c0_i32_0, %c0_i32_1 : i32, i32, i32
  }
  func.func @transform_5(%arg0: i32) -> (i32, i32, i32) {
    %c0_i32 = arith.constant 0 : i32
    %c0_i32_0 = arith.constant 0 : i32
    %c0_i32_1 = arith.constant 0 : i32
    %c0_i32_2 = arith.constant 0 : i32
    return %c0_i32, %c0_i32_0, %c0_i32_1 : i32, i32, i32
  }
  func.func @transform_6(%arg0: i32) -> (i32, i32, i32) {
    %c0_i32 = arith.constant 0 : i32
    %c0_i32_0 = arith.constant 0 : i32
    %c0_i32_1 = arith.constant 0 : i32
    %c0_i32_2 = arith.constant 0 : i32
    return %c0_i32, %c0_i32_0, %c0_i32_1 : i32, i32, i32
  }
  func.func @transform_7(%arg0: i32) -> (i32, i32, i32) {
    %c0_i32 = arith.constant 0 : i32
    %c0_i32_0 = arith.constant 0 : i32
    %c0_i32_1 = arith.constant 0 : i32
    %c0_i32_2 = arith.constant 0 : i32
    return %c0_i32, %c0_i32_0, %c0_i32_1 : i32, i32, i32
  }
  func.func @transform_8(%arg0: i32) -> (i32, i32) {
    %c0_i32 = arith.constant 0 : i32
    %c0_i32_0 = arith.constant 0 : i32
    %c0_i32_1 = arith.constant 0 : i32
    return %c0_i32, %c0_i32_0 : i32, i32
  }
  func.func @transform_9(%arg0: i32) -> (i32, i32, i32) {
    %c0_i32 = arith.constant 0 : i32
    %c0_i32_0 = arith.constant 0 : i32
    %c0_i32_1 = arith.constant 0 : i32
    %c0_i32_2 = arith.constant 0 : i32
    return %c0_i32, %c0_i32_0, %c0_i32_1 : i32, i32, i32
  }
  func.func @transform_10(%arg0: i32) -> (i32, i32) {
    %c0_i32 = arith.constant 0 : i32
    %c0_i32_0 = arith.constant 0 : i32
    %c0_i32_1 = arith.constant 0 : i32
    return %c0_i32, %c0_i32_0 : i32, i32
  }
  func.func @transform_11(%arg0: i32) -> (i32, i32, i32) {
    %c0_i32 = arith.constant 0 : i32
    %c0_i32_0 = arith.constant 0 : i32
    %c0_i32_1 = arith.constant 0 : i32
    return %arg0, %c0_i32, %c0_i32_0 : i32, i32, i32
  }
  func.func @transform_12(%arg0: i32) -> (i32, i32, i32) {
    %c0_i32 = arith.constant 0 : i32
    %c0_i32_0 = arith.constant 0 : i32
    %c0_i32_1 = arith.constant 0 : i32
    return %arg0, %c0_i32, %c0_i32_0 : i32, i32, i32
  }
}

</mosaic_0001>

<llo_original>
// kernel: interframe_attention.1
$region0: #{interframe_attention.1}
  #allocation0 [shape = 'u32[]', space=smem, size = 0x4, offset = 0x4, fixed_abs, tag = 'smem constant byte address 0x4 - core index']
  #allocation1 [shape = 'u32[144,128]{1,0:T(1,128)}', space=vmem, size = 0x12000, scoped, tag = 'internal scratch']
  %s0 = inlined_call_operand.vmem [shape: f32[2,64,32], index: 0, kind: input, shape index: {}]
  %s1 = inlined_call_operand.vmem [shape: f32[2,64,32], index: 1, kind: input, shape index: {}]
  %s2 = inlined_call_operand.vmem [shape: f32[2,64,2], index: 2, kind: input, shape index: {}]
  %s3 = inlined_call_operand.vmem [shape: f32[4,32,8], index: 3, kind: input, shape index: {}]
  %s4 = inlined_call_operand.vmem [shape: f32[4,32,8], index: 4, kind: input, shape index: {}]
  %s5 = inlined_call_operand.vmem [shape: f32[4,32,8], index: 5, kind: input, shape index: {}]
  %s6 = inlined_call_operand.vmem [shape: f32[4,2,4], index: 6, kind: input, shape index: {}]
  %s7 = inlined_call_operand.vmem [shape: f32[4,8,32], index: 7, kind: input, shape index: {}]
  %s8 = inlined_call_operand.vmem [shape: f32[1,32], index: 8, kind: input, shape index: {}]
  %s9 = inlined_call_operand.vmem [shape: f32[4,4,16], index: 9, kind: input, shape index: {}]
  %s10 = inlined_call_operand.vmem [shape: f32[1,16], index: 10, kind: input, shape index: {}]
  %s11 = inlined_call_operand.vmem [shape: f32[2,64,32], index: 11, kind: output, shape index: {0}]
  %s12 = inlined_call_operand.vmem [shape: f32[2,64,16], index: 12, kind: output, shape index: {1}]
  %13 = xla_tuple %s11, %s12
  %s14 = sld [smem:[#allocation0]]
  $region85: #{interframe_attention.1} parent=0
    _
  %s16 = ssub.s32 1, %s14
  %s17 = scalar_select 0, %s16, %s14
  loop: start=0, step=1, limit=4
  $region2: #{interframe_attention.1} parent=0 // loop_pre_header
    _
  $region3: #{interframe_attention.1} parent=0 // loop_header
    %s19 = sphi 0, %s23
    %p20 = scmp.ge.s32.totalorder %s19, 4
    %s29 = sphi 0, %s31
    %s32 = sphi 0, %s29
    %s33 = sphi 0, %s32
    %s49 = sphi 0, %s33
    %s55 = sphi 0, %s57
    %s58 = sphi 0, %s55
    %s59 = sphi 0, %s58
    %s75 = sphi 0, %s59
    %s81 = sphi 0, %s83
    %s84 = sphi 0, %s81
    %s85 = sphi 0, %s84
    %s101 = sphi 0, %s85
    %s105 = sphi 0, %s105
    %s107 = sphi 0, %s105
    %s108 = sphi 0, %s107
    %s122 = sphi 0, %s108
    %s126 = sphi 0, %s126
    %s128 = sphi 0, %s126
    %s129 = sphi 0, %s128
    %s143 = sphi 0, %s129
    %s147 = sphi 0, %s147
    %s149 = sphi 0, %s147
    %s150 = sphi 0, %s149
    %s164 = sphi 0, %s150
    %s168 = sphi 0, %s168
    %s170 = sphi 0, %s168
    %s171 = sphi 0, %s170
    %s185 = sphi 0, %s171
    %s189 = sphi 0, %s189
    %s191 = sphi 0, %s189
    %s192 = sphi 0, %s191
    %s206 = sphi 0, %s192
    %s210 = sphi 0, %s210
    %s212 = sphi 0, %s210
    %s213 = sphi 0, %s212
    %s227 = sphi 0, %s213
    %s231 = sphi 0, %s231
    %s233 = sphi 0, %s231
    %s234 = sphi 0, %s233
    %s248 = sphi 0, %s234
    %s252 = sphi 0, %s252
    %s254 = sphi 0, %s252
    %s255 = sphi 0, %s254
    %s269 = sphi 0, %s255
    %s275 = sphi 0, %s277
    %s278 = sphi 0, %s275
    %s279 = sphi 0, %s278
    %s295 = sphi 0, %s279
    %s301 = sphi 0, %s303
    %s304 = sphi 0, %s301
    %s305 = sphi 0, %s304
    %s321 = sphi 0, %s305
  $region4: #{interframe_attention.1} parent=0 // loop_header_branch
    %22 = sbr.rel (%p20) target = $region8
  $region5: #{interframe_attention.1} parent=0 // loop_body
    %s24 = ssub.s32 %s19, 1
    %s25 = ssub.s32 %s19, 2
    %s26 = sadd.s32 %s19, 1
    %s27 = ssub.s32 %s19, %s26
    %p28 = scmp.eq.s32.totalorder %s27, 0
    %s30 = sadd.s32 %s29, 1
    %s31 = scalar_select %p28, %s29, %s30
    %p34 = pneg %p28
    %p35 = scmp.eq.s32.totalorder %s19, 1
    %p36 = por %p34, %p35
    %p37 = scmp.ne.s32.totalorder %s29, %s32
    %p38 = scmp.eq.s32.totalorder %s19, 0
    %p39 = por %p37, %p38
    %p40 = scmp.ne.s32.totalorder %s29, %s32
    %p41 = scmp.eq.s32.totalorder %s24, 1
    %p42 = por %p40, %p41
    %p43 = scmp.ne.s32.totalorder %s32, %s33
    %p44 = scmp.eq.s32.totalorder %s24, 0
    %p45 = por %p43, %p44
    %p46 = scmp.ne.s32.totalorder %s32, %s33
    %p47 = scmp.eq.s32.totalorder %s25, 1
    %p48 = por %p46, %p47
    %p50 = scmp.ne.s32.totalorder %s33, %s49
    %p51 = scmp.eq.s32.totalorder %s25, 0
    %p52 = por %p50, %p51
    %s53 = ssub.s32 %s19, %s26
    %p54 = scmp.eq.s32.totalorder %s53, 0
    %s56 = sadd.s32 %s55, 1
    %s57 = scalar_select %p54, %s55, %s56
    %p60 = pneg %p54
    %p61 = scmp.eq.s32.totalorder %s19, 1
    %p62 = por %p60, %p61
    %p63 = scmp.ne.s32.totalorder %s55, %s58
    %p64 = scmp.eq.s32.totalorder %s19, 0
    %p65 = por %p63, %p64
    %p66 = scmp.ne.s32.totalorder %s55, %s58
    %p67 = scmp.eq.s32.totalorder %s24, 1
    %p68 = por %p66, %p67
    %p69 = scmp.ne.s32.totalorder %s58, %s59
    %p70 = scmp.eq.s32.totalorder %s24, 0
    %p71 = por %p69, %p70
    %p72 = scmp.ne.s32.totalorder %s58, %s59
    %p73 = scmp.eq.s32.totalorder %s25, 1
    %p74 = por %p72, %p73
    %p76 = scmp.ne.s32.totalorder %s59, %s75
    %p77 = scmp.eq.s32.totalorder %s25, 0
    %p78 = por %p76, %p77
    %s79 = ssub.s32 %s19, %s26
    %p80 = scmp.eq.s32.totalorder %s79, 0
    %s82 = sadd.s32 %s81, 1
    %s83 = scalar_select %p80, %s81, %s82
    %p86 = pneg %p80
    %p87 = scmp.eq.s32.totalorder %s19, 1
    %p88 = por %p86, %p87
    %p89 = scmp.ne.s32.totalorder %s81, %s84
    %p90 = scmp.eq.s32.totalorder %s19, 0
    %p91 = por %p89, %p90
    %p92 = scmp.ne.s32.totalorder %s81, %s84
    %p93 = scmp.eq.s32.totalorder %s24, 1
    %p94 = por %p92, %p93
    %p95 = scmp.ne.s32.totalorder %s84, %s85
    %p96 = scmp.eq.s32.totalorder %s24, 0
    %p97 = por %p95, %p96
    %p98 = scmp.ne.s32.totalorder %s84, %s85
    %p99 = scmp.eq.s32.totalorder %s25, 1
    %p100 = por %p98, %p99
    %p102 = scmp.ne.s32.totalorder %s85, %s101
    %p103 = scmp.eq.s32.totalorder %s25, 0
    %p104 = por %p102, %p103
    %s106 = sadd.s32 %s105, 1
    %p109 = scmp.eq.s32.totalorder %s19, 1
    %p110 = scmp.ne.s32.totalorder %s105, %s107
    %p111 = scmp.eq.s32.totalorder %s19, 0
    %p112 = por %p110, %p111
    %p113 = scmp.ne.s32.totalorder %s105, %s107
    %p114 = scmp.eq.s32.totalorder %s24, 1
    %p115 = por %p113, %p114
    %p116 = scmp.ne.s32.totalorder %s107, %s108
    %p117 = scmp.eq.s32.totalorder %s24, 0
    %p118 = por %p116, %p117
    %p119 = scmp.ne.s32.totalorder %s107, %s108
    %p120 = scmp.eq.s32.totalorder %s25, 1
    %p121 = por %p119, %p120
    %p123 = scmp.ne.s32.totalorder %s108, %s122
    %p124 = scmp.eq.s32.totalorder %s25, 0
    %p125 = por %p123, %p124
    %s127 = sadd.s32 %s126, 1
    %p130 = scmp.eq.s32.totalorder %s19, 1
    %p131 = scmp.ne.s32.totalorder %s126, %s128
    %p132 = scmp.eq.s32.totalorder %s19, 0
    %p133 = por %p131, %p132
    %p134 = scmp.ne.s32.totalorder %s126, %s128
    %p135 = scmp.eq.s32.totalorder %s24, 1
    %p136 = por %p134, %p135
    %p137 = scmp.ne.s32.totalorder %s128, %s129
    %p138 = scmp.eq.s32.totalorder %s24, 0
    %p139 = por %p137, %p138
    %p140 = scmp.ne.s32.totalorder %s128, %s129
    %p141 = scmp.eq.s32.totalorder %s25, 1
    %p142 = por %p140, %p141
    %p144 = scmp.ne.s32.totalorder %s129, %s143
    %p145 = scmp.eq.s32.totalorder %s25, 0
    %p146 = por %p144, %p145
    %s148 = sadd.s32 %s147, 1
    %p151 = scmp.eq.s32.totalorder %s19, 1
    %p152 = scmp.ne.s32.totalorder %s147, %s149
    %p153 = scmp.eq.s32.totalorder %s19, 0
    %p154 = por %p152, %p153
    %p155 = scmp.ne.s32.totalorder %s147, %s149
    %p156 = scmp.eq.s32.totalorder %s24, 1
    %p157 = por %p155, %p156
    %p158 = scmp.ne.s32.totalorder %s149, %s150
    %p159 = scmp.eq.s32.totalorder %s24, 0
    %p160 = por %p158, %p159
    %p161 = scmp.ne.s32.totalorder %s149, %s150
    %p162 = scmp.eq.s32.totalorder %s25, 1
    %p163 = por %p161, %p162
    %p165 = scmp.ne.s32.totalorder %s150, %s164
    %p166 = scmp.eq.s32.totalorder %s25, 0
    %p167 = por %p165, %p166
    %s169 = sadd.s32 %s168, 1
    %p172 = scmp.eq.s32.totalorder %s19, 1
    %p173 = scmp.ne.s32.totalorder %s168, %s170
    %p174 = scmp.eq.s32.totalorder %s19, 0
    %p175 = por %p173, %p174
    %p176 = scmp.ne.s32.totalorder %s168, %s170
    %p177 = scmp.eq.s32.totalorder %s24, 1
    %p178 = por %p176, %p177
    %p179 = scmp.ne.s32.totalorder %s170, %s171
    %p180 = scmp.eq.s32.totalorder %s24, 0
    %p181 = por %p179, %p180
    %p182 = scmp.ne.s32.totalorder %s170, %s171
    %p183 = scmp.eq.s32.totalorder %s25, 1
    %p184 = por %p182, %p183
    %p186 = scmp.ne.s32.totalorder %s171, %s185
    %p187 = scmp.eq.s32.totalorder %s25, 0
    %p188 = por %p186, %p187
    %s190 = sadd.s32 %s189, 1
    %p193 = scmp.eq.s32.totalorder %s19, 1
    %p194 = scmp.ne.s32.totalorder %s189, %s191
    %p195 = scmp.eq.s32.totalorder %s19, 0
    %p196 = por %p194, %p195
    %p197 = scmp.ne.s32.totalorder %s189, %s191
    %p198 = scmp.eq.s32.totalorder %s24, 1
    %p199 = por %p197, %p198
    %p200 = scmp.ne.s32.totalorder %s191, %s192
    %p201 = scmp.eq.s32.totalorder %s24, 0
    %p202 = por %p200, %p201
    %p203 = scmp.ne.s32.totalorder %s191, %s192
    %p204 = scmp.eq.s32.totalorder %s25, 1
    %p205 = por %p203, %p204
    %p207 = scmp.ne.s32.totalorder %s192, %s206
    %p208 = scmp.eq.s32.totalorder %s25, 0
    %p209 = por %p207, %p208
    %s211 = sadd.s32 %s210, 1
    %p214 = scmp.eq.s32.totalorder %s19, 1
    %p215 = scmp.ne.s32.totalorder %s210, %s212
    %p216 = scmp.eq.s32.totalorder %s19, 0
    %p217 = por %p215, %p216
    %p218 = scmp.ne.s32.totalorder %s210, %s212
    %p219 = scmp.eq.s32.totalorder %s24, 1
    %p220 = por %p218, %p219
    %p221 = scmp.ne.s32.totalorder %s212, %s213
    %p222 = scmp.eq.s32.totalorder %s24, 0
    %p223 = por %p221, %p222
    %p224 = scmp.ne.s32.totalorder %s212, %s213
    %p225 = scmp.eq.s32.totalorder %s25, 1
    %p226 = por %p224, %p225
    %p228 = scmp.ne.s32.totalorder %s213, %s227
    %p229 = scmp.eq.s32.totalorder %s25, 0
    %p230 = por %p228, %p229
    %s232 = sadd.s32 %s231, 1
    %p235 = scmp.eq.s32.totalorder %s19, 1
    %p236 = scmp.ne.s32.totalorder %s231, %s233
    %p237 = scmp.eq.s32.totalorder %s19, 0
    %p238 = por %p236, %p237
    %p239 = scmp.ne.s32.totalorder %s231, %s233
    %p240 = scmp.eq.s32.totalorder %s24, 1
    %p241 = por %p239, %p240
    %p242 = scmp.ne.s32.totalorder %s233, %s234
    %p243 = scmp.eq.s32.totalorder %s24, 0
    %p244 = por %p242, %p243
    %p245 = scmp.ne.s32.totalorder %s233, %s234
    %p246 = scmp.eq.s32.totalorder %s25, 1
    %p247 = por %p245, %p246
    %p249 = scmp.ne.s32.totalorder %s234, %s248
    %p250 = scmp.eq.s32.totalorder %s25, 0
    %p251 = por %p249, %p250
    %s253 = sadd.s32 %s252, 1
    %p256 = scmp.eq.s32.totalorder %s19, 1
    %p257 = scmp.ne.s32.totalorder %s252, %s254
    %p258 = scmp.eq.s32.totalorder %s19, 0
    %p259 = por %p257, %p258
    %p260 = scmp.ne.s32.totalorder %s252, %s254
    %p261 = scmp.eq.s32.totalorder %s24, 1
    %p262 = por %p260, %p261
    %p263 = scmp.ne.s32.totalorder %s254, %s255
    %p264 = scmp.eq.s32.totalorder %s24, 0
    %p265 = por %p263, %p264
    %p266 = scmp.ne.s32.totalorder %s254, %s255
    %p267 = scmp.eq.s32.totalorder %s25, 1
    %p268 = por %p266, %p267
    %p270 = scmp.ne.s32.totalorder %s255, %s269
    %p271 = scmp.eq.s32.totalorder %s25, 0
    %p272 = por %p270, %p271
    %s273 = ssub.s32 %s19, %s26
    %p274 = scmp.eq.s32.totalorder %s273, 0
    %s276 = sadd.s32 %s275, 1
    %s277 = scalar_select %p274, %s275, %s276
    %p280 = pneg %p274
    %p281 = scmp.eq.s32.totalorder %s19, 1
    %p282 = por %p280, %p281
    %p283 = scmp.ne.s32.totalorder %s275, %s278
    %p284 = scmp.eq.s32.totalorder %s19, 0
    %p285 = por %p283, %p284
    %p286 = scmp.ne.s32.totalorder %s275, %s278
    %p287 = scmp.eq.s32.totalorder %s24, 1
    %p288 = por %p286, %p287
    %p289 = scmp.ne.s32.totalorder %s278, %s279
    %p290 = scmp.eq.s32.totalorder %s24, 0
    %p291 = por %p289, %p290
    %p292 = scmp.ne.s32.totalorder %s278, %s279
    %p293 = scmp.eq.s32.totalorder %s25, 1
    %p294 = por %p292, %p293
    %p296 = scmp.ne.s32.totalorder %s279, %s295
    %p297 = scmp.eq.s32.totalorder %s25, 0
    %p298 = por %p296, %p297
    %s299 = ssub.s32 %s19, %s26
    %p300 = scmp.eq.s32.totalorder %s299, 0
    %s302 = sadd.s32 %s301, 1
    %s303 = scalar_select %p300, %s301, %s302
    %p306 = pneg %p300
    %p307 = scmp.eq.s32.totalorder %s19, 1
    %p308 = por %p306, %p307
    %p309 = scmp.ne.s32.totalorder %s301, %s304
    %p310 = scmp.eq.s32.totalorder %s19, 0
    %p311 = por %p309, %p310
    %p312 = scmp.ne.s32.totalorder %s301, %s304
    %p313 = scmp.eq.s32.totalorder %s24, 1
    %p314 = por %p312, %p313
    %p315 = scmp.ne.s32.totalorder %s304, %s305
    %p316 = scmp.eq.s32.totalorder %s24, 0
    %p317 = por %p315, %p316
    %p318 = scmp.ne.s32.totalorder %s304, %s305
    %p319 = scmp.eq.s32.totalorder %s25, 1
    %p320 = por %p318, %p319
    %p322 = scmp.ne.s32.totalorder %s305, %s321
    %p323 = scmp.eq.s32.totalorder %s25, 0
    %p324 = por %p322, %p323
    %p325 = scmp.le.s32.totalorder 1, %s19
    %p326 = scmp.lt.s32.totalorder %s19, 3
    %p327 = pnand %p325, %p326
    %p328 = pneg %p327
    // Predicated region
    $region9: #{interframe_attention.1} parent=5 // pred_check
      _
    $region10: #{interframe_attention.1} parent=5 // pred_check_branch
      %330 = sbr.rel (%p327) target = $region12
    $region11: #{interframe_attention.1} parent=5 // pred_region
      %s331 = ssub.s32 %s19, 1
      // Predicated region
      $region13: #{interframe_attention.1} parent=11 // pred_check
        %p332 = pneg %p118
      $region14: #{interframe_attention.1} parent=11 // pred_check_branch
        %334 = sbr.rel (%p332) target = $region16
      $region15: #{interframe_attention.1} parent=11 // pred_region
        _
      $region16: #{interframe_attention.1} parent=11 // pred_fallthru
        _
      // Predicated region
      $region17: #{interframe_attention.1} parent=11 // pred_check
        %p335 = pneg %p139
      $region18: #{interframe_attention.1} parent=11 // pred_check_branch
        %337 = sbr.rel (%p335) target = $region20
      $region19: #{interframe_attention.1} parent=11 // pred_region
        _
      $region20: #{interframe_attention.1} parent=11 // pred_fallthru
        _
      // Predicated region
      $region21: #{interframe_attention.1} parent=11 // pred_check
        %p338 = pneg %p160
      $region22: #{interframe_attention.1} parent=11 // pred_check_branch
        %340 = sbr.rel (%p338) target = $region24
      $region23: #{interframe_attention.1} parent=11 // pred_region
        _
      $region24: #{interframe_attention.1} parent=11 // pred_fallthru
        _
      // Predicated region
      $region25: #{interframe_attention.1} parent=11 // pred_check
        %p341 = pneg %p181
      $region26: #{interframe_attention.1} parent=11 // pred_check_branch
        %343 = sbr.rel (%p341) target = $region28
      $region27: #{interframe_attention.1} parent=11 // pred_region
        _
      $region28: #{interframe_attention.1} parent=11 // pred_fallthru
        _
      // Predicated region
      $region29: #{interframe_attention.1} parent=11 // pred_check
        %p344 = pneg %p202
      $region30: #{interframe_attention.1} parent=11 // pred_check_branch
        %346 = sbr.rel (%p344) target = $region32
      $region31: #{interframe_attention.1} parent=11 // pred_region
        _
      $region32: #{interframe_attention.1} parent=11 // pred_fallthru
        _
      // Predicated region
      $region33: #{interframe_attention.1} parent=11 // pred_check
        %p347 = pneg %p223
      $region34: #{interframe_attention.1} parent=11 // pred_check_branch
        %349 = sbr.rel (%p347) target = $region36
      $region35: #{interframe_attention.1} parent=11 // pred_region
        _
      $region36: #{interframe_attention.1} parent=11 // pred_fallthru
        _
      // Predicated region
      $region37: #{interframe_attention.1} parent=11 // pred_check
        %p350 = pneg %p244
      $region38: #{interframe_attention.1} parent=11 // pred_check_branch
        %352 = sbr.rel (%p350) target = $region40
      $region39: #{interframe_attention.1} parent=11 // pred_region
        _
      $region40: #{interframe_attention.1} parent=11 // pred_fallthru
        _
      // Predicated region
      $region41: #{interframe_attention.1} parent=11 // pred_check
        %p353 = pneg %p265
      $region42: #{interframe_attention.1} parent=11 // pred_check_branch
        %355 = sbr.rel (%p353) target = $region44
      $region43: #{interframe_attention.1} parent=11 // pred_region
        _
      $region44: #{interframe_attention.1} parent=11 // pred_fallthru
        _
    $region12: #{interframe_attention.1} parent=5 // pred_fallthru
      _
    %p356 = scmp.lt.s32.totalorder %s19, 2
    // Predicated region
    $region45: #{interframe_attention.1} parent=5 // pred_check
      %p357 = pneg %p356
    $region46: #{interframe_attention.1} parent=5 // pred_check_branch
      %359 = sbr.rel (%p357) target = $region48
    $region47: #{interframe_attention.1} parent=5 // pred_region
      // Predicated region
      $region49: #{interframe_attention.1} parent=47 // pred_check
        %p360 = pneg %p39
      $region50: #{interframe_attention.1} parent=47 // pred_check_branch
        %362 = sbr.rel (%p360) target = $region52
      $region51: #{interframe_attention.1} parent=47 // pred_region
        %p363 = scmp.lt.s32.totalorder %s19, 1
        %s364 = scalar_select %p363, %s19, 1
        %s365 = smul.addr %s364, 8
        %s366 = smul.addr %s365, 8
        %s367 = scalar_lea.vmem %s0, %s366
      $region52: #{interframe_attention.1} parent=47 // pred_fallthru
        _
      // Predicated region
      $region53: #{interframe_attention.1} parent=47 // pred_check
        %p368 = pneg %p65
      $region54: #{interframe_attention.1} parent=47 // pred_check_branch
        %370 = sbr.rel (%p368) target = $region56
      $region55: #{interframe_attention.1} parent=47 // pred_region
        %p371 = scmp.lt.s32.totalorder %s19, 1
        %s372 = scalar_select %p371, %s19, 1
        %s373 = smul.addr %s372, 8
        %s374 = smul.addr %s373, 8
        %s375 = scalar_lea.vmem %s1, %s374
      $region56: #{interframe_attention.1} parent=47 // pred_fallthru
        _
      // Predicated region
      $region57: #{interframe_attention.1} parent=47 // pred_check
        %p376 = pneg %p91
      $region58: #{interframe_attention.1} parent=47 // pred_check_branch
        %378 = sbr.rel (%p376) target = $region60
      $region59: #{interframe_attention.1} parent=47 // pred_region
        %p379 = scmp.lt.s32.totalorder %s19, 1
        %s380 = scalar_select %p379, %s19, 1
        %s381 = smul.addr %s380, 8
        %s382 = smul.addr %s381, 8
        %s383 = scalar_lea.vmem %s2, %s382
      $region60: #{interframe_attention.1} parent=47 // pred_fallthru
        _
    $region48: #{interframe_attention.1} parent=5 // pred_fallthru
      _
    %p384 = scmp.le.s32.totalorder 1, %s19
    %p385 = scmp.lt.s32.totalorder %s19, 3
    %p386 = pnand %p384, %p385
    %p387 = pneg %p386
    // Predicated region
    $region61: #{interframe_attention.1} parent=5 // pred_check
      _
    $region62: #{interframe_attention.1} parent=5 // pred_check_branch
      %389 = sbr.rel (%p386) target = $region64
    $region63: #{interframe_attention.1} parent=5 // pred_region
      %s390 = ssub.s32 %s19, 1
      %p391 = scmp.lt.s32.totalorder %s24, 1
      %s392 = scalar_select %p391, %s24, 1
      %s393 = smul.addr %s392, 8
      %s394 = smul.addr %s393, 8
      %s395 = scalar_lea.vmem %s0, %s394
      %p396 = pneg %p45
      %p397 = pneg %p42
      %p398 = scmp.lt.s32.totalorder %s24, 1
      %s399 = scalar_select %p398, %s24, 1
      %s400 = smul.addr %s399, 8
      %s401 = smul.addr %s400, 8
      %s402 = scalar_lea.vmem %s1, %s401
      %p403 = pneg %p71
      %p404 = pneg %p68
      %p405 = scmp.lt.s32.totalorder %s24, 1
      %s406 = scalar_select %p405, %s24, 1
      %s407 = smul.addr %s406, 8
      %s408 = smul.addr %s407, 8
      %s409 = scalar_lea.vmem %s2, %s408
      %p410 = pneg %p97
      %p411 = pneg %p94
      %p412 = pneg %p118
      %p413 = pneg %p115
      %p414 = pneg %p139
      %p415 = pneg %p136
      %p416 = pneg %p160
      %p417 = pneg %p157
      %p418 = pneg %p181
      %p419 = pneg %p178
      %p420 = pneg %p202
      %p421 = pneg %p199
      %p422 = pneg %p223
      %p423 = pneg %p220
      %p424 = pneg %p244
      %p425 = pneg %p241
      %p426 = pneg %p265
      %p427 = pneg %p262
      %p428 = pneg %p291
      %p429 = pneg %p288
      %p430 = scmp.lt.s32.totalorder %s24, 1
      %s431 = scalar_select %p430, %s24, 1
      %s432 = smul.addr %s431, 8
      %s433 = smul.addr %s432, 8
      %s434 = scalar_lea.vmem %s11, %s433
      %p435 = pneg %p317
      %p436 = pneg %p314
      %p437 = scmp.lt.s32.totalorder %s24, 1
      %s438 = scalar_select %p437, %s24, 1
      %s439 = smul.addr %s438, 8
      %s440 = smul.addr %s439, 8
      %s441 = scalar_lea.vmem %s12, %s440
      %p442 = scmp.lt.s32.totalorder %s24, 1
      %s443 = scalar_select %p442, %s24, 1
      %s444 = smul.addr %s443, 8
      %s445 = smul.addr %s444, 8
      %s446 = scalar_lea.vmem %s0, %s445
      %p447 = scmp.lt.s32.totalorder %s24, 1
      %s448 = scalar_select %p447, %s24, 1
      %s449 = smul.addr %s448, 8
      %s450 = smul.addr %s449, 8
      %s451 = scalar_lea.vmem %s1, %s450
      %p452 = scmp.lt.s32.totalorder %s24, 1
      %s453 = scalar_select %p452, %s24, 1
      %s454 = smul.addr %s453, 8
      %s455 = smul.addr %s454, 8
      %s456 = scalar_lea.vmem %s2, %s455
      %p457 = scmp.lt.s32.totalorder %s24, 1
      %s458 = scalar_select %p457, %s24, 1
      %s459 = smul.addr %s458, 8
      %s460 = smul.addr %s459, 8
      %s461 = scalar_lea.vmem %s11, %s460
      %p462 = scmp.lt.s32.totalorder %s24, 1
      %s463 = scalar_select %p462, %s24, 1
      %s464 = smul.addr %s463, 8
      %s465 = smul.addr %s464, 8
      %s466 = scalar_lea.vmem %s12, %s465
      %v467 = vld [vmem:[%s446] sm:$0xff]
      %v468 = vld [vmem:[%s446 + $0x8] sm:$0xff]
      %v469 = vld [vmem:[%s446 + $0x10] sm:$0xff]
      %v470 = vld [vmem:[%s446 + $0x18] sm:$0xff]
      %v471 = vld [vmem:[%s446 + $0x20] sm:$0xff]
      %v472 = vld [vmem:[%s446 + $0x28] sm:$0xff]
      %v473 = vld [vmem:[%s446 + $0x30] sm:$0xff]
      %v474 = vld [vmem:[%s446 + $0x38] sm:$0xff]
      %v475 = vld [vmem:[%s451] sm:$0xff]
      %v476 = vld [vmem:[%s451 + $0x8] sm:$0xff]
      %v477 = vld [vmem:[%s451 + $0x10] sm:$0xff]
      %v478 = vld [vmem:[%s451 + $0x18] sm:$0xff]
      %v479 = vld [vmem:[%s451 + $0x20] sm:$0xff]
      %v480 = vld [vmem:[%s451 + $0x28] sm:$0xff]
      %v481 = vld [vmem:[%s451 + $0x30] sm:$0xff]
      %v482 = vld [vmem:[%s451 + $0x38] sm:$0xff]
      %v483 = vld [vmem:[%s456] sm:$0xff]
      %v484 = vld [vmem:[%s456 + $0x8] sm:$0xff]
      %v485 = vld [vmem:[%s456 + $0x10] sm:$0xff]
      %v486 = vld [vmem:[%s456 + $0x18] sm:$0xff]
      %v487 = vld [vmem:[%s456 + $0x20] sm:$0xff]
      %v488 = vld [vmem:[%s456 + $0x28] sm:$0xff]
      %v489 = vld [vmem:[%s456 + $0x30] sm:$0xff]
      %v490 = vld [vmem:[%s456 + $0x38] sm:$0xff]
      %v491 = vld [vmem:[%s3] sm:$0xff]
      %v492 = vld [vmem:[%s3 + $0x8] sm:$0xff]
      %v493 = vld [vmem:[%s3 + $0x10] sm:$0xff]
      %v494 = vld [vmem:[%s3 + $0x18] sm:$0xff]
      %v495 = vld [vmem:[%s3 + $0x20] sm:$0xff]
      %v496 = vld [vmem:[%s3 + $0x28] sm:$0xff]
      %v497 = vld [vmem:[%s3 + $0x30] sm:$0xff]
      %v498 = vld [vmem:[%s3 + $0x38] sm:$0xff]
      %v499 = vld [vmem:[%s3 + $0x40] sm:$0xff]
      %v500 = vld [vmem:[%s3 + $0x48] sm:$0xff]
      %v501 = vld [vmem:[%s3 + $0x50] sm:$0xff]
      %v502 = vld [vmem:[%s3 + $0x58] sm:$0xff]
      %v503 = vld [vmem:[%s3 + $0x60] sm:$0xff]
      %v504 = vld [vmem:[%s3 + $0x68] sm:$0xff]
      %v505 = vld [vmem:[%s3 + $0x70] sm:$0xff]
      %v506 = vld [vmem:[%s3 + $0x78] sm:$0xff]
      %vm507 = vcmask 261120
      %v509 = vsel %vm507, %v467, 0
      %v512 = vsel %vm507, %v468, 0
      %v515 = vsel %vm507, %v469, 0
      %v518 = vsel %vm507, %v470, 0
      %v521 = vsel %vm507, %v471, 0
      %v524 = vsel %vm507, %v472, 0
      %v527 = vsel %vm507, %v473, 0
      %v530 = vsel %vm507, %v474, 0
      %532 = vmatprep.subr.mxu0 0.0
      %533 = vmatpush1.msra.mxu0 %v491
      %534 = vmatprep.subr.mxu0 0.0
      %535 = vmatpush1.msra.mxu0 %v492
      %536 = vmatprep.subr.mxu0 0.0
      %537 = vmatpush1.msra.mxu0 %v493
      %538 = vmatprep.subr.mxu0 0.0
      %539 = vmatpush1.msra.mxu0 %v494
      %540 = vmatprep.subr.mxu0 0.0
      %541 = vmatpush1.msra.mxu0 0.0
      %542 = vmatprep.subr.mxu0 0.0
      %543 = vmatpush1.msra.mxu0 0.0
      %544 = vmatprep.subr.mxu0 0.0
      %545 = vmatpush1.msra.mxu0 0.0
      %546 = vmatprep.subr.mxu0 0.0
      %547 = vmatpush1.msra.mxu0 0.0
      %548 = vmatprep.subr.mxu0 0.0
      %549 = vmatpush1.msra.mxu0 0.0
      %550 = vmatprep.subr.mxu0 0.0
      %551 = vmatpush1.msra.mxu0 0.0
      %552 = vmatprep.subr.mxu0 0.0
      %553 = vmatpush1.msra.mxu0 0.0
      %554 = vmatprep.subr.mxu0 0.0
      %555 = vmatpush1.msra.mxu0 0.0
      %556 = vmatprep.subr.mxu0 0.0
      %557 = vmatpush1.msra.mxu0 0.0
      %558 = vmatprep.subr.mxu0 0.0
      %559 = vmatpush1.msra.mxu0 0.0
      %560 = vmatprep.subr.mxu0 0.0
      %561 = vmatpush1.msra.mxu0 0.0
      %562 = vmatprep.subr.mxu0 0.0
      %563 = vmatpush1.msra.mxu0 0.0
      %564 = vmatprep.subr.mxu0 0.0
      %565 = vmatpush1.msra.mxu0 0.0
      %566 = vmatprep.subr.mxu0 0.0
      %567 = vmatpush1.msra.mxu0 0.0
      %568 = vmatprep.subr.mxu0 0.0
      %569 = vmatpush1.msra.mxu0 0.0
      %570 = vmatprep.subr.mxu0 0.0
      %571 = vmatpush1.msra.mxu0 0.0
      %572 = vmatprep.subr.mxu0 0.0
      %573 = vmatpush1.msra.mxu0 0.0
      %574 = vmatprep.subr.mxu0 0.0
      %575 = vmatpush1.msra.mxu0 0.0
      %576 = vmatprep.subr.mxu0 0.0
      %577 = vmatpush1.msra.mxu0 0.0
      %578 = vmatprep.subr.mxu0 0.0
      %579 = vmatpush1.msra.mxu0 0.0
      %580 = vmatprep.subr.mxu0 0.0
      %581 = vmatpush1.msra.mxu0 0.0
      %582 = vmatprep.subr.mxu0 0.0
      %583 = vmatpush1.msra.mxu0 0.0
      %584 = vmatprep.subr.mxu0 0.0
      %585 = vmatpush1.msra.mxu0 0.0
      %586 = vmatprep.subr.mxu0 0.0
      %587 = vmatpush1.msra.mxu0 0.0
      %588 = vmatprep.subr.mxu0 0.0
      %589 = vmatpush1.msra.mxu0 0.0
      %590 = vmatprep.subr.mxu0 0.0
      %591 = vmatpush1.msra.mxu0 0.0
      %592 = vmatprep.subr.mxu0 0.0
      %593 = vmatpush1.msra.mxu0 0.0
      %594 = vmatprep.subr.mxu0 0.0
      %595 = vmatpush1.msra.mxu0 0.0
      %596 = vmatprep.mubr.f32.mxu0 0.0
      %597 = vmatmul.mubr.f32.gmra.mrb[0].mxu0 %v509
      %v598 = vpop.f32.mrb[0].mxu0
      %v599 = vadd.f32 0.0, %v598
      %v600 = vpop.f32.mrb[0].mxu0
      %601 = vmatprep.mubr.f32.mxu0 0.0
      %602 = vmatmul.mubr.f32.gmra.mrb[0].mxu0 %v512
      %v603 = vpop.f32.mrb[0].mxu0
      %v604 = vadd.f32 0.0, %v603
      %v605 = vpop.f32.mrb[0].mxu0
      %606 = vmatprep.mubr.f32.mxu0 0.0
      %607 = vmatmul.mubr.f32.gmra.mrb[0].mxu0 %v515
      %v608 = vpop.f32.mrb[0].mxu0
      %v609 = vadd.f32 0.0, %v608
      %v610 = vpop.f32.mrb[0].mxu0
      %611 = vmatprep.mubr.f32.mxu0 0.0
      %612 = vmatmul.mubr.f32.gmra.mrb[0].mxu0 %v518
      %v613 = vpop.f32.mrb[0].mxu0
      %v614 = vadd.f32 0.0, %v613
      %v615 = vpop.f32.mrb[0].mxu0
      %616 = vmatprep.mubr.f32.mxu0 0.0
      %617 = vmatmul.mubr.f32.gmra.mrb[0].mxu0 %v521
      %v618 = vpop.f32.mrb[0].mxu0
      %v619 = vadd.f32 0.0, %v618
      %v620 = vpop.f32.mrb[0].mxu0
      %621 = vmatprep.mubr.f32.mxu0 0.0
      %622 = vmatmul.mubr.f32.gmra.mrb[0].mxu0 %v524
      %v623 = vpop.f32.mrb[0].mxu0
      %v624 = vadd.f32 0.0, %v623
      %v625 = vpop.f32.mrb[0].mxu0
      %626 = vmatprep.mubr.f32.mxu0 0.0
      %627 = vmatmul.mubr.f32.gmra.mrb[0].mxu0 %v527
      %v628 = vpop.f32.mrb[0].mxu0
      %v629 = vadd.f32 0.0, %v628
      %v630 = vpop.f32.mrb[0].mxu0
      %631 = vmatprep.mubr.f32.mxu0 0.0
      %632 = vmatmul.mubr.f32.gmra.mrb[0].mxu0 %v530
      %v633 = vpop.f32.mrb[0].mxu0
      %v634 = vadd.f32 0.0, %v633
      %v635 = vpop.f32.mrb[0].mxu0
      %636 = vdwg.mxu0
      %637 = vmatprep.subr.mxu0 0.0
      %638 = vmatpush1.msra.mxu0 %v495
      %639 = vmatprep.subr.mxu0 0.0
      %640 = vmatpush1.msra.mxu0 %v496
      %641 = vmatprep.subr.mxu0 0.0
      %642 = vmatpush1.msra.mxu0 %v497
      %643 = vmatprep.subr.mxu0 0.0
      %644 = vmatpush1.msra.mxu0 %v498
      %645 = vmatprep.subr.mxu0 0.0
      %646 = vmatpush1.msra.mxu0 0.0
      %647 = vmatprep.subr.mxu0 0.0
      %648 = vmatpush1.msra.mxu0 0.0
      %649 = vmatprep.subr.mxu0 0.0
      %650 = vmatpush1.msra.mxu0 0.0
      %651 = vmatprep.subr.mxu0 0.0
      %652 = vmatpush1.msra.mxu0 0.0
      %653 = vmatprep.subr.mxu0 0.0
      %654 = vmatpush1.msra.mxu0 0.0
      %655 = vmatprep.subr.mxu0 0.0
      %656 = vmatpush1.msra.mxu0 0.0
      %657 = vmatprep.subr.mxu0 0.0
      %658 = vmatpush1.msra.mxu0 0.0
      %659 = vmatprep.subr.mxu0 0.0
      %660 = vmatpush1.msra.mxu0 0.0
      %661 = vmatprep.subr.mxu0 0.0
      %662 = vmatpush1.msra.mxu0 0.0
      %663 = vmatprep.subr.mxu0 0.0
      %664 = vmatpush1.msra.mxu0 0.0
      %665 = vmatprep.subr.mxu0 0.0
      %666 = vmatpush1.msra.mxu0 0.0
      %667 = vmatprep.subr.mxu0 0.0
      %668 = vmatpush1.msra.mxu0 0.0
      %669 = vmatprep.subr.mxu0 0.0
      %670 = vmatpush1.msra.mxu0 0.0
      %671 = vmatprep.subr.mxu0 0.0
      %672 = vmatpush1.msra.mxu0 0.0
      %673 = vmatprep.subr.mxu0 0.0
      %674 = vmatpush1.msra.mxu0 0.0
      %675 = vmatprep.subr.mxu0 0.0
      %676 = vmatpush1.msra.mxu0 0.0
      %677 = vmatprep.subr.mxu0 0.0
      %678 = vmatpush1.msra.mxu0 0.0
      %679 = vmatprep.subr.mxu0 0.0
      %680 = vmatpush1.msra.mxu0 0.0
      %681 = vmatprep.subr.mxu0 0.0
      %682 = vmatpush1.msra.mxu0 0.0
      %683 = vmatprep.subr.mxu0 0.0
      %684 = vmatpush1.msra.mxu0 0.0
      %685 = vmatprep.subr.mxu0 0.0
      %686 = vmatpush1.msra.mxu0 0.0
      %687 = vmatprep.subr.mxu0 0.0
      %688 = vmatpush1.msra.mxu0 0.0
      %689 = vmatprep.subr.mxu0 0.0
      %690 = vmatpush1.msra.mxu0 0.0
      %691 = vmatprep.subr.mxu0 0.0
      %692 = vmatpush1.msra.mxu0 0.0
      %693 = vmatprep.subr.mxu0 0.0
      %694 = vmatpush1.msra.mxu0 0.0
      %695 = vmatprep.subr.mxu0 0.0
      %696 = vmatpush1.msra.mxu0 0.0
      %697 = vmatprep.subr.mxu0 0.0
      %698 = vmatpush1.msra.mxu0 0.0
      %699 = vmatprep.subr.mxu0 0.0
      %700 = vmatpush1.msra.mxu0 0.0
      %701 = vmatprep.mubr.f32.mxu0 0.0
      %702 = vmatmul.mubr.f32.gmra.mrb[0].mxu0 %v509
      %v703 = vpop.f32.mrb[0].mxu0
      %v704 = vadd.f32 0.0, %v703
      %v705 = vpop.f32.mrb[0].mxu0
      %706 = vmatprep.mubr.f32.mxu0 0.0
      %707 = vmatmul.mubr.f32.gmra.mrb[0].mxu0 %v512
      %v708 = vpop.f32.mrb[0].mxu0
      %v709 = vadd.f32 0.0, %v708
      %v710 = vpop.f32.mrb[0].mxu0
      %711 = vmatprep.mubr.f32.mxu0 0.0
      %712 = vmatmul.mubr.f32.gmra.mrb[0].mxu0 %v515
      %v713 = vpop.f32.mrb[0].mxu0
      %v714 = vadd.f32 0.0, %v713
      %v715 = vpop.f32.mrb[0].mxu0
      %716 = vmatprep.mubr.f32.mxu0 0.0
      %717 = vmatmul.mubr.f32.gmra.mrb[0].mxu0 %v518
      %v718 = vpop.f32.mrb[0].mxu0
      %v719 = vadd.f32 0.0, %v718
      %v720 = vpop.f32.mrb[0].mxu0
      %721 = vmatprep.mubr.f32.mxu0 0.0
      %722 = vmatmul.mubr.f32.gmra.mrb[0].mxu0 %v521
      %v723 = vpop.f32.mrb[0].mxu0
      %v724 = vadd.f32 0.0, %v723
      %v725 = vpop.f32.mrb[0].mxu0
      %726 = vmatprep.mubr.f32.mxu0 0.0
      %727 = vmatmul.mubr.f32.gmra.mrb[0].mxu0 %v524
      %v728 = vpop.f32.mrb[0].mxu0
      %v729 = vadd.f32 0.0, %v728
      %v730 = vpop.f32.mrb[0].mxu0
      %731 = vmatprep.mubr.f32.mxu0 0.0
      %732 = vmatmul.mubr.f32.gmra.mrb[0].mxu0 %v527
      %v733 = vpop.f32.mrb[0].mxu0
      %v734 = vadd.f32 0.0, %v733
      %v735 = vpop.f32.mrb[0].mxu0
      %736 = vmatprep.mubr.f32.mxu0 0.0
      %737 = vmatmul.mubr.f32.gmra.mrb[0].mxu0 %v530
      %v738 = vpop.f32.mrb[0].mxu0
      %v739 = vadd.f32 0.0, %v738
      %v740 = vpop.f32.mrb[0].mxu0
      %741 = vdwg.mxu0
      %742 = vmatprep.subr.mxu0 0.0
      %743 = vmatpush1.msra.mxu0 %v499
      %744 = vmatprep.subr.mxu0 0.0
      %745 = vmatpush1.msra.mxu0 %v500
      %746 = vmatprep.subr.mxu0 0.0
      %747 = vmatpush1.msra.mxu0 %v501
      %748 = vmatprep.subr.mxu0 0.0
      %749 = vmatpush1.msra.mxu0 %v502
      %750 = vmatprep.subr.mxu0 0.0
      %751 = vmatpush1.msra.mxu0 0.0
      %752 = vmatprep.subr.mxu0 0.0
      %753 = vmatpush1.msra.mxu0 0.0
      %754 = vmatprep.subr.mxu0 0.0
      %755 = vmatpush1.msra.mxu0 0.0
      %756 = vmatprep.subr.mxu0 0.0
      %757 = vmatpush1.msra.mxu0 0.0
      %758 = vmatprep.subr.mxu0 0.0
      %759 = vmatpush1.msra.mxu0 0.0
      %760 = vmatprep.subr.mxu0 0.0
      %761 = vmatpush1.msra.mxu0 0.0
      %762 = vmatprep.subr.mxu0 0.0
      %763 = vmatpush1.msra.mxu0 0.0
      %764 = vmatprep.subr.mxu0 0.0
      %765 = vmatpush1.msra.mxu0 0.0
      %766 = vmatprep.subr.mxu0 0.0
      %767 = vmatpush1.msra.mxu0 0.0
      %768 = vmatprep.subr.mxu0 0.0
      %769 = vmatpush1.msra.mxu0 0.0
      %770 = vmatprep.subr.mxu0 0.0
      %771 = vmatpush1.msra.mxu0 0.0
      %772 = vmatprep.subr.mxu0 0.0
      %773 = vmatpush1.msra.mxu0 0.0
      %774 = vmatprep.subr.mxu0 0.0
      %775 = vmatpush1.msra.mxu0 0.0
      %776 = vmatprep.subr.mxu0 0.0
      %777 = vmatpush1.msra.mxu0 0.0
      %778 = vmatprep.subr.mxu0 0.0
      %779 = vmatpush1.msra.mxu0 0.0
      %780 = vmatprep.subr.mxu0 0.0
      %781 = vmatpush1.msra.mxu0 0.0
      %782 = vmatprep.subr.mxu0 0.0
      %783 = vmatpush1.msra.mxu0 0.0
      %784 = vmatprep.subr.mxu0 0.0
      %785 = vmatpush1.msra.mxu0 0.0
      %786 = vmatprep.subr.mxu0 0.0
      %787 = vmatpush1.msra.mxu0 0.0
      %788 = vmatprep.subr.mxu0 0.0
      %789 = vmatpush1.msra.mxu0 0.0
      %790 = vmatprep.subr.mxu0 0.0
      %791 = vmatpush1.msra.mxu0 0.0
      %792 = vmatprep.subr.mxu0 0.0
      %793 = vmatpush1.msra.mxu0 0.0
      %794 = vmatprep.subr.mxu0 0.0
      %795 = vmatpush1.msra.mxu0 0.0
      %796 = vmatprep.subr.mxu0 0.0
      %797 = vmatpush1.msra.mxu0 0.0
      %798 = vmatprep.subr.mxu0 0.0
      %799 = vmatpush1.msra.mxu0 0.0
      %800 = vmatprep.subr.mxu0 0.0
      %801 = vmatpush1.msra.mxu0 0.0
      %802 = vmatprep.subr.mxu0 0.0
      %803 = vmatpush1.msra.mxu0 0.0
      %804 = vmatprep.subr.mxu0 0.0
      %805 = vmatpush1.msra.mxu0 0.0
      %806 = vmatprep.mubr.f32.mxu0 0.0
      %807 = vmatmul.mubr.f32.gmra.mrb[0].mxu0 %v509
      %v808 = vpop.f32.mrb[0].mxu0
      %v809 = vadd.f32 0.0, %v808
      %v810 = vpop.f32.mrb[0].mxu0
      %811 = vmatprep.mubr.f32.mxu0 0.0
      %812 = vmatmul.mubr.f32.gmra.mrb[0].mxu0 %v512
      %v813 = vpop.f32.mrb[0].mxu0
      %v814 = vadd.f32 0.0, %v813
      %v815 = vpop.f32.mrb[0].mxu0
      %816 = vmatprep.mubr.f32.mxu0 0.0
      %817 = vmatmul.mubr.f32.gmra.mrb[0].mxu0 %v515
      %v818 = vpop.f32.mrb[0].mxu0
      %v819 = vadd.f32 0.0, %v818
      %v820 = vpop.f32.mrb[0].mxu0
      %821 = vmatprep.mubr.f32.mxu0 0.0
      %822 = vmatmul.mubr.f32.gmra.mrb[0].mxu0 %v518
      %v823 = vpop.f32.mrb[0].mxu0
      %v824 = vadd.f32 0.0, %v823
      %v825 = vpop.f32.mrb[0].mxu0
      %826 = vmatprep.mubr.f32.mxu0 0.0
      %827 = vmatmul.mubr.f32.gmra.mrb[0].mxu0 %v521
      %v828 = vpop.f32.mrb[0].mxu0
      %v829 = vadd.f32 0.0, %v828
      %v830 = vpop.f32.mrb[0].mxu0
      %831 = vmatprep.mubr.f32.mxu0 0.0
      %832 = vmatmul.mubr.f32.gmra.mrb[0].mxu0 %v524
      %v833 = vpop.f32.mrb[0].mxu0
      %v834 = vadd.f32 0.0, %v833
      %v835 = vpop.f32.mrb[0].mxu0
      %836 = vmatprep.mubr.f32.mxu0 0.0
      %837 = vmatmul.mubr.f32.gmra.mrb[0].mxu0 %v527
      %v838 = vpop.f32.mrb[0].mxu0
      %v839 = vadd.f32 0.0, %v838
      %v840 = vpop.f32.mrb[0].mxu0
      %841 = vmatprep.mubr.f32.mxu0 0.0
      %842 = vmatmul.mubr.f32.gmra.mrb[0].mxu0 %v530
      %v843 = vpop.f32.mrb[0].mxu0
      %v844 = vadd.f32 0.0, %v843
      %v845 = vpop.f32.mrb[0].mxu0
      %846 = vdwg.mxu0
      %847 = vmatprep.subr.mxu0 0.0
      %848 = vmatpush1.msra.mxu0 %v503
      %849 = vmatprep.subr.mxu0 0.0
      %850 = vmatpush1.msra.mxu0 %v504
      %851 = vmatprep.subr.mxu0 0.0
      %852 = vmatpush1.msra.mxu0 %v505
      %853 = vmatprep.subr.mxu0 0.0
      %854 = vmatpush1.msra.mxu0 %v506
      %855 = vmatprep.subr.mxu0 0.0
      %856 = vmatpush1.msra.mxu0 0.0
      %857 = vmatprep.subr.mxu0 0.0
      %858 = vmatpush1.msra.mxu0 0.0
      %859 = vmatprep.subr.mxu0 0.0
      %860 = vmatpush1.msra.mxu0 0.0
      %861 = vmatprep.subr.mxu0 0.0
      %862 = vmatpush1.msra.mxu0 0.0
      %863 = vmatprep.subr.mxu0 0.0
      %864 = vmatpush1.msra.mxu0 0.0
      %865 = vmatprep.subr.mxu0 0.0
      %866 = vmatpush1.msra.mxu0 0.0
      %867 = vmatprep.subr.mxu0 0.0
      %868 = vmatpush1.msra.mxu0 0.0
      %869 = vmatprep.subr.mxu0 0.0
      %870 = vmatpush1.msra.mxu0 0.0
      %871 = vmatprep.subr.mxu0 0.0
      %872 = vmatpush1.msra.mxu0 0.0
      %873 = vmatprep.subr.mxu0 0.0
      %874 = vmatpush1.msra.mxu0 0.0
      %875 = vmatprep.subr.mxu0 0.0
      %876 = vmatpush1.msra.mxu0 0.0
      %877 = vmatprep.subr.mxu0 0.0
      %878 = vmatpush1.msra.mxu0 0.0
      %879 = vmatprep.subr.mxu0 0.0
      %880 = vmatpush1.msra.mxu0 0.0
      %881 = vmatprep.subr.mxu0 0.0
      %882 = vmatpush1.msra.mxu0 0.0
      %883 = vmatprep.subr.mxu0 0.0
      %884 = vmatpush1.msra.mxu0 0.0
      %885 = vmatprep.subr.mxu0 0.0
      %886 = vmatpush1.msra.mxu0 0.0
      %887 = vmatprep.subr.mxu0 0.0
      %888 = vmatpush1.msra.mxu0 0.0
      %889 = vmatprep.subr.mxu0 0.0
      %890 = vmatpush1.msra.mxu0 0.0
      %891 = vmatprep.subr.mxu0 0.0
      %892 = vmatpush1.msra.mxu0 0.0
      %893 = vmatprep.subr.mxu0 0.0
      %894 = vmatpush1.msra.mxu0 0.0
      %895 = vmatprep.subr.mxu0 0.0
      %896 = vmatpush1.msra.mxu0 0.0
      %897 = vmatprep.subr.mxu0 0.0
      %898 = vmatpush1.msra.mxu0 0.0
      %899 = vmatprep.subr.mxu0 0.0
      %900 = vmatpush1.msra.mxu0 0.0
      %901 = vmatprep.subr.mxu0 0.0
      %902 = vmatpush1.msra.mxu0 0.0
      %903 = vmatprep.subr.mxu0 0.0
      %904 = vmatpush1.msra.mxu0 0.0
      %905 = vmatprep.subr.mxu0 0.0
      %906 = vmatpush1.msra.mxu0 0.0
      %907 = vmatprep.subr.mxu0 0.0
      %908 = vmatpush1.msra.mxu0 0.0
      %909 = vmatprep.subr.mxu0 0.0
      %910 = vmatpush1.msra.mxu0 0.0
      %911 = vmatprep.mubr.f32.mxu0 0.0
      %912 = vmatmul.mubr.f32.gmra.mrb[0].mxu0 %v509
      %v913 = vpop.f32.mrb[0].mxu0
      %v914 = vadd.f32 0.0, %v913
      %v915 = vpop.f32.mrb[0].mxu0
      %916 = vmatprep.mubr.f32.mxu0 0.0
      %917 = vmatmul.mubr.f32.gmra.mrb[0].mxu0 %v512
      %v918 = vpop.f32.mrb[0].mxu0
      %v919 = vadd.f32 0.0, %v918
      %v920 = vpop.f32.mrb[0].mxu0
      %921 = vmatprep.mubr.f32.mxu0 0.0
      %922 = vmatmul.mubr.f32.gmra.mrb[0].mxu0 %v515
      %v923 = vpop.f32.mrb[0].mxu0
      %v924 = vadd.f32 0.0, %v923
      %v925 = vpop.f32.mrb[0].mxu0
      %926 = vmatprep.mubr.f32.mxu0 0.0
      %927 = vmatmul.mubr.f32.gmra.mrb[0].mxu0 %v518
      %v928 = vpop.f32.mrb[0].mxu0
      %v929 = vadd.f32 0.0, %v928
      %v930 = vpop.f32.mrb[0].mxu0
      %931 = vmatprep.mubr.f32.mxu0 0.0
      %932 = vmatmul.mubr.f32.gmra.mrb[0].mxu0 %v521
      %v933 = vpop.f32.mrb[0].mxu0
      %v934 = vadd.f32 0.0, %v933
      %v935 = vpop.f32.mrb[0].mxu0
      %936 = vmatprep.mubr.f32.mxu0 0.0
      %937 = vmatmul.mubr.f32.gmra.mrb[0].mxu0 %v524
      %v938 = vpop.f32.mrb[0].mxu0
      %v939 = vadd.f32 0.0, %v938
      %v940 = vpop.f32.mrb[0].mxu0
      %941 = vmatprep.mubr.f32.mxu0 0.0
      %942 = vmatmul.mubr.f32.gmra.mrb[0].mxu0 %v527
      %v943 = vpop.f32.mrb[0].mxu0
      %v944 = vadd.f32 0.0, %v943
      %v945 = vpop.f32.mrb[0].mxu0
      %946 = vmatprep.mubr.f32.mxu0 0.0
      %947 = vmatmul.mubr.f32.gmra.mrb[0].mxu0 %v530
      %v948 = vpop.f32.mrb[0].mxu0
      %v949 = vadd.f32 0.0, %v948
      %v950 = vpop.f32.mrb[0].mxu0
      %951 = vdwg.mxu0
      %v952 = vld [vmem:[%s4] sm:$0xff]
      %v953 = vld [vmem:[%s4 + $0x8] sm:$0xff]
      %v954 = vld [vmem:[%s4 + $0x10] sm:$0xff]
      %v955 = vld [vmem:[%s4 + $0x18] sm:$0xff]
      %v956 = vld [vmem:[%s4 + $0x20] sm:$0xff]
      %v957 = vld [vmem:[%s4 + $0x28] sm:$0xff]
      %v958 = vld [vmem:[%s4 + $0x30] sm:$0xff]
      %v959 = vld [vmem:[%s4 + $0x38] sm:$0xff]
      %v960 = vld [vmem:[%s4 + $0x40] sm:$0xff]
      %v961 = vld [vmem:[%s4 + $0x48] sm:$0xff]
      %v962 = vld [vmem:[%s4 + $0x50] sm:$0xff]
      %v963 = vld [vmem:[%s4 + $0x58] sm:$0xff]
      %v964 = vld [vmem:[%s4 + $0x60] sm:$0xff]
      %v965 = vld [vmem:[%s4 + $0x68] sm:$0xff]
      %v966 = vld [vmem:[%s4 + $0x70] sm:$0xff]
      %v967 = vld [vmem:[%s4 + $0x78] sm:$0xff]
      %v969 = vsel %vm507, %v475, 0
      %v972 = vsel %vm507, %v476, 0
      %v975 = vsel %vm507, %v477, 0
      %v978 = vsel %vm507, %v478, 0
      %v981 = vsel %vm507, %v479, 0
      %v984 = vsel %vm507, %v480, 0
      %v987 = vsel %vm507, %v481, 0
      %v990 = vsel %vm507, %v482, 0
      %992 = vmatprep.subr.mxu0 0.0
      %993 = vmatpush1.msra.mxu0 %v952
      %994 = vmatprep.subr.mxu0 0.0
      %995 = vmatpush1.msra.mxu0 %v953
      %996 = vmatprep.subr.mxu0 0.0
      %997 = vmatpush1.msra.mxu0 %v954
      %998 = vmatprep.subr.mxu0 0.0
      %999 = vmatpush1.msra.mxu0 %v955
      %1000 = vmatprep.subr.mxu0 0.0
      %1001 = vmatpush1.msra.mxu0 0.0
      %1002 = vmatprep.subr.mxu0 0.0
      %1003 = vmatpush1.msra.mxu0 0.0
      %1004 = vmatprep.subr.mxu0 0.0
      %1005 = vmatpush1.msra.mxu0 0.0
      %1006 = vmatprep.subr.mxu0 0.0
      %1007 = vmatpush1.msra.mxu0 0.0
      %1008 = vmatprep.subr.mxu0 0.0
      %1009 = vmatpush1.msra.mxu0 0.0
      %1010 = vmatprep.subr.mxu0 0.0
      %1011 = vmatpush1.msra.mxu0 0.0
      %1012 = vmatprep.subr.mxu0 0.0
      %1013 = vmatpush1.msra.mxu0 0.0
      %1014 = vmatprep.subr.mxu0 0.0
      %1015 = vmatpush1.msra.mxu0 0.0
      %1016 = vmatprep.subr.mxu0 0.0
      %1017 = vmatpush1.msra.mxu0 0.0
      %1018 = vmatprep.subr.mxu0 0.0
      %1019 = vmatpush1.msra.mxu0 0.0
      %1020 = vmatprep.subr.mxu0 0.0
      %1021 = vmatpush1.msra.mxu0 0.0
      %1022 = vmatprep.subr.mxu0 0.0
      %1023 = vmatpush1.msra.mxu0 0.0
      %1024 = vmatprep.subr.mxu0 0.0
      %1025 = vmatpush1.msra.mxu0 0.0
      %1026 = vmatprep.subr.mxu0 0.0
      %1027 = vmatpush1.msra.mxu0 0.0
      %1028 = vmatprep.subr.mxu0 0.0
      %1029 = vmatpush1.msra.mxu0 0.0
      %1030 = vmatprep.subr.mxu0 0.0
      %1031 = vmatpush1.msra.mxu0 0.0
      %1032 = vmatprep.subr.mxu0 0.0
      %1033 = vmatpush1.msra.mxu0 0.0
      %1034 = vmatprep.subr.mxu0 0.0
      %1035 = vmatpush1.msra.mxu0 0.0
      %1036 = vmatprep.subr.mxu0 0.0
      %1037 = vmatpush1.msra.mxu0 0.0
      %1038 = vmatprep.subr.mxu0 0.0
      %1039 = vmatpush1.msra.mxu0 0.0
      %1040 = vmatprep.subr.mxu0 0.0
      %1041 = vmatpush1.msra.mxu0 0.0
      %1042 = vmatprep.subr.mxu0 0.0
      %1043 = vmatpush1.msra.mxu0 0.0
      %1044 = vmatprep.subr.mxu0 0.0
      %1045 = vmatpush1.msra.mxu0 0.0
      %1046 = vmatprep.subr.mxu0 0.0
      %1047 = vmatpush1.msra.mxu0 0.0
      %1048 = vmatprep.subr.mxu0 0.0
      %1049 = vmatpush1.msra.mxu0 0.0
      %1050 = vmatprep.subr.mxu0 0.0
      %1051 = vmatpush1.msra.mxu0 0.0
      %1052 = vmatprep.subr.mxu0 0.0
      %1053 = vmatpush1.msra.mxu0 0.0
      %1054 = vmatprep.subr.mxu0 0.0
      %1055 = vmatpush1.msra.mxu0 0.0
      %1056 = vmatprep.mubr.f32.mxu0 0.0
      %1057 = vmatmul.mubr.f32.gmra.mrb[0].mxu0 %v969
      %v1058 = vpop.f32.mrb[0].mxu0
      %v1059 = vadd.f32 0.0, %v1058
      %v1060 = vpop.f32.mrb[0].mxu0
      %1061 = vmatprep.mubr.f32.mxu0 0.0
      %1062 = vmatmul.mubr.f32.gmra.mrb[0].mxu0 %v972
      %v1063 = vpop.f32.mrb[0].mxu0
      %v1064 = vadd.f32 0.0, %v1063
      %v1065 = vpop.f32.mrb[0].mxu0
      %1066 = vmatprep.mubr.f32.mxu0 0.0
      %1067 = vmatmul.mubr.f32.gmra.mrb[0].mxu0 %v975
      %v1068 = vpop.f32.mrb[0].mxu0
      %v1069 = vadd.f32 0.0, %v1068
      %v1070 = vpop.f32.mrb[0].mxu0
      %1071 = vmatprep.mubr.f32.mxu0 0.0
      %1072 = vmatmul.mubr.f32.gmra.mrb[0].mxu0 %v978
      %v1073 = vpop.f32.mrb[0].mxu0
      %v1074 = vadd.f32 0.0, %v1073
      %v1075 = vpop.f32.mrb[0].mxu0
      %1076 = vmatprep.mubr.f32.mxu0 0.0
      %1077 = vmatmul.mubr.f32.gmra.mrb[0].mxu0 %v981
      %v1078 = vpop.f32.mrb[0].mxu0
      %v1079 = vadd.f32 0.0, %v1078
      %v1080 = vpop.f32.mrb[0].mxu0
      %1081 = vmatprep.mubr.f32.mxu0 0.0
      %1082 = vmatmul.mubr.f32.gmra.mrb[0].mxu0 %v984
      %v1083 = vpop.f32.mrb[0].mxu0
      %v1084 = vadd.f32 0.0, %v1083
      %v1085 = vpop.f32.mrb[0].mxu0
      %1086 = vmatprep.mubr.f32.mxu0 0.0
      %1087 = vmatmul.mubr.f32.gmra.mrb[0].mxu0 %v987
      %v1088 = vpop.f32.mrb[0].mxu0
      %v1089 = vadd.f32 0.0, %v1088
      %v1090 = vpop.f32.mrb[0].mxu0
      %1091 = vmatprep.mubr.f32.mxu0 0.0
      %1092 = vmatmul.mubr.f32.gmra.mrb[0].mxu0 %v990
      %v1093 = vpop.f32.mrb[0].mxu0
      %v1094 = vadd.f32 0.0, %v1093
      %v1095 = vpop.f32.mrb[0].mxu0
      %1096 = vdwg.mxu0
      %1097 = vmatprep.subr.mxu0 0.0
      %1098 = vmatpush1.msra.mxu0 %v956
      %1099 = vmatprep.subr.mxu0 0.0
      %1100 = vmatpush1.msra.mxu0 %v957
      %1101 = vmatprep.subr.mxu0 0.0
      %1102 = vmatpush1.msra.mxu0 %v958
      %1103 = vmatprep.subr.mxu0 0.0
      %1104 = vmatpush1.msra.mxu0 %v959
      %1105 = vmatprep.subr.mxu0 0.0
      %1106 = vmatpush1.msra.mxu0 0.0
      %1107 = vmatprep.subr.mxu0 0.0
      %1108 = vmatpush1.msra.mxu0 0.0
      %1109 = vmatprep.subr.mxu0 0.0
      %1110 = vmatpush1.msra.mxu0 0.0
      %1111 = vmatprep.subr.mxu0 0.0
      %1112 = vmatpush1.msra.mxu0 0.0
      %1113 = vmatprep.subr.mxu0 0.0
      %1114 = vmatpush1.msra.mxu0 0.0
      %1115 = vmatprep.subr.mxu0 0.0
      %1116 = vmatpush1.msra.mxu0 0.0
      %1117 = vmatprep.subr.mxu0 0.0
      %1118 = vmatpush1.msra.mxu0 0.0
      %1119 = vmatprep.subr.mxu0 0.0
      %1120 = vmatpush1.msra.mxu0 0.0
      %1121 = vmatprep.subr.mxu0 0.0
      %1122 = vmatpush1.msra.mxu0 0.0
      %1123 = vmatprep.subr.mxu0 0.0
      %1124 = vmatpush1.msra.mxu0 0.0
      %1125 = vmatprep.subr.mxu0 0.0
      %1126 = vmatpush1.msra.mxu0 0.0
      %1127 = vmatprep.subr.mxu0 0.0
      %1128 = vmatpush1.msra.mxu0 0.0
      %1129 = vmatprep.subr.mxu0 0.0
      %1130 = vmatpush1.msra.mxu0 0.0
      %1131 = vmatprep.subr.mxu0 0.0
      %1132 = vmatpush1.msra.mxu0 0.0
      %1133 = vmatprep.subr.mxu0 0.0
      %1134 = vmatpush1.msra.mxu0 0.0
      %1135 = vmatprep.subr.mxu0 0.0
      %1136 = vmatpush1.msra.mxu0 0.0
      %1137 = vmatprep.subr.mxu0 0.0
      %1138 = vmatpush1.msra.mxu0 0.0
      %1139 = vmatprep.subr.mxu0 0.0
      %1140 = vmatpush1.msra.mxu0 0.0
      %1141 = vmatprep.subr.mxu0 0.0
      %1142 = vmatpush1.msra.mxu0 0.0
      %1143 = vmatprep.subr.mxu0 0.0
      %1144 = vmatpush1.msra.mxu0 0.0
      %1145 = vmatprep.subr.mxu0 0.0
      %1146 = vmatpush1.msra.mxu0 0.0
      %1147 = vmatprep.subr.mxu0 0.0
      %1148 = vmatpush1.msra.mxu0 0.0
      %1149 = vmatprep.subr.mxu0 0.0
      %1150 = vmatpush1.msra.mxu0 0.0
      %1151 = vmatprep.subr.mxu0 0.0
      %1152 = vmatpush1.msra.mxu0 0.0
      %1153 = vmatprep.subr.mxu0 0.0
      %1154 = vmatpush1.msra.mxu0 0.0
      %1155 = vmatprep.subr.mxu0 0.0
      %1156 = vmatpush1.msra.mxu0 0.0
      %1157 = vmatprep.subr.mxu0 0.0
      %1158 = vmatpush1.msra.mxu0 0.0
      %1159 = vmatprep.subr.mxu0 0.0
      %1160 = vmatpush1.msra.mxu0 0.0
      %1161 = vmatprep.mubr.f32.mxu0 0.0
      %1162 = vmatmul.mubr.f32.gmra.mrb[0].mxu0 %v969
      %v1163 = vpop.f32.mrb[0].mxu0
      %v1164 = vadd.f32 0.0, %v1163
      %v1165 = vpop.f32.mrb[0].mxu0
      %1166 = vmatprep.mubr.f32.mxu0 0.0
      %1167 = vmatmul.mubr.f32.gmra.mrb[0].mxu0 %v972
      %v1168 = vpop.f32.mrb[0].mxu0
      %v1169 = vadd.f32 0.0, %v1168
      %v1170 = vpop.f32.mrb[0].mxu0
      %1171 = vmatprep.mubr.f32.mxu0 0.0
      %1172 = vmatmul.mubr.f32.gmra.mrb[0].mxu0 %v975
      %v1173 = vpop.f32.mrb[0].mxu0
      %v1174 = vadd.f32 0.0, %v1173
      %v1175 = vpop.f32.mrb[0].mxu0
      %1176 = vmatprep.mubr.f32.mxu0 0.0
      %1177 = vmatmul.mubr.f32.gmra.mrb[0].mxu0 %v978
      %v1178 = vpop.f32.mrb[0].mxu0
      %v1179 = vadd.f32 0.0, %v1178
      %v1180 = vpop.f32.mrb[0].mxu0
      %1181 = vmatprep.mubr.f32.mxu0 0.0
      %1182 = vmatmul.mubr.f32.gmra.mrb[0].mxu0 %v981
      %v1183 = vpop.f32.mrb[0].mxu0
      %v1184 = vadd.f32 0.0, %v1183
      %v1185 = vpop.f32.mrb[0].mxu0
      %1186 = vmatprep.mubr.f32.mxu0 0.0
      %1187 = vmatmul.mubr.f32.gmra.mrb[0].mxu0 %v984
      %v1188 = vpop.f32.mrb[0].mxu0
      %v1189 = vadd.f32 0.0, %v1188
      %v1190 = vpop.f32.mrb[0].mxu0
      %1191 = vmatprep.mubr.f32.mxu0 0.0
      %1192 = vmatmul.mubr.f32.gmra.mrb[0].mxu0 %v987
      %v1193 = vpop.f32.mrb[0].mxu0
      %v1194 = vadd.f32 0.0, %v1193
      %v1195 = vpop.f32.mrb[0].mxu0
      %1196 = vmatprep.mubr.f32.mxu0 0.0
      %1197 = vmatmul.mubr.f32.gmra.mrb[0].mxu0 %v990
      %v1198 = vpop.f32.mrb[0].mxu0
      %v1199 = vadd.f32 0.0, %v1198
      %v1200 = vpop.f32.mrb[0].mxu0
      %1201 = vdwg.mxu0
      %1202 = vmatprep.subr.mxu0 0.0
      %1203 = vmatpush1.msra.mxu0 %v960
      %1204 = vmatprep.subr.mxu0 0.0
      %1205 = vmatpush1.msra.mxu0 %v961
      %1206 = vmatprep.subr.mxu0 0.0
      %1207 = vmatpush1.msra.mxu0 %v962
      %1208 = vmatprep.subr.mxu0 0.0
      %1209 = vmatpush1.msra.mxu0 %v963
      %1210 = vmatprep.subr.mxu0 0.0
      %1211 = vmatpush1.msra.mxu0 0.0
      %1212 = vmatprep.subr.mxu0 0.0
      %1213 = vmatpush1.msra.mxu0 0.0
      %1214 = vmatprep.subr.mxu0 0.0
      %1215 = vmatpush1.msra.mxu0 0.0
      %1216 = vmatprep.subr.mxu0 0.0
      %1217 = vmatpush1.msra.mxu0 0.0
      %1218 = vmatprep.subr.mxu0 0.0
      %1219 = vmatpush1.msra.mxu0 0.0
      %1220 = vmatprep.subr.mxu0 0.0
      %1221 = vmatpush1.msra.mxu0 0.0
      %1222 = vmatprep.subr.mxu0 0.0
      %1223 = vmatpush1.msra.mxu0 0.0
      %1224 = vmatprep.subr.mxu0 0.0
      %1225 = vmatpush1.msra.mxu0 0.0
      %1226 = vmatprep.subr.mxu0 0.0
      %1227 = vmatpush1.msra.mxu0 0.0
      %1228 = vmatprep.subr.mxu0 0.0
      %1229 = vmatpush1.msra.mxu0 0.0
      %1230 = vmatprep.subr.mxu0 0.0
      %1231 = vmatpush1.msra.mxu0 0.0
      %1232 = vmatprep.subr.mxu0 0.0
      %1233 = vmatpush1.msra.mxu0 0.0
      %1234 = vmatprep.subr.mxu0 0.0
      %1235 = vmatpush1.msra.mxu0 0.0
      %1236 = vmatprep.subr.mxu0 0.0
      %1237 = vmatpush1.msra.mxu0 0.0
      %1238 = vmatprep.subr.mxu0 0.0
      %1239 = vmatpush1.msra.mxu0 0.0
      %1240 = vmatprep.subr.mxu0 0.0
      %1241 = vmatpush1.msra.mxu0 0.0
      %1242 = vmatprep.subr.mxu0 0.0
      %1243 = vmatpush1.msra.mxu0 0.0
      %1244 = vmatprep.subr.mxu0 0.0
      %1245 = vmatpush1.msra.mxu0 0.0
      %1246 = vmatprep.subr.mxu0 0.0
      %1247 = vmatpush1.msra.mxu0 0.0
      %1248 = vmatprep.subr.mxu0 0.0
      %1249 = vmatpush1.msra.mxu0 0.0
      %1250 = vmatprep.subr.mxu0 0.0
      %1251 = vmatpush1.msra.mxu0 0.0
      %1252 = vmatprep.subr.mxu0 0.0
      %1253 = vmatpush1.msra.mxu0 0.0
      %1254 = vmatprep.subr.mxu0 0.0
      %1255 = vmatpush1.msra.mxu0 0.0
      %1256 = vmatprep.subr.mxu0 0.0
      %1257 = vmatpush1.msra.mxu0 0.0
      %1258 = vmatprep.subr.mxu0 0.0
      %1259 = vmatpush1.msra.mxu0 0.0
      %1260 = vmatprep.subr.mxu0 0.0
      %1261 = vmatpush1.msra.mxu0 0.0
      %1262 = vmatprep.subr.mxu0 0.0
      %1263 = vmatpush1.msra.mxu0 0.0
      %1264 = vmatprep.subr.mxu0 0.0
      %1265 = vmatpush1.msra.mxu0 0.0
      %1266 = vmatprep.mubr.f32.mxu0 0.0
      %1267 = vmatmul.mubr.f32.gmra.mrb[0].mxu0 %v969
      %v1268 = vpop.f32.mrb[0].mxu0
      %v1269 = vadd.f32 0.0, %v1268
      %v1270 = vpop.f32.mrb[0].mxu0
      %1271 = vmatprep.mubr.f32.mxu0 0.0
      %1272 = vmatmul.mubr.f32.gmra.mrb[0].mxu0 %v972
      %v1273 = vpop.f32.mrb[0].mxu0
      %v1274 = vadd.f32 0.0, %v1273
      %v1275 = vpop.f32.mrb[0].mxu0
      %1276 = vmatprep.mubr.f32.mxu0 0.0
      %1277 = vmatmul.mubr.f32.gmra.mrb[0].mxu0 %v975
      %v1278 = vpop.f32.mrb[0].mxu0
      %v1279 = vadd.f32 0.0, %v1278
      %v1280 = vpop.f32.mrb[0].mxu0
      %1281 = vmatprep.mubr.f32.mxu0 0.0
      %1282 = vmatmul.mubr.f32.gmra.mrb[0].mxu0 %v978
      %v1283 = vpop.f32.mrb[0].mxu0
      %v1284 = vadd.f32 0.0, %v1283
      %v1285 = vpop.f32.mrb[0].mxu0
      %1286 = vmatprep.mubr.f32.mxu0 0.0
      %1287 = vmatmul.mubr.f32.gmra.mrb[0].mxu0 %v981
      %v1288 = vpop.f32.mrb[0].mxu0
      %v1289 = vadd.f32 0.0, %v1288
      %v1290 = vpop.f32.mrb[0].mxu0
      %1291 = vmatprep.mubr.f32.mxu0 0.0
      %1292 = vmatmul.mubr.f32.gmra.mrb[0].mxu0 %v984
      %v1293 = vpop.f32.mrb[0].mxu0
      %v1294 = vadd.f32 0.0, %v1293
      %v1295 = vpop.f32.mrb[0].mxu0
      %1296 = vmatprep.mubr.f32.mxu0 0.0
      %1297 = vmatmul.mubr.f32.gmra.mrb[0].mxu0 %v987
      %v1298 = vpop.f32.mrb[0].mxu0
      %v1299 = vadd.f32 0.0, %v1298
      %v1300 = vpop.f32.mrb[0].mxu0
      %1301 = vmatprep.mubr.f32.mxu0 0.0
      %1302 = vmatmul.mubr.f32.gmra.mrb[0].mxu0 %v990
      %v1303 = vpop.f32.mrb[0].mxu0
      %v1304 = vadd.f32 0.0, %v1303
      %v1305 = vpop.f32.mrb[0].mxu0
      %1306 = vdwg.mxu0
      %1307 = vmatprep.subr.mxu0 0.0
      %1308 = vmatpush1.msra.mxu0 %v964
      %1309 = vmatprep.subr.mxu0 0.0
      %1310 = vmatpush1.msra.mxu0 %v965
      %1311 = vmatprep.subr.mxu0 0.0
      %1312 = vmatpush1.msra.mxu0 %v966
      %1313 = vmatprep.subr.mxu0 0.0
      %1314 = vmatpush1.msra.mxu0 %v967
      %1315 = vmatprep.subr.mxu0 0.0
      %1316 = vmatpush1.msra.mxu0 0.0
      %1317 = vmatprep.subr.mxu0 0.0
      %1318 = vmatpush1.msra.mxu0 0.0
      %1319 = vmatprep.subr.mxu0 0.0
      %1320 = vmatpush1.msra.mxu0 0.0
      %1321 = vmatprep.subr.mxu0 0.0
      %1322 = vmatpush1.msra.mxu0 0.0
      %1323 = vmatprep.subr.mxu0 0.0
      %1324 = vmatpush1.msra.mxu0 0.0
      %1325 = vmatprep.subr.mxu0 0.0
      %1326 = vmatpush1.msra.mxu0 0.0
      %1327 = vmatprep.subr.mxu0 0.0
      %1328 = vmatpush1.msra.mxu0 0.0
      %1329 = vmatprep.subr.mxu0 0.0
      %1330 = vmatpush1.msra.mxu0 0.0
      %1331 = vmatprep.subr.mxu0 0.0
      %1332 = vmatpush1.msra.mxu0 0.0
      %1333 = vmatprep.subr.mxu0 0.0
      %1334 = vmatpush1.msra.mxu0 0.0
      %1335 = vmatprep.subr.mxu0 0.0
      %1336 = vmatpush1.msra.mxu0 0.0
      %1337 = vmatprep.subr.mxu0 0.0
      %1338 = vmatpush1.msra.mxu0 0.0
      %1339 = vmatprep.subr.mxu0 0.0
      %1340 = vmatpush1.msra.mxu0 0.0
      %1341 = vmatprep.subr.mxu0 0.0
      %1342 = vmatpush1.msra.mxu0 0.0
      %1343 = vmatprep.subr.mxu0 0.0
      %1344 = vmatpush1.msra.mxu0 0.0
      %1345 = vmatprep.subr.mxu0 0.0
      %1346 = vmatpush1.msra.mxu0 0.0
      %1347 = vmatprep.subr.mxu0 0.0
      %1348 = vmatpush1.msra.mxu0 0.0
      %1349 = vmatprep.subr.mxu0 0.0
      %1350 = vmatpush1.msra.mxu0 0.0
      %1351 = vmatprep.subr.mxu0 0.0
      %1352 = vmatpush1.msra.mxu0 0.0
      %1353 = vmatprep.subr.mxu0 0.0
      %1354 = vmatpush1.msra.mxu0 0.0
      %1355 = vmatprep.subr.mxu0 0.0
      %1356 = vmatpush1.msra.mxu0 0.0
      %1357 = vmatprep.subr.mxu0 0.0
      %1358 = vmatpush1.msra.mxu0 0.0
      %1359 = vmatprep.subr.mxu0 0.0
      %1360 = vmatpush1.msra.mxu0 0.0
      %1361 = vmatprep.subr.mxu0 0.0
      %1362 = vmatpush1.msra.mxu0 0.0
      %1363 = vmatprep.subr.mxu0 0.0
      %1364 = vmatpush1.msra.mxu0 0.0
      %1365 = vmatprep.subr.mxu0 0.0
      %1366 = vmatpush1.msra.mxu0 0.0
      %1367 = vmatprep.subr.mxu0 0.0
      %1368 = vmatpush1.msra.mxu0 0.0
      %1369 = vmatprep.subr.mxu0 0.0
      %1370 = vmatpush1.msra.mxu0 0.0
      %1371 = vmatprep.mubr.f32.mxu0 0.0
      %1372 = vmatmul.mubr.f32.gmra.mrb[0].mxu0 %v969
      %v1373 = vpop.f32.mrb[0].mxu0
      %v1374 = vadd.f32 0.0, %v1373
      %v1375 = vpop.f32.mrb[0].mxu0
      %1376 = vmatprep.mubr.f32.mxu0 0.0
      %1377 = vmatmul.mubr.f32.gmra.mrb[0].mxu0 %v972
      %v1378 = vpop.f32.mrb[0].mxu0
      %v1379 = vadd.f32 0.0, %v1378
      %v1380 = vpop.f32.mrb[0].mxu0
      %1381 = vmatprep.mubr.f32.mxu0 0.0
      %1382 = vmatmul.mubr.f32.gmra.mrb[0].mxu0 %v975
      %v1383 = vpop.f32.mrb[0].mxu0
      %v1384 = vadd.f32 0.0, %v1383
      %v1385 = vpop.f32.mrb[0].mxu0
      %1386 = vmatprep.mubr.f32.mxu0 0.0
      %1387 = vmatmul.mubr.f32.gmra.mrb[0].mxu0 %v978
      %v1388 = vpop.f32.mrb[0].mxu0
      %v1389 = vadd.f32 0.0, %v1388
      %v1390 = vpop.f32.mrb[0].mxu0
      %1391 = vmatprep.mubr.f32.mxu0 0.0
      %1392 = vmatmul.mubr.f32.gmra.mrb[0].mxu0 %v981
      %v1393 = vpop.f32.mrb[0].mxu0
      %v1394 = vadd.f32 0.0, %v1393
      %v1395 = vpop.f32.mrb[0].mxu0
      %1396 = vmatprep.mubr.f32.mxu0 0.0
      %1397 = vmatmul.mubr.f32.gmra.mrb[0].mxu0 %v984
      %v1398 = vpop.f32.mrb[0].mxu0
      %v1399 = vadd.f32 0.0, %v1398
      %v1400 = vpop.f32.mrb[0].mxu0
      %1401 = vmatprep.mubr.f32.mxu0 0.0
      %1402 = vmatmul.mubr.f32.gmra.mrb[0].mxu0 %v987
      %v1403 = vpop.f32.mrb[0].mxu0
      %v1404 = vadd.f32 0.0, %v1403
      %v1405 = vpop.f32.mrb[0].mxu0
      %1406 = vmatprep.mubr.f32.mxu0 0.0
      %1407 = vmatmul.mubr.f32.gmra.mrb[0].mxu0 %v990
      %v1408 = vpop.f32.mrb[0].mxu0
      %v1409 = vadd.f32 0.0, %v1408
      %v1410 = vpop.f32.mrb[0].mxu0
      %1411 = vdwg.mxu0
      %v1412 = vld [vmem:[%s5] sm:$0xff]
      %v1413 = vld [vmem:[%s5 + $0x8] sm:$0xff]
      %v1414 = vld [vmem:[%s5 + $0x10] sm:$0xff]
      %v1415 = vld [vmem:[%s5 + $0x18] sm:$0xff]
      %v1416 = vld [vmem:[%s5 + $0x20] sm:$0xff]
      %v1417 = vld [vmem:[%s5 + $0x28] sm:$0xff]
      %v1418 = vld [vmem:[%s5 + $0x30] sm:$0xff]
      %v1419 = vld [vmem:[%s5 + $0x38] sm:$0xff]
      %v1420 = vld [vmem:[%s5 + $0x40] sm:$0xff]
      %v1421 = vld [vmem:[%s5 + $0x48] sm:$0xff]
      %v1422 = vld [vmem:[%s5 + $0x50] sm:$0xff]
      %v1423 = vld [vmem:[%s5 + $0x58] sm:$0xff]
      %v1424 = vld [vmem:[%s5 + $0x60] sm:$0xff]
      %v1425 = vld [vmem:[%s5 + $0x68] sm:$0xff]
      %v1426 = vld [vmem:[%s5 + $0x70] sm:$0xff]
      %v1427 = vld [vmem:[%s5 + $0x78] sm:$0xff]
      %1428 = vmatprep.subr.mxu0 0.0
      %1429 = vmatpush1.msra.mxu0 %v1412
      %1430 = vmatprep.subr.mxu0 0.0
      %1431 = vmatpush1.msra.mxu0 %v1413
      %1432 = vmatprep.subr.mxu0 0.0
      %1433 = vmatpush1.msra.mxu0 %v1414
      %1434 = vmatprep.subr.mxu0 0.0
      %1435 = vmatpush1.msra.mxu0 %v1415
      %1436 = vmatprep.subr.mxu0 0.0
      %1437 = vmatpush1.msra.mxu0 0.0
      %1438 = vmatprep.subr.mxu0 0.0
      %1439 = vmatpush1.msra.mxu0 0.0
      %1440 = vmatprep.subr.mxu0 0.0
      %1441 = vmatpush1.msra.mxu0 0.0
      %1442 = vmatprep.subr.mxu0 0.0
      %1443 = vmatpush1.msra.mxu0 0.0
      %1444 = vmatprep.subr.mxu0 0.0
      %1445 = vmatpush1.msra.mxu0 0.0
      %1446 = vmatprep.subr.mxu0 0.0
      %1447 = vmatpush1.msra.mxu0 0.0
      %1448 = vmatprep.subr.mxu0 0.0
      %1449 = vmatpush1.msra.mxu0 0.0
      %1450 = vmatprep.subr.mxu0 0.0
      %1451 = vmatpush1.msra.mxu0 0.0
      %1452 = vmatprep.subr.mxu0 0.0
      %1453 = vmatpush1.msra.mxu0 0.0
      %1454 = vmatprep.subr.mxu0 0.0
      %1455 = vmatpush1.msra.mxu0 0.0
      %1456 = vmatprep.subr.mxu0 0.0
      %1457 = vmatpush1.msra.mxu0 0.0
      %1458 = vmatprep.subr.mxu0 0.0
      %1459 = vmatpush1.msra.mxu0 0.0
      %1460 = vmatprep.subr.mxu0 0.0
      %1461 = vmatpush1.msra.mxu0 0.0
      %1462 = vmatprep.subr.mxu0 0.0
      %1463 = vmatpush1.msra.mxu0 0.0
      %1464 = vmatprep.subr.mxu0 0.0
      %1465 = vmatpush1.msra.mxu0 0.0
      %1466 = vmatprep.subr.mxu0 0.0
      %1467 = vmatpush1.msra.mxu0 0.0
      %1468 = vmatprep.subr.mxu0 0.0
      %1469 = vmatpush1.msra.mxu0 0.0
      %1470 = vmatprep.subr.mxu0 0.0
      %1471 = vmatpush1.msra.mxu0 0.0
      %1472 = vmatprep.subr.mxu0 0.0
      %1473 = vmatpush1.msra.mxu0 0.0
      %1474 = vmatprep.subr.mxu0 0.0
      %1475 = vmatpush1.msra.mxu0 0.0
      %1476 = vmatprep.subr.mxu0 0.0
      %1477 = vmatpush1.msra.mxu0 0.0
      %1478 = vmatprep.subr.mxu0 0.0
      %1479 = vmatpush1.msra.mxu0 0.0
      %1480 = vmatprep.subr.mxu0 0.0
      %1481 = vmatpush1.msra.mxu0 0.0
      %1482 = vmatprep.subr.mxu0 0.0
      %1483 = vmatpush1.msra.mxu0 0.0
      %1484 = vmatprep.subr.mxu0 0.0
      %1485 = vmatpush1.msra.mxu0 0.0
      %1486 = vmatprep.subr.mxu0 0.0
      %1487 = vmatpush1.msra.mxu0 0.0
      %1488 = vmatprep.subr.mxu0 0.0
      %1489 = vmatpush1.msra.mxu0 0.0
      %1490 = vmatprep.subr.mxu0 0.0
      %1491 = vmatpush1.msra.mxu0 0.0
      %1492 = vmatprep.mubr.f32.mxu0 0.0
      %1493 = vmatmul.mubr.f32.gmra.mrb[0].mxu0 %v969
      %v1494 = vpop.f32.mrb[0].mxu0
      %v1495 = vadd.f32 0.0, %v1494
      %v1496 = vpop.f32.mrb[0].mxu0
      %1497 = vmatprep.mubr.f32.mxu0 0.0
      %1498 = vmatmul.mubr.f32.gmra.mrb[0].mxu0 %v972
      %v1499 = vpop.f32.mrb[0].mxu0
      %v1500 = vadd.f32 0.0, %v1499
      %v1501 = vpop.f32.mrb[0].mxu0
      %1502 = vmatprep.mubr.f32.mxu0 0.0
      %1503 = vmatmul.mubr.f32.gmra.mrb[0].mxu0 %v975
      %v1504 = vpop.f32.mrb[0].mxu0
      %v1505 = vadd.f32 0.0, %v1504
      %v1506 = vpop.f32.mrb[0].mxu0
      %1507 = vmatprep.mubr.f32.mxu0 0.0
      %1508 = vmatmul.mubr.f32.gmra.mrb[0].mxu0 %v978
      %v1509 = vpop.f32.mrb[0].mxu0
      %v1510 = vadd.f32 0.0, %v1509
      %v1511 = vpop.f32.mrb[0].mxu0
      %1512 = vmatprep.mubr.f32.mxu0 0.0
      %1513 = vmatmul.mubr.f32.gmra.mrb[0].mxu0 %v981
      %v1514 = vpop.f32.mrb[0].mxu0
      %v1515 = vadd.f32 0.0, %v1514
      %v1516 = vpop.f32.mrb[0].mxu0
      %1517 = vmatprep.mubr.f32.mxu0 0.0
      %1518 = vmatmul.mubr.f32.gmra.mrb[0].mxu0 %v984
      %v1519 = vpop.f32.mrb[0].mxu0
      %v1520 = vadd.f32 0.0, %v1519
      %v1521 = vpop.f32.mrb[0].mxu0
      %1522 = vmatprep.mubr.f32.mxu0 0.0
      %1523 = vmatmul.mubr.f32.gmra.mrb[0].mxu0 %v987
      %v1524 = vpop.f32.mrb[0].mxu0
      %v1525 = vadd.f32 0.0, %v1524
      %v1526 = vpop.f32.mrb[0].mxu0
      %1527 = vmatprep.mubr.f32.mxu0 0.0
      %1528 = vmatmul.mubr.f32.gmra.mrb[0].mxu0 %v990
      %v1529 = vpop.f32.mrb[0].mxu0
      %v1530 = vadd.f32 0.0, %v1529
      %v1531 = vpop.f32.mrb[0].mxu0
      %1532 = vdwg.mxu0
      %1533 = vmatprep.subr.mxu0 0.0
      %1534 = vmatpush1.msra.mxu0 %v1416
      %1535 = vmatprep.subr.mxu0 0.0
      %1536 = vmatpush1.msra.mxu0 %v1417
      %1537 = vmatprep.subr.mxu0 0.0
      %1538 = vmatpush1.msra.mxu0 %v1418
      %1539 = vmatprep.subr.mxu0 0.0
      %1540 = vmatpush1.msra.mxu0 %v1419
      %1541 = vmatprep.subr.mxu0 0.0
      %1542 = vmatpush1.msra.mxu0 0.0
      %1543 = vmatprep.subr.mxu0 0.0
      %1544 = vmatpush1.msra.mxu0 0.0
      %1545 = vmatprep.subr.mxu0 0.0
      %1546 = vmatpush1.msra.mxu0 0.0
      %1547 = vmatprep.subr.mxu0 0.0
      %1548 = vmatpush1.msra.mxu0 0.0
      %1549 = vmatprep.subr.mxu0 0.0
      %1550 = vmatpush1.msra.mxu0 0.0
      %1551 = vmatprep.subr.mxu0 0.0
      %1552 = vmatpush1.msra.mxu0 0.0
      %1553 = vmatprep.subr.mxu0 0.0
      %1554 = vmatpush1.msra.mxu0 0.0
      %1555 = vmatprep.subr.mxu0 0.0
      %1556 = vmatpush1.msra.mxu0 0.0
      %1557 = vmatprep.subr.mxu0 0.0
      %1558 = vmatpush1.msra.mxu0 0.0
      %1559 = vmatprep.subr.mxu0 0.0
      %1560 = vmatpush1.msra.mxu0 0.0
      %1561 = vmatprep.subr.mxu0 0.0
      %1562 = vmatpush1.msra.mxu0 0.0
      %1563 = vmatprep.subr.mxu0 0.0
      %1564 = vmatpush1.msra.mxu0 0.0
      %1565 = vmatprep.subr.mxu0 0.0
      %1566 = vmatpush1.msra.mxu0 0.0
      %1567 = vmatprep.subr.mxu0 0.0
      %1568 = vmatpush1.msra.mxu0 0.0
      %1569 = vmatprep.subr.mxu0 0.0
      %1570 = vmatpush1.msra.mxu0 0.0
      %1571 = vmatprep.subr.mxu0 0.0
      %1572 = vmatpush1.msra.mxu0 0.0
      %1573 = vmatprep.subr.mxu0 0.0
      %1574 = vmatpush1.msra.mxu0 0.0
      %1575 = vmatprep.subr.mxu0 0.0
      %1576 = vmatpush1.msra.mxu0 0.0
      %1577 = vmatprep.subr.mxu0 0.0
      %1578 = vmatpush1.msra.mxu0 0.0
      %1579 = vmatprep.subr.mxu0 0.0
      %1580 = vmatpush1.msra.mxu0 0.0
      %1581 = vmatprep.subr.mxu0 0.0
      %1582 = vmatpush1.msra.mxu0 0.0
      %1583 = vmatprep.subr.mxu0 0.0
      %1584 = vmatpush1.msra.mxu0 0.0
      %1585 = vmatprep.subr.mxu0 0.0
      %1586 = vmatpush1.msra.mxu0 0.0
      %1587 = vmatprep.subr.mxu0 0.0
      %1588 = vmatpush1.msra.mxu0 0.0
      %1589 = vmatprep.subr.mxu0 0.0
      %1590 = vmatpush1.msra.mxu0 0.0
      %1591 = vmatprep.subr.mxu0 0.0
      %1592 = vmatpush1.msra.mxu0 0.0
      %1593 = vmatprep.subr.mxu0 0.0
      %1594 = vmatpush1.msra.mxu0 0.0
      %1595 = vmatprep.subr.mxu0 0.0
      %1596 = vmatpush1.msra.mxu0 0.0
      %1597 = vmatprep.mubr.f32.mxu0 0.0
      %1598 = vmatmul.mubr.f32.gmra.mrb[0].mxu0 %v969
      %v1599 = vpop.f32.mrb[0].mxu0
      %v1600 = vadd.f32 0.0, %v1599
      %v1601 = vpop.f32.mrb[0].mxu0
      %1602 = vmatprep.mubr.f32.mxu0 0.0
      %1603 = vmatmul.mubr.f32.gmra.mrb[0].mxu0 %v972
      %v1604 = vpop.f32.mrb[0].mxu0
      %v1605 = vadd.f32 0.0, %v1604
      %v1606 = vpop.f32.mrb[0].mxu0
      %1607 = vmatprep.mubr.f32.mxu0 0.0
      %1608 = vmatmul.mubr.f32.gmra.mrb[0].mxu0 %v975
      %v1609 = vpop.f32.mrb[0].mxu0
      %v1610 = vadd.f32 0.0, %v1609
      %v1611 = vpop.f32.mrb[0].mxu0
      %1612 = vmatprep.mubr.f32.mxu0 0.0
      %1613 = vmatmul.mubr.f32.gmra.mrb[0].mxu0 %v978
      %v1614 = vpop.f32.mrb[0].mxu0
      %v1615 = vadd.f32 0.0, %v1614
      %v1616 = vpop.f32.mrb[0].mxu0
      %1617 = vmatprep.mubr.f32.mxu0 0.0
      %1618 = vmatmul.mubr.f32.gmra.mrb[0].mxu0 %v981
      %v1619 = vpop.f32.mrb[0].mxu0
      %v1620 = vadd.f32 0.0, %v1619
      %v1621 = vpop.f32.mrb[0].mxu0
      %1622 = vmatprep.mubr.f32.mxu0 0.0
      %1623 = vmatmul.mubr.f32.gmra.mrb[0].mxu0 %v984
      %v1624 = vpop.f32.mrb[0].mxu0
      %v1625 = vadd.f32 0.0, %v1624
      %v1626 = vpop.f32.mrb[0].mxu0
      %1627 = vmatprep.mubr.f32.mxu0 0.0
      %1628 = vmatmul.mubr.f32.gmra.mrb[0].mxu0 %v987
      %v1629 = vpop.f32.mrb[0].mxu0
      %v1630 = vadd.f32 0.0, %v1629
      %v1631 = vpop.f32.mrb[0].mxu0
      %1632 = vmatprep.mubr.f32.mxu0 0.0
      %1633 = vmatmul.mubr.f32.gmra.mrb[0].mxu0 %v990
      %v1634 = vpop.f32.mrb[0].mxu0
      %v1635 = vadd.f32 0.0, %v1634
      %v1636 = vpop.f32.mrb[0].mxu0
      %1637 = vdwg.mxu0
      %1638 = vmatprep.subr.mxu0 0.0
      %1639 = vmatpush1.msra.mxu0 %v1420
      %1640 = vmatprep.subr.mxu0 0.0
      %1641 = vmatpush1.msra.mxu0 %v1421
      %1642 = vmatprep.subr.mxu0 0.0
      %1643 = vmatpush1.msra.mxu0 %v1422
      %1644 = vmatprep.subr.mxu0 0.0
      %1645 = vmatpush1.msra.mxu0 %v1423
      %1646 = vmatprep.subr.mxu0 0.0
      %1647 = vmatpush1.msra.mxu0 0.0
      %1648 = vmatprep.subr.mxu0 0.0
      %1649 = vmatpush1.msra.mxu0 0.0
      %1650 = vmatprep.subr.mxu0 0.0
      %1651 = vmatpush1.msra.mxu0 0.0
      %1652 = vmatprep.subr.mxu0 0.0
      %1653 = vmatpush1.msra.mxu0 0.0
      %1654 = vmatprep.subr.mxu0 0.0
      %1655 = vmatpush1.msra.mxu0 0.0
      %1656 = vmatprep.subr.mxu0 0.0
      %1657 = vmatpush1.msra.mxu0 0.0
      %1658 = vmatprep.subr.mxu0 0.0
      %1659 = vmatpush1.msra.mxu0 0.0
      %1660 = vmatprep.subr.mxu0 0.0
      %1661 = vmatpush1.msra.mxu0 0.0
      %1662 = vmatprep.subr.mxu0 0.0
      %1663 = vmatpush1.msra.mxu0 0.0
      %1664 = vmatprep.subr.mxu0 0.0
      %1665 = vmatpush1.msra.mxu0 0.0
      %1666 = vmatprep.subr.mxu0 0.0
      %1667 = vmatpush1.msra.mxu0 0.0
      %1668 = vmatprep.subr.mxu0 0.0
      %1669 = vmatpush1.msra.mxu0 0.0
      %1670 = vmatprep.subr.mxu0 0.0
      %1671 = vmatpush1.msra.mxu0 0.0
      %1672 = vmatprep.subr.mxu0 0.0
      %1673 = vmatpush1.msra.mxu0 0.0
      %1674 = vmatprep.subr.mxu0 0.0
      %1675 = vmatpush1.msra.mxu0 0.0
      %1676 = vmatprep.subr.mxu0 0.0
      %1677 = vmatpush1.msra.mxu0 0.0
      %1678 = vmatprep.subr.mxu0 0.0
      %1679 = vmatpush1.msra.mxu0 0.0
      %1680 = vmatprep.subr.mxu0 0.0
      %1681 = vmatpush1.msra.mxu0 0.0
      %1682 = vmatprep.subr.mxu0 0.0
      %1683 = vmatpush1.msra.mxu0 0.0
      %1684 = vmatprep.subr.mxu0 0.0
      %1685 = vmatpush1.msra.mxu0 0.0
      %1686 = vmatprep.subr.mxu0 0.0
      %1687 = vmatpush1.msra.mxu0 0.0
      %1688 = vmatprep.subr.mxu0 0.0
      %1689 = vmatpush1.msra.mxu0 0.0
      %1690 = vmatprep.subr.mxu0 0.0
      %1691 = vmatpush1.msra.mxu0 0.0
      %1692 = vmatprep.subr.mxu0 0.0
      %1693 = vmatpush1.msra.mxu0 0.0
      %1694 = vmatprep.subr.mxu0 0.0
      %1695 = vmatpush1.msra.mxu0 0.0
      %1696 = vmatprep.subr.mxu0 0.0
      %1697 = vmatpush1.msra.mxu0 0.0
      %1698 = vmatprep.subr.mxu0 0.0
      %1699 = vmatpush1.msra.mxu0 0.0
      %1700 = vmatprep.subr.mxu0 0.0
      %1701 = vmatpush1.msra.mxu0 0.0
      %1702 = vmatprep.mubr.f32.mxu0 0.0
      %1703 = vmatmul.mubr.f32.gmra.mrb[0].mxu0 %v969
      %v1704 = vpop.f32.mrb[0].mxu0
      %v1705 = vadd.f32 0.0, %v1704
      %v1706 = vpop.f32.mrb[0].mxu0
      %1707 = vmatprep.mubr.f32.mxu0 0.0
      %1708 = vmatmul.mubr.f32.gmra.mrb[0].mxu0 %v972
      %v1709 = vpop.f32.mrb[0].mxu0
      %v1710 = vadd.f32 0.0, %v1709
      %v1711 = vpop.f32.mrb[0].mxu0
      %1712 = vmatprep.mubr.f32.mxu0 0.0
      %1713 = vmatmul.mubr.f32.gmra.mrb[0].mxu0 %v975
      %v1714 = vpop.f32.mrb[0].mxu0
      %v1715 = vadd.f32 0.0, %v1714
      %v1716 = vpop.f32.mrb[0].mxu0
      %1717 = vmatprep.mubr.f32.mxu0 0.0
      %1718 = vmatmul.mubr.f32.gmra.mrb[0].mxu0 %v978
      %v1719 = vpop.f32.mrb[0].mxu0
      %v1720 = vadd.f32 0.0, %v1719
      %v1721 = vpop.f32.mrb[0].mxu0
      %1722 = vmatprep.mubr.f32.mxu0 0.0
      %1723 = vmatmul.mubr.f32.gmra.mrb[0].mxu0 %v981
      %v1724 = vpop.f32.mrb[0].mxu0
      %v1725 = vadd.f32 0.0, %v1724
      %v1726 = vpop.f32.mrb[0].mxu0
      %1727 = vmatprep.mubr.f32.mxu0 0.0
      %1728 = vmatmul.mubr.f32.gmra.mrb[0].mxu0 %v984
      %v1729 = vpop.f32.mrb[0].mxu0
      %v1730 = vadd.f32 0.0, %v1729
      %v1731 = vpop.f32.mrb[0].mxu0
      %1732 = vmatprep.mubr.f32.mxu0 0.0
      %1733 = vmatmul.mubr.f32.gmra.mrb[0].mxu0 %v987
      %v1734 = vpop.f32.mrb[0].mxu0
      %v1735 = vadd.f32 0.0, %v1734
      %v1736 = vpop.f32.mrb[0].mxu0
      %1737 = vmatprep.mubr.f32.mxu0 0.0
      %1738 = vmatmul.mubr.f32.gmra.mrb[0].mxu0 %v990
      %v1739 = vpop.f32.mrb[0].mxu0
      %v1740 = vadd.f32 0.0, %v1739
      %v1741 = vpop.f32.mrb[0].mxu0
      %1742 = vdwg.mxu0
      %1743 = vmatprep.subr.mxu0 0.0
      %1744 = vmatpush1.msra.mxu0 %v1424
      %1745 = vmatprep.subr.mxu0 0.0
      %1746 = vmatpush1.msra.mxu0 %v1425
      %1747 = vmatprep.subr.mxu0 0.0
      %1748 = vmatpush1.msra.mxu0 %v1426
      %1749 = vmatprep.subr.mxu0 0.0
      %1750 = vmatpush1.msra.mxu0 %v1427
      %1751 = vmatprep.subr.mxu0 0.0
      %1752 = vmatpush1.msra.mxu0 0.0
      %1753 = vmatprep.subr.mxu0 0.0
      %1754 = vmatpush1.msra.mxu0 0.0
      %1755 = vmatprep.subr.mxu0 0.0
      %1756 = vmatpush1.msra.mxu0 0.0
      %1757 = vmatprep.subr.mxu0 0.0
      %1758 = vmatpush1.msra.mxu0 0.0
      %1759 = vmatprep.subr.mxu0 0.0
      %1760 = vmatpush1.msra.mxu0 0.0
      %1761 = vmatprep.subr.mxu0 0.0
      %1762 = vmatpush1.msra.mxu0 0.0
      %1763 = vmatprep.subr.mxu0 0.0
      %1764 = vmatpush1.msra.mxu0 0.0
      %1765 = vmatprep.subr.mxu0 0.0
      %1766 = vmatpush1.msra.mxu0 0.0
      %1767 = vmatprep.subr.mxu0 0.0
      %1768 = vmatpush1.msra.mxu0 0.0
      %1769 = vmatprep.subr.mxu0 0.0
      %1770 = vmatpush1.msra.mxu0 0.0
      %1771 = vmatprep.subr.mxu0 0.0
      %1772 = vmatpush1.msra.mxu0 0.0
      %1773 = vmatprep.subr.mxu0 0.0
      %1774 = vmatpush1.msra.mxu0 0.0
      %1775 = vmatprep.subr.mxu0 0.0
      %1776 = vmatpush1.msra.mxu0 0.0
      %1777 = vmatprep.subr.mxu0 0.0
      %1778 = vmatpush1.msra.mxu0 0.0
      %1779 = vmatprep.subr.mxu0 0.0
      %1780 = vmatpush1.msra.mxu0 0.0
      %1781 = vmatprep.subr.mxu0 0.0
      %1782 = vmatpush1.msra.mxu0 0.0
      %1783 = vmatprep.subr.mxu0 0.0
      %1784 = vmatpush1.msra.mxu0 0.0
      %1785 = vmatprep.subr.mxu0 0.0
      %1786 = vmatpush1.msra.mxu0 0.0
      %1787 = vmatprep.subr.mxu0 0.0
      %1788 = vmatpush1.msra.mxu0 0.0
      %1789 = vmatprep.subr.mxu0 0.0
      %1790 = vmatpush1.msra.mxu0 0.0
      %1791 = vmatprep.subr.mxu0 0.0
      %1792 = vmatpush1.msra.mxu0 0.0
      %1793 = vmatprep.subr.mxu0 0.0
      %1794 = vmatpush1.msra.mxu0 0.0
      %1795 = vmatprep.subr.mxu0 0.0
      %1796 = vmatpush1.msra.mxu0 0.0
      %1797 = vmatprep.subr.mxu0 0.0
      %1798 = vmatpush1.msra.mxu0 0.0
      %1799 = vmatprep.subr.mxu0 0.0
      %1800 = vmatpush1.msra.mxu0 0.0
      %1801 = vmatprep.subr.mxu0 0.0
      %1802 = vmatpush1.msra.mxu0 0.0
      %1803 = vmatprep.subr.mxu0 0.0
      %1804 = vmatpush1.msra.mxu0 0.0
      %1805 = vmatprep.subr.mxu0 0.0
      %1806 = vmatpush1.msra.mxu0 0.0
      %1807 = vmatprep.mubr.f32.mxu0 0.0
      %1808 = vmatmul.mubr.f32.gmra.mrb[0].mxu0 %v969
      %v1809 = vpop.f32.mrb[0].mxu0
      %v1810 = vadd.f32 0.0, %v1809
      %v1811 = vpop.f32.mrb[0].mxu0
      %1812 = vmatprep.mubr.f32.mxu0 0.0
      %1813 = vmatmul.mubr.f32.gmra.mrb[0].mxu0 %v972
      %v1814 = vpop.f32.mrb[0].mxu0
      %v1815 = vadd.f32 0.0, %v1814
      %v1816 = vpop.f32.mrb[0].mxu0
      %1817 = vmatprep.mubr.f32.mxu0 0.0
      %1818 = vmatmul.mubr.f32.gmra.mrb[0].mxu0 %v975
      %v1819 = vpop.f32.mrb[0].mxu0
      %v1820 = vadd.f32 0.0, %v1819
      %v1821 = vpop.f32.mrb[0].mxu0
      %1822 = vmatprep.mubr.f32.mxu0 0.0
      %1823 = vmatmul.mubr.f32.gmra.mrb[0].mxu0 %v978
      %v1824 = vpop.f32.mrb[0].mxu0
      %v1825 = vadd.f32 0.0, %v1824
      %v1826 = vpop.f32.mrb[0].mxu0
      %1827 = vmatprep.mubr.f32.mxu0 0.0
      %1828 = vmatmul.mubr.f32.gmra.mrb[0].mxu0 %v981
      %v1829 = vpop.f32.mrb[0].mxu0
      %v1830 = vadd.f32 0.0, %v1829
      %v1831 = vpop.f32.mrb[0].mxu0
      %1832 = vmatprep.mubr.f32.mxu0 0.0
      %1833 = vmatmul.mubr.f32.gmra.mrb[0].mxu0 %v984
      %v1834 = vpop.f32.mrb[0].mxu0
      %v1835 = vadd.f32 0.0, %v1834
      %v1836 = vpop.f32.mrb[0].mxu0
      %1837 = vmatprep.mubr.f32.mxu0 0.0
      %1838 = vmatmul.mubr.f32.gmra.mrb[0].mxu0 %v987
      %v1839 = vpop.f32.mrb[0].mxu0
      %v1840 = vadd.f32 0.0, %v1839
      %v1841 = vpop.f32.mrb[0].mxu0
      %1842 = vmatprep.mubr.f32.mxu0 0.0
      %1843 = vmatmul.mubr.f32.gmra.mrb[0].mxu0 %v990
      %v1844 = vpop.f32.mrb[0].mxu0
      %v1845 = vadd.f32 0.0, %v1844
      %v1846 = vpop.f32.mrb[0].mxu0
      %1847 = vdwg.mxu0
      %v1848 = vld [vmem:[%s6] sm:$0x3]
      %v1849 = vld [vmem:[%s6 + $0x2] sm:$0x3]
      %v1850 = vld [vmem:[%s6 + $0x4] sm:$0x3]
      %v1851 = vld [vmem:[%s6 + $0x6] sm:$0x3]
      %vm1852 = vcmask 15360
      %v1854 = vsel %vm1852, %v483, 0
      %v1857 = vsel %vm1852, %v484, 0
      %v1860 = vsel %vm1852, %v485, 0
      %v1863 = vsel %vm1852, %v486, 0
      %v1866 = vsel %vm1852, %v487, 0
      %v1869 = vsel %vm1852, %v488, 0
      %v1872 = vsel %vm1852, %v489, 0
      %v1875 = vsel %vm1852, %v490, 0
      %vm1877 = vcmask 1041408
      %v1879 = vsel %vm1877, %v1848, 0
      %1881 = vmatprep.subr.mxu0 0.0
      %1882 = vmatpush1.msra.mxu0 %v1879
      %1883 = vmatprep.subr.mxu0 0.0
      %1884 = vmatpush1.msra.mxu0 0.0
      %1885 = vmatprep.subr.mxu0 0.0
      %1886 = vmatpush1.msra.mxu0 0.0
      %1887 = vmatprep.subr.mxu0 0.0
      %1888 = vmatpush1.msra.mxu0 0.0
      %1889 = vmatprep.subr.mxu0 0.0
      %1890 = vmatpush1.msra.mxu0 0.0
      %1891 = vmatprep.subr.mxu0 0.0
      %1892 = vmatpush1.msra.mxu0 0.0
      %1893 = vmatprep.subr.mxu0 0.0
      %1894 = vmatpush1.msra.mxu0 0.0
      %1895 = vmatprep.subr.mxu0 0.0
      %1896 = vmatpush1.msra.mxu0 0.0
      %1897 = vmatprep.subr.mxu0 0.0
      %1898 = vmatpush1.msra.mxu0 0.0
      %1899 = vmatprep.subr.mxu0 0.0
      %1900 = vmatpush1.msra.mxu0 0.0
      %1901 = vmatprep.subr.mxu0 0.0
      %1902 = vmatpush1.msra.mxu0 0.0
      %1903 = vmatprep.subr.mxu0 0.0
      %1904 = vmatpush1.msra.mxu0 0.0
      %1905 = vmatprep.subr.mxu0 0.0
      %1906 = vmatpush1.msra.mxu0 0.0
      %1907 = vmatprep.subr.mxu0 0.0
      %1908 = vmatpush1.msra.mxu0 0.0
      %1909 = vmatprep.subr.mxu0 0.0
      %1910 = vmatpush1.msra.mxu0 0.0
      %1911 = vmatprep.subr.mxu0 0.0
      %1912 = vmatpush1.msra.mxu0 0.0
      %1913 = vmatprep.subr.mxu0 0.0
      %1914 = vmatpush1.msra.mxu0 0.0
      %1915 = vmatprep.subr.mxu0 0.0
      %1916 = vmatpush1.msra.mxu0 0.0
      %1917 = vmatprep.subr.mxu0 0.0
      %1918 = vmatpush1.msra.mxu0 0.0
      %1919 = vmatprep.subr.mxu0 0.0
      %1920 = vmatpush1.msra.mxu0 0.0
      %1921 = vmatprep.subr.mxu0 0.0
      %1922 = vmatpush1.msra.mxu0 0.0
      %1923 = vmatprep.subr.mxu0 0.0
      %1924 = vmatpush1.msra.mxu0 0.0
      %1925 = vmatprep.subr.mxu0 0.0
      %1926 = vmatpush1.msra.mxu0 0.0
      %1927 = vmatprep.subr.mxu0 0.0
      %1928 = vmatpush1.msra.mxu0 0.0
      %1929 = vmatprep.subr.mxu0 0.0
      %1930 = vmatpush1.msra.mxu0 0.0
      %1931 = vmatprep.subr.mxu0 0.0
      %1932 = vmatpush1.msra.mxu0 0.0
      %1933 = vmatprep.subr.mxu0 0.0
      %1934 = vmatpush1.msra.mxu0 0.0
      %1935 = vmatprep.subr.mxu0 0.0
      %1936 = vmatpush1.msra.mxu0 0.0
      %1937 = vmatprep.subr.mxu0 0.0
      %1938 = vmatpush1.msra.mxu0 0.0
      %1939 = vmatprep.subr.mxu0 0.0
      %1940 = vmatpush1.msra.mxu0 0.0
      %1941 = vmatprep.subr.mxu0 0.0
      %1942 = vmatpush1.msra.mxu0 0.0
      %1943 = vmatprep.subr.mxu0 0.0
      %1944 = vmatpush1.msra.mxu0 0.0
      %1945 = vmatprep.mubr.f32.mxu0 0.0
      %1946 = vmatmul.mubr.f32.gmra.mrb[0].mxu0 %v1854
      %v1947 = vpop.f32.mrb[0].mxu0
      %v1948 = vadd.f32 0.0, %v1947
      %v1949 = vpop.f32.mrb[0].mxu0
      %1950 = vmatprep.mubr.f32.mxu0 0.0
      %1951 = vmatmul.mubr.f32.gmra.mrb[0].mxu0 %v1857
      %v1952 = vpop.f32.mrb[0].mxu0
      %v1953 = vadd.f32 0.0, %v1952
      %v1954 = vpop.f32.mrb[0].mxu0
      %1955 = vmatprep.mubr.f32.mxu0 0.0
      %1956 = vmatmul.mubr.f32.gmra.mrb[0].mxu0 %v1860
      %v1957 = vpop.f32.mrb[0].mxu0
      %v1958 = vadd.f32 0.0, %v1957
      %v1959 = vpop.f32.mrb[0].mxu0
      %1960 = vmatprep.mubr.f32.mxu0 0.0
      %1961 = vmatmul.mubr.f32.gmra.mrb[0].mxu0 %v1863
      %v1962 = vpop.f32.mrb[0].mxu0
      %v1963 = vadd.f32 0.0, %v1962
      %v1964 = vpop.f32.mrb[0].mxu0
      %1965 = vmatprep.mubr.f32.mxu0 0.0
      %1966 = vmatmul.mubr.f32.gmra.mrb[0].mxu0 %v1866
      %v1967 = vpop.f32.mrb[0].mxu0
      %v1968 = vadd.f32 0.0, %v1967
      %v1969 = vpop.f32.mrb[0].mxu0
      %1970 = vmatprep.mubr.f32.mxu0 0.0
      %1971 = vmatmul.mubr.f32.gmra.mrb[0].mxu0 %v1869
      %v1972 = vpop.f32.mrb[0].mxu0
      %v1973 = vadd.f32 0.0, %v1972
      %v1974 = vpop.f32.mrb[0].mxu0
      %1975 = vmatprep.mubr.f32.mxu0 0.0
      %1976 = vmatmul.mubr.f32.gmra.mrb[0].mxu0 %v1872
      %v1977 = vpop.f32.mrb[0].mxu0
      %v1978 = vadd.f32 0.0, %v1977
      %v1979 = vpop.f32.mrb[0].mxu0
      %1980 = vmatprep.mubr.f32.mxu0 0.0
      %1981 = vmatmul.mubr.f32.gmra.mrb[0].mxu0 %v1875
      %v1982 = vpop.f32.mrb[0].mxu0
      %v1983 = vadd.f32 0.0, %v1982
      %v1984 = vpop.f32.mrb[0].mxu0
      %1985 = vdwg.mxu0
      %v1987 = vsel %vm1877, %v1849, 0
      %1989 = vmatprep.subr.mxu0 0.0
      %1990 = vmatpush1.msra.mxu0 %v1987
      %1991 = vmatprep.subr.mxu0 0.0
      %1992 = vmatpush1.msra.mxu0 0.0
      %1993 = vmatprep.subr.mxu0 0.0
      %1994 = vmatpush1.msra.mxu0 0.0
      %1995 = vmatprep.subr.mxu0 0.0
      %1996 = vmatpush1.msra.mxu0 0.0
      %1997 = vmatprep.subr.mxu0 0.0
      %1998 = vmatpush1.msra.mxu0 0.0
      %1999 = vmatprep.subr.mxu0 0.0
      %2000 = vmatpush1.msra.mxu0 0.0
      %2001 = vmatprep.subr.mxu0 0.0
      %2002 = vmatpush1.msra.mxu0 0.0
      %2003 = vmatprep.subr.mxu0 0.0
      %2004 = vmatpush1.msra.mxu0 0.0
      %2005 = vmatprep.subr.mxu0 0.0
      %2006 = vmatpush1.msra.mxu0 0.0
      %2007 = vmatprep.subr.mxu0 0.0
      %2008 = vmatpush1.msra.mxu0 0.0
      %2009 = vmatprep.subr.mxu0 0.0
      %2010 = vmatpush1.msra.mxu0 0.0
      %2011 = vmatprep.subr.mxu0 0.0
      %2012 = vmatpush1.msra.mxu0 0.0
      %2013 = vmatprep.subr.mxu0 0.0
      %2014 = vmatpush1.msra.mxu0 0.0
      %2015 = vmatprep.subr.mxu0 0.0
      %2016 = vmatpush1.msra.mxu0 0.0
      %2017 = vmatprep.subr.mxu0 0.0
      %2018 = vmatpush1.msra.mxu0 0.0
      %2019 = vmatprep.subr.mxu0 0.0
      %2020 = vmatpush1.msra.mxu0 0.0
      %2021 = vmatprep.subr.mxu0 0.0
      %2022 = vmatpush1.msra.mxu0 0.0
      %2023 = vmatprep.subr.mxu0 0.0
      %2024 = vmatpush1.msra.mxu0 0.0
      %2025 = vmatprep.subr.mxu0 0.0
      %2026 = vmatpush1.msra.mxu0 0.0
      %2027 = vmatprep.subr.mxu0 0.0
      %2028 = vmatpush1.msra.mxu0 0.0
      %2029 = vmatprep.subr.mxu0 0.0
      %2030 = vmatpush1.msra.mxu0 0.0
      %2031 = vmatprep.subr.mxu0 0.0
      %2032 = vmatpush1.msra.mxu0 0.0
      %2033 = vmatprep.subr.mxu0 0.0
      %2034 = vmatpush1.msra.mxu0 0.0
      %2035 = vmatprep.subr.mxu0 0.0
      %2036 = vmatpush1.msra.mxu0 0.0
      %2037 = vmatprep.subr.mxu0 0.0
      %2038 = vmatpush1.msra.mxu0 0.0
      %2039 = vmatprep.subr.mxu0 0.0
      %2040 = vmatpush1.msra.mxu0 0.0
      %2041 = vmatprep.subr.mxu0 0.0
      %2042 = vmatpush1.msra.mxu0 0.0
      %2043 = vmatprep.subr.mxu0 0.0
      %2044 = vmatpush1.msra.mxu0 0.0
      %2045 = vmatprep.subr.mxu0 0.0
      %2046 = vmatpush1.msra.mxu0 0.0
      %2047 = vmatprep.subr.mxu0 0.0
      %2048 = vmatpush1.msra.mxu0 0.0
      %2049 = vmatprep.subr.mxu0 0.0
      %2050 = vmatpush1.msra.mxu0 0.0
      %2051 = vmatprep.subr.mxu0 0.0
      %2052 = vmatpush1.msra.mxu0 0.0
      %2053 = vmatprep.mubr.f32.mxu0 0.0
      %2054 = vmatmul.mubr.f32.gmra.mrb[0].mxu0 %v1854
      %v2055 = vpop.f32.mrb[0].mxu0
      %v2056 = vadd.f32 0.0, %v2055
      %v2057 = vpop.f32.mrb[0].mxu0
      %2058 = vmatprep.mubr.f32.mxu0 0.0
      %2059 = vmatmul.mubr.f32.gmra.mrb[0].mxu0 %v1857
      %v2060 = vpop.f32.mrb[0].mxu0
      %v2061 = vadd.f32 0.0, %v2060
      %v2062 = vpop.f32.mrb[0].mxu0
      %2063 = vmatprep.mubr.f32.mxu0 0.0
      %2064 = vmatmul.mubr.f32.gmra.mrb[0].mxu0 %v1860
      %v2065 = vpop.f32.mrb[0].mxu0
      %v2066 = vadd.f32 0.0, %v2065
      %v2067 = vpop.f32.mrb[0].mxu0
      %2068 = vmatprep.mubr.f32.mxu0 0.0
      %2069 = vmatmul.mubr.f32.gmra.mrb[0].mxu0 %v1863
      %v2070 = vpop.f32.mrb[0].mxu0
      %v2071 = vadd.f32 0.0, %v2070
      %v2072 = vpop.f32.mrb[0].mxu0
      %2073 = vmatprep.mubr.f32.mxu0 0.0
      %2074 = vmatmul.mubr.f32.gmra.mrb[0].mxu0 %v1866
      %v2075 = vpop.f32.mrb[0].mxu0
      %v2076 = vadd.f32 0.0, %v2075
      %v2077 = vpop.f32.mrb[0].mxu0
      %2078 = vmatprep.mubr.f32.mxu0 0.0
      %2079 = vmatmul.mubr.f32.gmra.mrb[0].mxu0 %v1869
      %v2080 = vpop.f32.mrb[0].mxu0
      %v2081 = vadd.f32 0.0, %v2080
      %v2082 = vpop.f32.mrb[0].mxu0
      %2083 = vmatprep.mubr.f32.mxu0 0.0
      %2084 = vmatmul.mubr.f32.gmra.mrb[0].mxu0 %v1872
      %v2085 = vpop.f32.mrb[0].mxu0
      %v2086 = vadd.f32 0.0, %v2085
      %v2087 = vpop.f32.mrb[0].mxu0
      %2088 = vmatprep.mubr.f32.mxu0 0.0
      %2089 = vmatmul.mubr.f32.gmra.mrb[0].mxu0 %v1875
      %v2090 = vpop.f32.mrb[0].mxu0
      %v2091 = vadd.f32 0.0, %v2090
      %v2092 = vpop.f32.mrb[0].mxu0
      %2093 = vdwg.mxu0
      %v2095 = vsel %vm1877, %v1850, 0
      %2097 = vmatprep.subr.mxu0 0.0
      %2098 = vmatpush1.msra.mxu0 %v2095
      %2099 = vmatprep.subr.mxu0 0.0
      %2100 = vmatpush1.msra.mxu0 0.0
      %2101 = vmatprep.subr.mxu0 0.0
      %2102 = vmatpush1.msra.mxu0 0.0
      %2103 = vmatprep.subr.mxu0 0.0
      %2104 = vmatpush1.msra.mxu0 0.0
      %2105 = vmatprep.subr.mxu0 0.0
      %2106 = vmatpush1.msra.mxu0 0.0
      %2107 = vmatprep.subr.mxu0 0.0
      %2108 = vmatpush1.msra.mxu0 0.0
      %2109 = vmatprep.subr.mxu0 0.0
      %2110 = vmatpush1.msra.mxu0 0.0
      %2111 = vmatprep.subr.mxu0 0.0
      %2112 = vmatpush1.msra.mxu0 0.0
      %2113 = vmatprep.subr.mxu0 0.0
      %2114 = vmatpush1.msra.mxu0 0.0
      %2115 = vmatprep.subr.mxu0 0.0
      %2116 = vmatpush1.msra.mxu0 0.0
      %2117 = vmatprep.subr.mxu0 0.0
      %2118 = vmatpush1.msra.mxu0 0.0
      %2119 = vmatprep.subr.mxu0 0.0
      %2120 = vmatpush1.msra.mxu0 0.0
      %2121 = vmatprep.subr.mxu0 0.0
      %2122 = vmatpush1.msra.mxu0 0.0
      %2123 = vmatprep.subr.mxu0 0.0
      %2124 = vmatpush1.msra.mxu0 0.0
      %2125 = vmatprep.subr.mxu0 0.0
      %2126 = vmatpush1.msra.mxu0 0.0
      %2127 = vmatprep.subr.mxu0 0.0
      %2128 = vmatpush1.msra.mxu0 0.0
      %2129 = vmatprep.subr.mxu0 0.0
      %2130 = vmatpush1.msra.mxu0 0.0
      %2131 = vmatprep.subr.mxu0 0.0
      %2132 = vmatpush1.msra.mxu0 0.0
      %2133 = vmatprep.subr.mxu0 0.0
      %2134 = vmatpush1.msra.mxu0 0.0
      %2135 = vmatprep.subr.mxu0 0.0
      %2136 = vmatpush1.msra.mxu0 0.0
      %2137 = vmatprep.subr.mxu0 0.0
      %2138 = vmatpush1.msra.mxu0 0.0
      %2139 = vmatprep.subr.mxu0 0.0
      %2140 = vmatpush1.msra.mxu0 0.0
      %2141 = vmatprep.subr.mxu0 0.0
      %2142 = vmatpush1.msra.mxu0 0.0
      %2143 = vmatprep.subr.mxu0 0.0
      %2144 = vmatpush1.msra.mxu0 0.0
      %2145 = vmatprep.subr.mxu0 0.0
      %2146 = vmatpush1.msra.mxu0 0.0
      %2147 = vmatprep.subr.mxu0 0.0
      %2148 = vmatpush1.msra.mxu0 0.0
      %2149 = vmatprep.subr.mxu0 0.0
      %2150 = vmatpush1.msra.mxu0 0.0
      %2151 = vmatprep.subr.mxu0 0.0
      %2152 = vmatpush1.msra.mxu0 0.0
      %2153 = vmatprep.subr.mxu0 0.0
      %2154 = vmatpush1.msra.mxu0 0.0
      %2155 = vmatprep.subr.mxu0 0.0
      %2156 = vmatpush1.msra.mxu0 0.0
      %2157 = vmatprep.subr.mxu0 0.0
      %2158 = vmatpush1.msra.mxu0 0.0
      %2159 = vmatprep.subr.mxu0 0.0
      %2160 = vmatpush1.msra.mxu0 0.0
      %2161 = vmatprep.mubr.f32.mxu0 0.0
      %2162 = vmatmul.mubr.f32.gmra.mrb[0].mxu0 %v1854
      %v2163 = vpop.f32.mrb[0].mxu0
      %v2164 = vadd.f32 0.0, %v2163
      %v2165 = vpop.f32.mrb[0].mxu0
      %2166 = vmatprep.mubr.f32.mxu0 0.0
      %2167 = vmatmul.mubr.f32.gmra.mrb[0].mxu0 %v1857
      %v2168 = vpop.f32.mrb[0].mxu0
      %v2169 = vadd.f32 0.0, %v2168
      %v2170 = vpop.f32.mrb[0].mxu0
      %2171 = vmatprep.mubr.f32.mxu0 0.0
      %2172 = vmatmul.mubr.f32.gmra.mrb[0].mxu0 %v1860
      %v2173 = vpop.f32.mrb[0].mxu0
      %v2174 = vadd.f32 0.0, %v2173
      %v2175 = vpop.f32.mrb[0].mxu0
      %2176 = vmatprep.mubr.f32.mxu0 0.0
      %2177 = vmatmul.mubr.f32.gmra.mrb[0].mxu0 %v1863
      %v2178 = vpop.f32.mrb[0].mxu0
      %v2179 = vadd.f32 0.0, %v2178
      %v2180 = vpop.f32.mrb[0].mxu0
      %2181 = vmatprep.mubr.f32.mxu0 0.0
      %2182 = vmatmul.mubr.f32.gmra.mrb[0].mxu0 %v1866
      %v2183 = vpop.f32.mrb[0].mxu0
      %v2184 = vadd.f32 0.0, %v2183
      %v2185 = vpop.f32.mrb[0].mxu0
      %2186 = vmatprep.mubr.f32.mxu0 0.0
      %2187 = vmatmul.mubr.f32.gmra.mrb[0].mxu0 %v1869
      %v2188 = vpop.f32.mrb[0].mxu0
      %v2189 = vadd.f32 0.0, %v2188
      %v2190 = vpop.f32.mrb[0].mxu0
      %2191 = vmatprep.mubr.f32.mxu0 0.0
      %2192 = vmatmul.mubr.f32.gmra.mrb[0].mxu0 %v1872
      %v2193 = vpop.f32.mrb[0].mxu0
      %v2194 = vadd.f32 0.0, %v2193
      %v2195 = vpop.f32.mrb[0].mxu0
      %2196 = vmatprep.mubr.f32.mxu0 0.0
      %2197 = vmatmul.mubr.f32.gmra.mrb[0].mxu0 %v1875
      %v2198 = vpop.f32.mrb[0].mxu0
      %v2199 = vadd.f32 0.0, %v2198
      %v2200 = vpop.f32.mrb[0].mxu0
      %2201 = vdwg.mxu0
      %v2203 = vsel %vm1877, %v1851, 0
      %2205 = vmatprep.subr.mxu0 0.0
      %2206 = vmatpush1.msra.mxu0 %v2203
      %2207 = vmatprep.subr.mxu0 0.0
      %2208 = vmatpush1.msra.mxu0 0.0
      %2209 = vmatprep.subr.mxu0 0.0
      %2210 = vmatpush1.msra.mxu0 0.0
      %2211 = vmatprep.subr.mxu0 0.0
      %2212 = vmatpush1.msra.mxu0 0.0
      %2213 = vmatprep.subr.mxu0 0.0
      %2214 = vmatpush1.msra.mxu0 0.0
      %2215 = vmatprep.subr.mxu0 0.0
      %2216 = vmatpush1.msra.mxu0 0.0
      %2217 = vmatprep.subr.mxu0 0.0
      %2218 = vmatpush1.msra.mxu0 0.0
      %2219 = vmatprep.subr.mxu0 0.0
      %2220 = vmatpush1.msra.mxu0 0.0
      %2221 = vmatprep.subr.mxu0 0.0
      %2222 = vmatpush1.msra.mxu0 0.0
      %2223 = vmatprep.subr.mxu0 0.0
      %2224 = vmatpush1.msra.mxu0 0.0
      %2225 = vmatprep.subr.mxu0 0.0
      %2226 = vmatpush1.msra.mxu0 0.0
      %2227 = vmatprep.subr.mxu0 0.0
      %2228 = vmatpush1.msra.mxu0 0.0
      %2229 = vmatprep.subr.mxu0 0.0
      %2230 = vmatpush1.msra.mxu0 0.0
      %2231 = vmatprep.subr.mxu0 0.0
      %2232 = vmatpush1.msra.mxu0 0.0
      %2233 = vmatprep.subr.mxu0 0.0
      %2234 = vmatpush1.msra.mxu0 0.0
      %2235 = vmatprep.subr.mxu0 0.0
      %2236 = vmatpush1.msra.mxu0 0.0
      %2237 = vmatprep.subr.mxu0 0.0
      %2238 = vmatpush1.msra.mxu0 0.0
      %2239 = vmatprep.subr.mxu0 0.0
      %2240 = vmatpush1.msra.mxu0 0.0
      %2241 = vmatprep.subr.mxu0 0.0
      %2242 = vmatpush1.msra.mxu0 0.0
      %2243 = vmatprep.subr.mxu0 0.0
      %2244 = vmatpush1.msra.mxu0 0.0
      %2245 = vmatprep.subr.mxu0 0.0
      %2246 = vmatpush1.msra.mxu0 0.0
      %2247 = vmatprep.subr.mxu0 0.0
      %2248 = vmatpush1.msra.mxu0 0.0
      %2249 = vmatprep.subr.mxu0 0.0
      %2250 = vmatpush1.msra.mxu0 0.0
      %2251 = vmatprep.subr.mxu0 0.0
      %2252 = vmatpush1.msra.mxu0 0.0
      %2253 = vmatprep.subr.mxu0 0.0
      %2254 = vmatpush1.msra.mxu0 0.0
      %2255 = vmatprep.subr.mxu0 0.0
      %2256 = vmatpush1.msra.mxu0 0.0
      %2257 = vmatprep.subr.mxu0 0.0
      %2258 = vmatpush1.msra.mxu0 0.0
      %2259 = vmatprep.subr.mxu0 0.0
      %2260 = vmatpush1.msra.mxu0 0.0
      %2261 = vmatprep.subr.mxu0 0.0
      %2262 = vmatpush1.msra.mxu0 0.0
      %2263 = vmatprep.subr.mxu0 0.0
      %2264 = vmatpush1.msra.mxu0 0.0
      %2265 = vmatprep.subr.mxu0 0.0
      %2266 = vmatpush1.msra.mxu0 0.0
      %2267 = vmatprep.subr.mxu0 0.0
      %2268 = vmatpush1.msra.mxu0 0.0
      %2269 = vmatprep.mubr.f32.mxu0 0.0
      %2270 = vmatmul.mubr.f32.gmra.mrb[0].mxu0 %v1854
      %v2271 = vpop.f32.mrb[0].mxu0
      %v2272 = vadd.f32 0.0, %v2271
      %v2273 = vpop.f32.mrb[0].mxu0
      %2274 = vmatprep.mubr.f32.mxu0 0.0
      %2275 = vmatmul.mubr.f32.gmra.mrb[0].mxu0 %v1857
      %v2276 = vpop.f32.mrb[0].mxu0
      %v2277 = vadd.f32 0.0, %v2276
      %v2278 = vpop.f32.mrb[0].mxu0
      %2279 = vmatprep.mubr.f32.mxu0 0.0
      %2280 = vmatmul.mubr.f32.gmra.mrb[0].mxu0 %v1860
      %v2281 = vpop.f32.mrb[0].mxu0
      %v2282 = vadd.f32 0.0, %v2281
      %v2283 = vpop.f32.mrb[0].mxu0
      %2284 = vmatprep.mubr.f32.mxu0 0.0
      %2285 = vmatmul.mubr.f32.gmra.mrb[0].mxu0 %v1863
      %v2286 = vpop.f32.mrb[0].mxu0
      %v2287 = vadd.f32 0.0, %v2286
      %v2288 = vpop.f32.mrb[0].mxu0
      %2289 = vmatprep.mubr.f32.mxu0 0.0
      %2290 = vmatmul.mubr.f32.gmra.mrb[0].mxu0 %v1866
      %v2291 = vpop.f32.mrb[0].mxu0
      %v2292 = vadd.f32 0.0, %v2291
      %v2293 = vpop.f32.mrb[0].mxu0
      %2294 = vmatprep.mubr.f32.mxu0 0.0
      %2295 = vmatmul.mubr.f32.gmra.mrb[0].mxu0 %v1869
      %v2296 = vpop.f32.mrb[0].mxu0
      %v2297 = vadd.f32 0.0, %v2296
      %v2298 = vpop.f32.mrb[0].mxu0
      %2299 = vmatprep.mubr.f32.mxu0 0.0
      %2300 = vmatmul.mubr.f32.gmra.mrb[0].mxu0 %v1872
      %v2301 = vpop.f32.mrb[0].mxu0
      %v2302 = vadd.f32 0.0, %v2301
      %v2303 = vpop.f32.mrb[0].mxu0
      %2304 = vmatprep.mubr.f32.mxu0 0.0
      %2305 = vmatmul.mubr.f32.gmra.mrb[0].mxu0 %v1875
      %v2306 = vpop.f32.mrb[0].mxu0
      %v2307 = vadd.f32 0.0, %v2306
      %v2308 = vpop.f32.mrb[0].mxu0
      %2309 = vdwg.mxu0
      %vm2310 = vcmask 64512
      %v2312 = vsel %vm2310, %v599, 0
      %v2315 = vsel %vm2310, %v604, 0
      %v2318 = vsel %vm2310, %v609, 0
      %v2321 = vsel %vm2310, %v614, 0
      %v2324 = vsel %vm2310, %v619, 0
      %v2327 = vsel %vm2310, %v624, 0
      %v2330 = vsel %vm2310, %v629, 0
      %v2333 = vsel %vm2310, %v634, 0
      %v2336 = vsel %vm2310, %v1059, 0
      %v2339 = vsel %vm2310, %v1064, 0
      %v2342 = vsel %vm2310, %v1069, 0
      %v2345 = vsel %vm2310, %v1074, 0
      %v2348 = vsel %vm2310, %v1079, 0
      %v2351 = vsel %vm2310, %v1084, 0
      %v2354 = vsel %vm2310, %v1089, 0
      %v2357 = vsel %vm2310, %v1094, 0
      %2359 = vmatprep.subr.mxu0 0.0
      %2360 = vmatpush1.xpose.msra.mxu0 %v2336
      %2361 = vmatprep.subr.mxu0 0.0
      %2362 = vmatpush1.xpose.msra.mxu0 %v2339
      %2363 = vmatprep.subr.mxu0 0.0
      %2364 = vmatpush1.xpose.msra.mxu0 %v2342
      %2365 = vmatprep.subr.mxu0 0.0
      %2366 = vmatpush1.xpose.msra.mxu0 %v2345
      %2367 = vmatprep.subr.mxu0 0.0
      %2368 = vmatpush1.xpose.msra.mxu0 %v2348
      %2369 = vmatprep.subr.mxu0 0.0
      %2370 = vmatpush1.xpose.msra.mxu0 %v2351
      %2371 = vmatprep.subr.mxu0 0.0
      %2372 = vmatpush1.xpose.msra.mxu0 %v2354
      %2373 = vmatprep.subr.mxu0 0.0
      %2374 = vmatpush1.xpose.msra.mxu0 %v2357
      %2375 = vmatprep.subr.mxu0 0.0
      %2376 = vmatpush1.xpose.msra.mxu0 0.0
      %2377 = vmatprep.subr.mxu0 0.0
      %2378 = vmatpush1.xpose.msra.mxu0 0.0
      %2379 = vmatprep.subr.mxu0 0.0
      %2380 = vmatpush1.xpose.msra.mxu0 0.0
      %2381 = vmatprep.subr.mxu0 0.0
      %2382 = vmatpush1.xpose.msra.mxu0 0.0
      %2383 = vmatprep.subr.mxu0 0.0
      %2384 = vmatpush1.xpose.msra.mxu0 0.0
      %2385 = vmatprep.subr.mxu0 0.0
      %2386 = vmatpush1.xpose.msra.mxu0 0.0
      %2387 = vmatprep.subr.mxu0 0.0
      %2388 = vmatpush1.xpose.msra.mxu0 0.0
      %2389 = vmatprep.subr.mxu0 0.0
      %2390 = vmatpush1.xpose.msra.mxu0 0.0
      %2391 = vmatprep.subr.mxu0 0.0
      %2392 = vmatpush1.xpose.msra.mxu0 0.0
      %2393 = vmatprep.subr.mxu0 0.0
      %2394 = vmatpush1.xpose.msra.mxu0 0.0
      %2395 = vmatprep.subr.mxu0 0.0
      %2396 = vmatpush1.xpose.msra.mxu0 0.0
      %2397 = vmatprep.subr.mxu0 0.0
      %2398 = vmatpush1.xpose.msra.mxu0 0.0
      %2399 = vmatprep.subr.mxu0 0.0
      %2400 = vmatpush1.xpose.msra.mxu0 0.0
      %2401 = vmatprep.subr.mxu0 0.0
      %2402 = vmatpush1.xpose.msra.mxu0 0.0
      %2403 = vmatprep.subr.mxu0 0.0
      %2404 = vmatpush1.xpose.msra.mxu0 0.0
      %2405 = vmatprep.subr.mxu0 0.0
      %2406 = vmatpush1.xpose.msra.mxu0 0.0
      %2407 = vmatprep.subr.mxu0 0.0
      %2408 = vmatpush1.xpose.msra.mxu0 0.0
      %2409 = vmatprep.subr.mxu0 0.0
      %2410 = vmatpush1.xpose.msra.mxu0 0.0
      %2411 = vmatprep.subr.mxu0 0.0
      %2412 = vmatpush1.xpose.msra.mxu0 0.0
      %2413 = vmatprep.subr.mxu0 0.0
      %2414 = vmatpush1.xpose.msra.mxu0 0.0
      %2415 = vmatprep.subr.mxu0 0.0
      %2416 = vmatpush1.xpose.msra.mxu0 0.0
      %2417 = vmatprep.subr.mxu0 0.0
      %2418 = vmatpush1.xpose.msra.mxu0 0.0
      %2419 = vmatprep.subr.mxu0 0.0
      %2420 = vmatpush1.xpose.msra.mxu0 0.0
      %2421 = vmatprep.subr.mxu0 0.0
      %2422 = vmatpush1.xpose.msra.mxu0 0.0
      %2423 = vmatprep.mubr.f32.mxu0 0.0
      %2424 = vmatmul.mubr.f32.gmra.mrb[0].mxu0 %v2312
      %v2425 = vpop.f32.mrb[0].mxu0
      %v2426 = vadd.f32 0.0, %v2425
      %v2427 = vpop.f32.mrb[0].mxu0
      %2428 = vmatprep.mubr.f32.mxu0 0.0
      %2429 = vmatmul.mubr.f32.gmra.mrb[0].mxu0 %v2315
      %v2430 = vpop.f32.mrb[0].mxu0
      %v2431 = vadd.f32 0.0, %v2430
      %v2432 = vpop.f32.mrb[0].mxu0
      %2433 = vmatprep.mubr.f32.mxu0 0.0
      %2434 = vmatmul.mubr.f32.gmra.mrb[0].mxu0 %v2318
      %v2435 = vpop.f32.mrb[0].mxu0
      %v2436 = vadd.f32 0.0, %v2435
      %v2437 = vpop.f32.mrb[0].mxu0
      %2438 = vmatprep.mubr.f32.mxu0 0.0
      %2439 = vmatmul.mubr.f32.gmra.mrb[0].mxu0 %v2321
      %v2440 = vpop.f32.mrb[0].mxu0
      %v2441 = vadd.f32 0.0, %v2440
      %v2442 = vpop.f32.mrb[0].mxu0
      %2443 = vmatprep.mubr.f32.mxu0 0.0
      %2444 = vmatmul.mubr.f32.gmra.mrb[0].mxu0 %v2324
      %v2445 = vpop.f32.mrb[0].mxu0
      %v2446 = vadd.f32 0.0, %v2445
      %v2447 = vpop.f32.mrb[0].mxu0
      %2448 = vmatprep.mubr.f32.mxu0 0.0
      %2449 = vmatmul.mubr.f32.gmra.mrb[0].mxu0 %v2327
      %v2450 = vpop.f32.mrb[0].mxu0
      %v2451 = vadd.f32 0.0, %v2450
      %v2452 = vpop.f32.mrb[0].mxu0
      %2453 = vmatprep.mubr.f32.mxu0 0.0
      %2454 = vmatmul.mubr.f32.gmra.mrb[0].mxu0 %v2330
      %v2455 = vpop.f32.mrb[0].mxu0
      %v2456 = vadd.f32 0.0, %v2455
      %v2457 = vpop.f32.mrb[0].mxu0
      %2458 = vmatprep.mubr.f32.mxu0 0.0
      %2459 = vmatmul.mubr.f32.gmra.mrb[0].mxu0 %v2333
      %v2460 = vpop.f32.mrb[0].mxu0
      %v2461 = vadd.f32 0.0, %v2460
      %v2462 = vpop.f32.mrb[0].mxu0
      %2463 = vdwg.mxu0
      %v2465 = vsel %vm2310, %v704, 0
      %v2468 = vsel %vm2310, %v709, 0
      %v2471 = vsel %vm2310, %v714, 0
      %v2474 = vsel %vm2310, %v719, 0
      %v2477 = vsel %vm2310, %v724, 0
      %v2480 = vsel %vm2310, %v729, 0
      %v2483 = vsel %vm2310, %v734, 0
      %v2486 = vsel %vm2310, %v739, 0
      %v2489 = vsel %vm2310, %v1164, 0
      %v2492 = vsel %vm2310, %v1169, 0
      %v2495 = vsel %vm2310, %v1174, 0
      %v2498 = vsel %vm2310, %v1179, 0
      %v2501 = vsel %vm2310, %v1184, 0
      %v2504 = vsel %vm2310, %v1189, 0
      %v2507 = vsel %vm2310, %v1194, 0
      %v2510 = vsel %vm2310, %v1199, 0
      %2512 = vmatprep.subr.mxu0 0.0
      %2513 = vmatpush1.xpose.msra.mxu0 %v2489
      %2514 = vmatprep.subr.mxu0 0.0
      %2515 = vmatpush1.xpose.msra.mxu0 %v2492
      %2516 = vmatprep.subr.mxu0 0.0
      %2517 = vmatpush1.xpose.msra.mxu0 %v2495
      %2518 = vmatprep.subr.mxu0 0.0
      %2519 = vmatpush1.xpose.msra.mxu0 %v2498
      %2520 = vmatprep.subr.mxu0 0.0
      %2521 = vmatpush1.xpose.msra.mxu0 %v2501
      %2522 = vmatprep.subr.mxu0 0.0
      %2523 = vmatpush1.xpose.msra.mxu0 %v2504
      %2524 = vmatprep.subr.mxu0 0.0
      %2525 = vmatpush1.xpose.msra.mxu0 %v2507
      %2526 = vmatprep.subr.mxu0 0.0
      %2527 = vmatpush1.xpose.msra.mxu0 %v2510
      %2528 = vmatprep.subr.mxu0 0.0
      %2529 = vmatpush1.xpose.msra.mxu0 0.0
      %2530 = vmatprep.subr.mxu0 0.0
      %2531 = vmatpush1.xpose.msra.mxu0 0.0
      %2532 = vmatprep.subr.mxu0 0.0
      %2533 = vmatpush1.xpose.msra.mxu0 0.0
      %2534 = vmatprep.subr.mxu0 0.0
      %2535 = vmatpush1.xpose.msra.mxu0 0.0
      %2536 = vmatprep.subr.mxu0 0.0
      %2537 = vmatpush1.xpose.msra.mxu0 0.0
      %2538 = vmatprep.subr.mxu0 0.0
      %2539 = vmatpush1.xpose.msra.mxu0 0.0
      %2540 = vmatprep.subr.mxu0 0.0
      %2541 = vmatpush1.xpose.msra.mxu0 0.0
      %2542 = vmatprep.subr.mxu0 0.0
      %2543 = vmatpush1.xpose.msra.mxu0 0.0
      %2544 = vmatprep.subr.mxu0 0.0
      %2545 = vmatpush1.xpose.msra.mxu0 0.0
      %2546 = vmatprep.subr.mxu0 0.0
      %2547 = vmatpush1.xpose.msra.mxu0 0.0
      %2548 = vmatprep.subr.mxu0 0.0
      %2549 = vmatpush1.xpose.msra.mxu0 0.0
      %2550 = vmatprep.subr.mxu0 0.0
      %2551 = vmatpush1.xpose.msra.mxu0 0.0
      %2552 = vmatprep.subr.mxu0 0.0
      %2553 = vmatpush1.xpose.msra.mxu0 0.0
      %2554 = vmatprep.subr.mxu0 0.0
      %2555 = vmatpush1.xpose.msra.mxu0 0.0
      %2556 = vmatprep.subr.mxu0 0.0
      %2557 = vmatpush1.xpose.msra.mxu0 0.0
      %2558 = vmatprep.subr.mxu0 0.0
      %2559 = vmatpush1.xpose.msra.mxu0 0.0
      %2560 = vmatprep.subr.mxu0 0.0
      %2561 = vmatpush1.xpose.msra.mxu0 0.0
      %2562 = vmatprep.subr.mxu0 0.0
      %2563 = vmatpush1.xpose.msra.mxu0 0.0
      %2564 = vmatprep.subr.mxu0 0.0
      %2565 = vmatpush1.xpose.msra.mxu0 0.0
      %2566 = vmatprep.subr.mxu0 0.0
      %2567 = vmatpush1.xpose.msra.mxu0 0.0
      %2568 = vmatprep.subr.mxu0 0.0
      %2569 = vmatpush1.xpose.msra.mxu0 0.0
      %2570 = vmatprep.subr.mxu0 0.0
      %2571 = vmatpush1.xpose.msra.mxu0 0.0
      %2572 = vmatprep.subr.mxu0 0.0
      %2573 = vmatpush1.xpose.msra.mxu0 0.0
      %2574 = vmatprep.subr.mxu0 0.0
      %2575 = vmatpush1.xpose.msra.mxu0 0.0
      %2576 = vmatprep.mubr.f32.mxu0 0.0
      %2577 = vmatmul.mubr.f32.gmra.mrb[0].mxu0 %v2465
      %v2578 = vpop.f32.mrb[0].mxu0
      %v2579 = vadd.f32 0.0, %v2578
      %v2580 = vpop.f32.mrb[0].mxu0
      %2581 = vmatprep.mubr.f32.mxu0 0.0
      %2582 = vmatmul.mubr.f32.gmra.mrb[0].mxu0 %v2468
      %v2583 = vpop.f32.mrb[0].mxu0
      %v2584 = vadd.f32 0.0, %v2583
      %v2585 = vpop.f32.mrb[0].mxu0
      %2586 = vmatprep.mubr.f32.mxu0 0.0
      %2587 = vmatmul.mubr.f32.gmra.mrb[0].mxu0 %v2471
      %v2588 = vpop.f32.mrb[0].mxu0
      %v2589 = vadd.f32 0.0, %v2588
      %v2590 = vpop.f32.mrb[0].mxu0
      %2591 = vmatprep.mubr.f32.mxu0 0.0
      %2592 = vmatmul.mubr.f32.gmra.mrb[0].mxu0 %v2474
      %v2593 = vpop.f32.mrb[0].mxu0
      %v2594 = vadd.f32 0.0, %v2593
      %v2595 = vpop.f32.mrb[0].mxu0
      %2596 = vmatprep.mubr.f32.mxu0 0.0
      %2597 = vmatmul.mubr.f32.gmra.mrb[0].mxu0 %v2477
      %v2598 = vpop.f32.mrb[0].mxu0
      %v2599 = vadd.f32 0.0, %v2598
      %v2600 = vpop.f32.mrb[0].mxu0
      %2601 = vmatprep.mubr.f32.mxu0 0.0
      %2602 = vmatmul.mubr.f32.gmra.mrb[0].mxu0 %v2480
      %v2603 = vpop.f32.mrb[0].mxu0
      %v2604 = vadd.f32 0.0, %v2603
      %v2605 = vpop.f32.mrb[0].mxu0
      %2606 = vmatprep.mubr.f32.mxu0 0.0
      %2607 = vmatmul.mubr.f32.gmra.mrb[0].mxu0 %v2483
      %v2608 = vpop.f32.mrb[0].mxu0
      %v2609 = vadd.f32 0.0, %v2608
      %v2610 = vpop.f32.mrb[0].mxu0
      %2611 = vmatprep.mubr.f32.mxu0 0.0
      %2612 = vmatmul.mubr.f32.gmra.mrb[0].mxu0 %v2486
      %v2613 = vpop.f32.mrb[0].mxu0
      %v2614 = vadd.f32 0.0, %v2613
      %v2615 = vpop.f32.mrb[0].mxu0
      %2616 = vdwg.mxu0
      %v2618 = vsel %vm2310, %v809, 0
      %v2621 = vsel %vm2310, %v814, 0
      %v2624 = vsel %vm2310, %v819, 0
      %v2627 = vsel %vm2310, %v824, 0
      %v2630 = vsel %vm2310, %v829, 0
      %v2633 = vsel %vm2310, %v834, 0
      %v2636 = vsel %vm2310, %v839, 0
      %v2639 = vsel %vm2310, %v844, 0
      %v2642 = vsel %vm2310, %v1269, 0
      %v2645 = vsel %vm2310, %v1274, 0
      %v2648 = vsel %vm2310, %v1279, 0
      %v2651 = vsel %vm2310, %v1284, 0
      %v2654 = vsel %vm2310, %v1289, 0
      %v2657 = vsel %vm2310, %v1294, 0
      %v2660 = vsel %vm2310, %v1299, 0
      %v2663 = vsel %vm2310, %v1304, 0
      %2665 = vmatprep.subr.mxu0 0.0
      %2666 = vmatpush1.xpose.msra.mxu0 %v2642
      %2667 = vmatprep.subr.mxu0 0.0
      %2668 = vmatpush1.xpose.msra.mxu0 %v2645
      %2669 = vmatprep.subr.mxu0 0.0
      %2670 = vmatpush1.xpose.msra.mxu0 %v2648
      %2671 = vmatprep.subr.mxu0 0.0
      %2672 = vmatpush1.xpose.msra.mxu0 %v2651
      %2673 = vmatprep.subr.mxu0 0.0
      %2674 = vmatpush1.xpose.msra.mxu0 %v2654
      %2675 = vmatprep.subr.mxu0 0.0
      %2676 = vmatpush1.xpose.msra.mxu0 %v2657
      %2677 = vmatprep.subr.mxu0 0.0
      %2678 = vmatpush1.xpose.msra.mxu0 %v2660
      %2679 = vmatprep.subr.mxu0 0.0
      %2680 = vmatpush1.xpose.msra.mxu0 %v2663
      %2681 = vmatprep.subr.mxu0 0.0
      %2682 = vmatpush1.xpose.msra.mxu0 0.0
      %2683 = vmatprep.subr.mxu0 0.0
      %2684 = vmatpush1.xpose.msra.mxu0 0.0
      %2685 = vmatprep.subr.mxu0 0.0
      %2686 = vmatpush1.xpose.msra.mxu0 0.0
      %2687 = vmatprep.subr.mxu0 0.0
      %2688 = vmatpush1.xpose.msra.mxu0 0.0
      %2689 = vmatprep.subr.mxu0 0.0
      %2690 = vmatpush1.xpose.msra.mxu0 0.0
      %2691 = vmatprep.subr.mxu0 0.0
      %2692 = vmatpush1.xpose.msra.mxu0 0.0
      %2693 = vmatprep.subr.mxu0 0.0
      %2694 = vmatpush1.xpose.msra.mxu0 0.0
      %2695 = vmatprep.subr.mxu0 0.0
      %2696 = vmatpush1.xpose.msra.mxu0 0.0
      %2697 = vmatprep.subr.mxu0 0.0
      %2698 = vmatpush1.xpose.msra.mxu0 0.0
      %2699 = vmatprep.subr.mxu0 0.0
      %2700 = vmatpush1.xpose.msra.mxu0 0.0
      %2701 = vmatprep.subr.mxu0 0.0
      %2702 = vmatpush1.xpose.msra.mxu0 0.0
      %2703 = vmatprep.subr.mxu0 0.0
      %2704 = vmatpush1.xpose.msra.mxu0 0.0
      %2705 = vmatprep.subr.mxu0 0.0
      %2706 = vmatpush1.xpose.msra.mxu0 0.0
      %2707 = vmatprep.subr.mxu0 0.0
      %2708 = vmatpush1.xpose.msra.mxu0 0.0
      %2709 = vmatprep.subr.mxu0 0.0
      %2710 = vmatpush1.xpose.msra.mxu0 0.0
      %2711 = vmatprep.subr.mxu0 0.0
      %2712 = vmatpush1.xpose.msra.mxu0 0.0
      %2713 = vmatprep.subr.mxu0 0.0
      %2714 = vmatpush1.xpose.msra.mxu0 0.0
      %2715 = vmatprep.subr.mxu0 0.0
      %2716 = vmatpush1.xpose.msra.mxu0 0.0
      %2717 = vmatprep.subr.mxu0 0.0
      %2718 = vmatpush1.xpose.msra.mxu0 0.0
      %2719 = vmatprep.subr.mxu0 0.0
      %2720 = vmatpush1.xpose.msra.mxu0 0.0
      %2721 = vmatprep.subr.mxu0 0.0
      %2722 = vmatpush1.xpose.msra.mxu0 0.0
      %2723 = vmatprep.subr.mxu0 0.0
      %2724 = vmatpush1.xpose.msra.mxu0 0.0
      %2725 = vmatprep.subr.mxu0 0.0
      %2726 = vmatpush1.xpose.msra.mxu0 0.0
      %2727 = vmatprep.subr.mxu0 0.0
      %2728 = vmatpush1.xpose.msra.mxu0 0.0
      %2729 = vmatprep.mubr.f32.mxu0 0.0
      %2730 = vmatmul.mubr.f32.gmra.mrb[0].mxu0 %v2618
      %v2731 = vpop.f32.mrb[0].mxu0
      %v2732 = vadd.f32 0.0, %v2731
      %v2733 = vpop.f32.mrb[0].mxu0
      %2734 = vmatprep.mubr.f32.mxu0 0.0
      %2735 = vmatmul.mubr.f32.gmra.mrb[0].mxu0 %v2621
      %v2736 = vpop.f32.mrb[0].mxu0
      %v2737 = vadd.f32 0.0, %v2736
      %v2738 = vpop.f32.mrb[0].mxu0
      %2739 = vmatprep.mubr.f32.mxu0 0.0
      %2740 = vmatmul.mubr.f32.gmra.mrb[0].mxu0 %v2624
      %v2741 = vpop.f32.mrb[0].mxu0
      %v2742 = vadd.f32 0.0, %v2741
      %v2743 = vpop.f32.mrb[0].mxu0
      %2744 = vmatprep.mubr.f32.mxu0 0.0
      %2745 = vmatmul.mubr.f32.gmra.mrb[0].mxu0 %v2627
      %v2746 = vpop.f32.mrb[0].mxu0
      %v2747 = vadd.f32 0.0, %v2746
      %v2748 = vpop.f32.mrb[0].mxu0
      %2749 = vmatprep.mubr.f32.mxu0 0.0
      %2750 = vmatmul.mubr.f32.gmra.mrb[0].mxu0 %v2630
      %v2751 = vpop.f32.mrb[0].mxu0
      %v2752 = vadd.f32 0.0, %v2751
      %v2753 = vpop.f32.mrb[0].mxu0
      %2754 = vmatprep.mubr.f32.mxu0 0.0
      %2755 = vmatmul.mubr.f32.gmra.mrb[0].mxu0 %v2633
      %v2756 = vpop.f32.mrb[0].mxu0
      %v2757 = vadd.f32 0.0, %v2756
      %v2758 = vpop.f32.mrb[0].mxu0
      %2759 = vmatprep.mubr.f32.mxu0 0.0
      %2760 = vmatmul.mubr.f32.gmra.mrb[0].mxu0 %v2636
      %v2761 = vpop.f32.mrb[0].mxu0
      %v2762 = vadd.f32 0.0, %v2761
      %v2763 = vpop.f32.mrb[0].mxu0
      %2764 = vmatprep.mubr.f32.mxu0 0.0
      %2765 = vmatmul.mubr.f32.gmra.mrb[0].mxu0 %v2639
      %v2766 = vpop.f32.mrb[0].mxu0
      %v2767 = vadd.f32 0.0, %v2766
      %v2768 = vpop.f32.mrb[0].mxu0
      %2769 = vdwg.mxu0
      %v2771 = vsel %vm2310, %v914, 0
      %v2774 = vsel %vm2310, %v919, 0
      %v2777 = vsel %vm2310, %v924, 0
      %v2780 = vsel %vm2310, %v929, 0
      %v2783 = vsel %vm2310, %v934, 0
      %v2786 = vsel %vm2310, %v939, 0
      %v2789 = vsel %vm2310, %v944, 0
      %v2792 = vsel %vm2310, %v949, 0
      %v2795 = vsel %vm2310, %v1374, 0
      %v2798 = vsel %vm2310, %v1379, 0
      %v2801 = vsel %vm2310, %v1384, 0
      %v2804 = vsel %vm2310, %v1389, 0
      %v2807 = vsel %vm2310, %v1394, 0
      %v2810 = vsel %vm2310, %v1399, 0
      %v2813 = vsel %vm2310, %v1404, 0
      %v2816 = vsel %vm2310, %v1409, 0
      %2818 = vmatprep.subr.mxu0 0.0
      %2819 = vmatpush1.xpose.msra.mxu0 %v2795
      %2820 = vmatprep.subr.mxu0 0.0
      %2821 = vmatpush1.xpose.msra.mxu0 %v2798
      %2822 = vmatprep.subr.mxu0 0.0
      %2823 = vmatpush1.xpose.msra.mxu0 %v2801
      %2824 = vmatprep.subr.mxu0 0.0
      %2825 = vmatpush1.xpose.msra.mxu0 %v2804
      %2826 = vmatprep.subr.mxu0 0.0
      %2827 = vmatpush1.xpose.msra.mxu0 %v2807
      %2828 = vmatprep.subr.mxu0 0.0
      %2829 = vmatpush1.xpose.msra.mxu0 %v2810
      %2830 = vmatprep.subr.mxu0 0.0
      %2831 = vmatpush1.xpose.msra.mxu0 %v2813
      %2832 = vmatprep.subr.mxu0 0.0
      %2833 = vmatpush1.xpose.msra.mxu0 %v2816
      %2834 = vmatprep.subr.mxu0 0.0
      %2835 = vmatpush1.xpose.msra.mxu0 0.0
      %2836 = vmatprep.subr.mxu0 0.0
      %2837 = vmatpush1.xpose.msra.mxu0 0.0
      %2838 = vmatprep.subr.mxu0 0.0
      %2839 = vmatpush1.xpose.msra.mxu0 0.0
      %2840 = vmatprep.subr.mxu0 0.0
      %2841 = vmatpush1.xpose.msra.mxu0 0.0
      %2842 = vmatprep.subr.mxu0 0.0
      %2843 = vmatpush1.xpose.msra.mxu0 0.0
      %2844 = vmatprep.subr.mxu0 0.0
      %2845 = vmatpush1.xpose.msra.mxu0 0.0
      %2846 = vmatprep.subr.mxu0 0.0
      %2847 = vmatpush1.xpose.msra.mxu0 0.0
      %2848 = vmatprep.subr.mxu0 0.0
      %2849 = vmatpush1.xpose.msra.mxu0 0.0
      %2850 = vmatprep.subr.mxu0 0.0
      %2851 = vmatpush1.xpose.msra.mxu0 0.0
      %2852 = vmatprep.subr.mxu0 0.0
      %2853 = vmatpush1.xpose.msra.mxu0 0.0
      %2854 = vmatprep.subr.mxu0 0.0
      %2855 = vmatpush1.xpose.msra.mxu0 0.0
      %2856 = vmatprep.subr.mxu0 0.0
      %2857 = vmatpush1.xpose.msra.mxu0 0.0
      %2858 = vmatprep.subr.mxu0 0.0
      %2859 = vmatpush1.xpose.msra.mxu0 0.0
      %2860 = vmatprep.subr.mxu0 0.0
      %2861 = vmatpush1.xpose.msra.mxu0 0.0
      %2862 = vmatprep.subr.mxu0 0.0
      %2863 = vmatpush1.xpose.msra.mxu0 0.0
      %2864 = vmatprep.subr.mxu0 0.0
      %2865 = vmatpush1.xpose.msra.mxu0 0.0
      %2866 = vmatprep.subr.mxu0 0.0
      %2867 = vmatpush1.xpose.msra.mxu0 0.0
      %2868 = vmatprep.subr.mxu0 0.0
      %2869 = vmatpush1.xpose.msra.mxu0 0.0
      %2870 = vmatprep.subr.mxu0 0.0
      %2871 = vmatpush1.xpose.msra.mxu0 0.0
      %2872 = vmatprep.subr.mxu0 0.0
      %2873 = vmatpush1.xpose.msra.mxu0 0.0
      %2874 = vmatprep.subr.mxu0 0.0
      %2875 = vmatpush1.xpose.msra.mxu0 0.0
      %2876 = vmatprep.subr.mxu0 0.0
      %2877 = vmatpush1.xpose.msra.mxu0 0.0
      %2878 = vmatprep.subr.mxu0 0.0
      %2879 = vmatpush1.xpose.msra.mxu0 0.0
      %2880 = vmatprep.subr.mxu0 0.0
      %2881 = vmatpush1.xpose.msra.mxu0 0.0
      %2882 = vmatprep.mubr.f32.mxu0 0.0
      %2883 = vmatmul.mubr.f32.gmra.mrb[0].mxu0 %v2771
      %v2884 = vpop.f32.mrb[0].mxu0
      %v2885 = vadd.f32 0.0, %v2884
      %v2886 = vpop.f32.mrb[0].mxu0
      %2887 = vmatprep.mubr.f32.mxu0 0.0
      %2888 = vmatmul.mubr.f32.gmra.mrb[0].mxu0 %v2774
      %v2889 = vpop.f32.mrb[0].mxu0
      %v2890 = vadd.f32 0.0, %v2889
      %v2891 = vpop.f32.mrb[0].mxu0
      %2892 = vmatprep.mubr.f32.mxu0 0.0
      %2893 = vmatmul.mubr.f32.gmra.mrb[0].mxu0 %v2777
      %v2894 = vpop.f32.mrb[0].mxu0
      %v2895 = vadd.f32 0.0, %v2894
      %v2896 = vpop.f32.mrb[0].mxu0
      %2897 = vmatprep.mubr.f32.mxu0 0.0
      %2898 = vmatmul.mubr.f32.gmra.mrb[0].mxu0 %v2780
      %v2899 = vpop.f32.mrb[0].mxu0
      %v2900 = vadd.f32 0.0, %v2899
      %v2901 = vpop.f32.mrb[0].mxu0
      %2902 = vmatprep.mubr.f32.mxu0 0.0
      %2903 = vmatmul.mubr.f32.gmra.mrb[0].mxu0 %v2783
      %v2904 = vpop.f32.mrb[0].mxu0
      %v2905 = vadd.f32 0.0, %v2904
      %v2906 = vpop.f32.mrb[0].mxu0
      %2907 = vmatprep.mubr.f32.mxu0 0.0
      %2908 = vmatmul.mubr.f32.gmra.mrb[0].mxu0 %v2786
      %v2909 = vpop.f32.mrb[0].mxu0
      %v2910 = vadd.f32 0.0, %v2909
      %v2911 = vpop.f32.mrb[0].mxu0
      %2912 = vmatprep.mubr.f32.mxu0 0.0
      %2913 = vmatmul.mubr.f32.gmra.mrb[0].mxu0 %v2789
      %v2914 = vpop.f32.mrb[0].mxu0
      %v2915 = vadd.f32 0.0, %v2914
      %v2916 = vpop.f32.mrb[0].mxu0
      %2917 = vmatprep.mubr.f32.mxu0 0.0
      %2918 = vmatmul.mubr.f32.gmra.mrb[0].mxu0 %v2792
      %v2919 = vpop.f32.mrb[0].mxu0
      %v2920 = vadd.f32 0.0, %v2919
      %v2921 = vpop.f32.mrb[0].mxu0
      %2922 = vdwg.mxu0
      %v2923 = vmul.f32 %v2426, 0.35355338
      %v2924 = vmul.f32 %v2431, 0.35355338
      %v2925 = vmul.f32 %v2436, 0.35355338
      %v2926 = vmul.f32 %v2441, 0.35355338
      %v2927 = vmul.f32 %v2446, 0.35355338
      %v2928 = vmul.f32 %v2451, 0.35355338
      %v2929 = vmul.f32 %v2456, 0.35355338
      %v2930 = vmul.f32 %v2461, 0.35355338
      %v2931 = vmul.f32 %v2579, 0.35355338
      %v2932 = vmul.f32 %v2584, 0.35355338
      %v2933 = vmul.f32 %v2589, 0.35355338
      %v2934 = vmul.f32 %v2594, 0.35355338
      %v2935 = vmul.f32 %v2599, 0.35355338
      %v2936 = vmul.f32 %v2604, 0.35355338
      %v2937 = vmul.f32 %v2609, 0.35355338
      %v2938 = vmul.f32 %v2614, 0.35355338
      %v2939 = vmul.f32 %v2732, 0.35355338
      %v2940 = vmul.f32 %v2737, 0.35355338
      %v2941 = vmul.f32 %v2742, 0.35355338
      %v2942 = vmul.f32 %v2747, 0.35355338
      %v2943 = vmul.f32 %v2752, 0.35355338
      %v2944 = vmul.f32 %v2757, 0.35355338
      %v2945 = vmul.f32 %v2762, 0.35355338
      %v2946 = vmul.f32 %v2767, 0.35355338
      %v2947 = vmul.f32 %v2885, 0.35355338
      %v2948 = vmul.f32 %v2890, 0.35355338
      %v2949 = vmul.f32 %v2895, 0.35355338
      %v2950 = vmul.f32 %v2900, 0.35355338
      %v2951 = vmul.f32 %v2905, 0.35355338
      %v2952 = vmul.f32 %v2910, 0.35355338
      %v2953 = vmul.f32 %v2915, 0.35355338
      %v2954 = vmul.f32 %v2920, 0.35355338
      %vm2955 = vcmask 523264
      %v2956 = vsel %vm2955, %v2923, -inf
      %2957 = vmax.xlane.f32.xlu0 %v2956
      %v2958 = vpop.xlane.xlu0 %2957
      %v2959 = vsel %vm2955, %v2924, -inf
      %2960 = vmax.xlane.f32.xlu0 %v2959
      %v2961 = vpop.xlane.xlu0 %2960
      %v2962 = vsel %vm2955, %v2925, -inf
      %2963 = vmax.xlane.f32.xlu0 %v2962
      %v2964 = vpop.xlane.xlu0 %2963
      %v2965 = vsel %vm2955, %v2926, -inf
      %2966 = vmax.xlane.f32.xlu0 %v2965
      %v2967 = vpop.xlane.xlu0 %2966
      %v2968 = vsel %vm2955, %v2927, -inf
      %2969 = vmax.xlane.f32.xlu0 %v2968
      %v2970 = vpop.xlane.xlu0 %2969
      %v2971 = vsel %vm2955, %v2928, -inf
      %2972 = vmax.xlane.f32.xlu0 %v2971
      %v2973 = vpop.xlane.xlu0 %2972
      %v2974 = vsel %vm2955, %v2929, -inf
      %2975 = vmax.xlane.f32.xlu0 %v2974
      %v2976 = vpop.xlane.xlu0 %2975
      %v2977 = vsel %vm2955, %v2930, -inf
      %2978 = vmax.xlane.f32.xlu0 %v2977
      %v2979 = vpop.xlane.xlu0 %2978
      %v2980 = vsel %vm2955, %v2931, -inf
      %2981 = vmax.xlane.f32.xlu0 %v2980
      %v2982 = vpop.xlane.xlu0 %2981
      %v2983 = vsel %vm2955, %v2932, -inf
      %2984 = vmax.xlane.f32.xlu0 %v2983
      %v2985 = vpop.xlane.xlu0 %2984
      %v2986 = vsel %vm2955, %v2933, -inf
      %2987 = vmax.xlane.f32.xlu0 %v2986
      %v2988 = vpop.xlane.xlu0 %2987
      %v2989 = vsel %vm2955, %v2934, -inf
      %2990 = vmax.xlane.f32.xlu0 %v2989
      %v2991 = vpop.xlane.xlu0 %2990
      %v2992 = vsel %vm2955, %v2935, -inf
      %2993 = vmax.xlane.f32.xlu0 %v2992
      %v2994 = vpop.xlane.xlu0 %2993
      %v2995 = vsel %vm2955, %v2936, -inf
      %2996 = vmax.xlane.f32.xlu0 %v2995
      %v2997 = vpop.xlane.xlu0 %2996
      %v2998 = vsel %vm2955, %v2937, -inf
      %2999 = vmax.xlane.f32.xlu0 %v2998
      %v3000 = vpop.xlane.xlu0 %2999
      %v3001 = vsel %vm2955, %v2938, -inf
      %3002 = vmax.xlane.f32.xlu0 %v3001
      %v3003 = vpop.xlane.xlu0 %3002
      %v3004 = vsel %vm2955, %v2939, -inf
      %3005 = vmax.xlane.f32.xlu0 %v3004
      %v3006 = vpop.xlane.xlu0 %3005
      %v3007 = vsel %vm2955, %v2940, -inf
      %3008 = vmax.xlane.f32.xlu0 %v3007
      %v3009 = vpop.xlane.xlu0 %3008
      %v3010 = vsel %vm2955, %v2941, -inf
      %3011 = vmax.xlane.f32.xlu0 %v3010
      %v3012 = vpop.xlane.xlu0 %3011
      %v3013 = vsel %vm2955, %v2942, -inf
      %3014 = vmax.xlane.f32.xlu0 %v3013
      %v3015 = vpop.xlane.xlu0 %3014
      %v3016 = vsel %vm2955, %v2943, -inf
      %3017 = vmax.xlane.f32.xlu0 %v3016
      %v3018 = vpop.xlane.xlu0 %3017
      %v3019 = vsel %vm2955, %v2944, -inf
      %3020 = vmax.xlane.f32.xlu0 %v3019
      %v3021 = vpop.xlane.xlu0 %3020
      %v3022 = vsel %vm2955, %v2945, -inf
      %3023 = vmax.xlane.f32.xlu0 %v3022
      %v3024 = vpop.xlane.xlu0 %3023
      %v3025 = vsel %vm2955, %v2946, -inf
      %3026 = vmax.xlane.f32.xlu0 %v3025
      %v3027 = vpop.xlane.xlu0 %3026
      %v3028 = vsel %vm2955, %v2947, -inf
      %3029 = vmax.xlane.f32.xlu0 %v3028
      %v3030 = vpop.xlane.xlu0 %3029
      %v3031 = vsel %vm2955, %v2948, -inf
      %3032 = vmax.xlane.f32.xlu0 %v3031
      %v3033 = vpop.xlane.xlu0 %3032
      %v3034 = vsel %vm2955, %v2949, -inf
      %3035 = vmax.xlane.f32.xlu0 %v3034
      %v3036 = vpop.xlane.xlu0 %3035
      %v3037 = vsel %vm2955, %v2950, -inf
      %3038 = vmax.xlane.f32.xlu0 %v3037
      %v3039 = vpop.xlane.xlu0 %3038
      %v3040 = vsel %vm2955, %v2951, -inf
      %3041 = vmax.xlane.f32.xlu0 %v3040
      %v3042 = vpop.xlane.xlu0 %3041
      %v3043 = vsel %vm2955, %v2952, -inf
      %3044 = vmax.xlane.f32.xlu0 %v3043
      %v3045 = vpop.xlane.xlu0 %3044
      %v3046 = vsel %vm2955, %v2953, -inf
      %3047 = vmax.xlane.f32.xlu0 %v3046
      %v3048 = vpop.xlane.xlu0 %3047
      %v3049 = vsel %vm2955, %v2954, -inf
      %3050 = vmax.xlane.f32.xlu0 %v3049
      %v3051 = vpop.xlane.xlu0 %3050
      %v3052 = vsub.f32 %v2923, %v2958
      %v3053 = vsub.f32 %v2924, %v2961
      %v3054 = vsub.f32 %v2925, %v2964
      %v3055 = vsub.f32 %v2926, %v2967
      %v3056 = vsub.f32 %v2927, %v2970
      %v3057 = vsub.f32 %v2928, %v2973
      %v3058 = vsub.f32 %v2929, %v2976
      %v3059 = vsub.f32 %v2930, %v2979
      %v3060 = vsub.f32 %v2931, %v2982
      %v3061 = vsub.f32 %v2932, %v2985
      %v3062 = vsub.f32 %v2933, %v2988
      %v3063 = vsub.f32 %v2934, %v2991
      %v3064 = vsub.f32 %v2935, %v2994
      %v3065 = vsub.f32 %v2936, %v2997
      %v3066 = vsub.f32 %v2937, %v3000
      %v3067 = vsub.f32 %v2938, %v3003
      %v3068 = vsub.f32 %v2939, %v3006
      %v3069 = vsub.f32 %v2940, %v3009
      %v3070 = vsub.f32 %v2941, %v3012
      %v3071 = vsub.f32 %v2942, %v3015
      %v3072 = vsub.f32 %v2943, %v3018
      %v3073 = vsub.f32 %v2944, %v3021
      %v3074 = vsub.f32 %v2945, %v3024
      %v3075 = vsub.f32 %v2946, %v3027
      %v3076 = vsub.f32 %v2947, %v3030
      %v3077 = vsub.f32 %v2948, %v3033
      %v3078 = vsub.f32 %v2949, %v3036
      %v3079 = vsub.f32 %v2950, %v3039
      %v3080 = vsub.f32 %v2951, %v3042
      %v3081 = vsub.f32 %v2952, %v3045
      %v3082 = vsub.f32 %v2953, %v3048
      %v3083 = vsub.f32 %v2954, %v3051
      %v3084 = vmul.f32 %v3052, 1.442695
      %v3085 = vpow.pop %v3084
      %v3086 = vmul.f32 %v3053, 1.442695
      %v3087 = vpow.pop %v3086
      %v3088 = vmul.f32 %v3054, 1.442695
      %v3089 = vpow.pop %v3088
      %v3090 = vmul.f32 %v3055, 1.442695
      %v3091 = vpow.pop %v3090
      %v3092 = vmul.f32 %v3056, 1.442695
      %v3093 = vpow.pop %v3092
      %v3094 = vmul.f32 %v3057, 1.442695
      %v3095 = vpow.pop %v3094
      %v3096 = vmul.f32 %v3058, 1.442695
      %v3097 = vpow.pop %v3096
      %v3098 = vmul.f32 %v3059, 1.442695
      %v3099 = vpow.pop %v3098
      %v3100 = vmul.f32 %v3060, 1.442695
      %v3101 = vpow.pop %v3100
      %v3102 = vmul.f32 %v3061, 1.442695
      %v3103 = vpow.pop %v3102
      %v3104 = vmul.f32 %v3062, 1.442695
      %v3105 = vpow.pop %v3104
      %v3106 = vmul.f32 %v3063, 1.442695
      %v3107 = vpow.pop %v3106
      %v3108 = vmul.f32 %v3064, 1.442695
      %v3109 = vpow.pop %v3108
      %v3110 = vmul.f32 %v3065, 1.442695
      %v3111 = vpow.pop %v3110
      %v3112 = vmul.f32 %v3066, 1.442695
      %v3113 = vpow.pop %v3112
      %v3114 = vmul.f32 %v3067, 1.442695
      %v3115 = vpow.pop %v3114
      %v3116 = vmul.f32 %v3068, 1.442695
      %v3117 = vpow.pop %v3116
      %v3118 = vmul.f32 %v3069, 1.442695
      %v3119 = vpow.pop %v3118
      %v3120 = vmul.f32 %v3070, 1.442695
      %v3121 = vpow.pop %v3120
      %v3122 = vmul.f32 %v3071, 1.442695
      %v3123 = vpow.pop %v3122
      %v3124 = vmul.f32 %v3072, 1.442695
      %v3125 = vpow.pop %v3124
      %v3126 = vmul.f32 %v3073, 1.442695
      %v3127 = vpow.pop %v3126
      %v3128 = vmul.f32 %v3074, 1.442695
      %v3129 = vpow.pop %v3128
      %v3130 = vmul.f32 %v3075, 1.442695
      %v3131 = vpow.pop %v3130
      %v3132 = vmul.f32 %v3076, 1.442695
      %v3133 = vpow.pop %v3132
      %v3134 = vmul.f32 %v3077, 1.442695
      %v3135 = vpow.pop %v3134
      %v3136 = vmul.f32 %v3078, 1.442695
      %v3137 = vpow.pop %v3136
      %v3138 = vmul.f32 %v3079, 1.442695
      %v3139 = vpow.pop %v3138
      %v3140 = vmul.f32 %v3080, 1.442695
      %v3141 = vpow.pop %v3140
      %v3142 = vmul.f32 %v3081, 1.442695
      %v3143 = vpow.pop %v3142
      %v3144 = vmul.f32 %v3082, 1.442695
      %v3145 = vpow.pop %v3144
      %v3146 = vmul.f32 %v3083, 1.442695
      %v3147 = vpow.pop %v3146
      %v3148 = vsel %vm2955, %v3085, 0.0
      %3149 = vadd.xlane.f32.xlu0 %v3148
      %v3150 = vpop.xlane.xlu0 %3149
      %v3151 = vsel %vm2955, %v3087, 0.0
      %3152 = vadd.xlane.f32.xlu0 %v3151
      %v3153 = vpop.xlane.xlu0 %3152
      %v3154 = vsel %vm2955, %v3089, 0.0
      %3155 = vadd.xlane.f32.xlu0 %v3154
      %v3156 = vpop.xlane.xlu0 %3155
      %v3157 = vsel %vm2955, %v3091, 0.0
      %3158 = vadd.xlane.f32.xlu0 %v3157
      %v3159 = vpop.xlane.xlu0 %3158
      %v3160 = vsel %vm2955, %v3093, 0.0
      %3161 = vadd.xlane.f32.xlu0 %v3160
      %v3162 = vpop.xlane.xlu0 %3161
      %v3163 = vsel %vm2955, %v3095, 0.0
      %3164 = vadd.xlane.f32.xlu0 %v3163
      %v3165 = vpop.xlane.xlu0 %3164
      %v3166 = vsel %vm2955, %v3097, 0.0
      %3167 = vadd.xlane.f32.xlu0 %v3166
      %v3168 = vpop.xlane.xlu0 %3167
      %v3169 = vsel %vm2955, %v3099, 0.0
      %3170 = vadd.xlane.f32.xlu0 %v3169
      %v3171 = vpop.xlane.xlu0 %3170
      %v3172 = vsel %vm2955, %v3101, 0.0
      %3173 = vadd.xlane.f32.xlu0 %v3172
      %v3174 = vpop.xlane.xlu0 %3173
      %v3175 = vsel %vm2955, %v3103, 0.0
      %3176 = vadd.xlane.f32.xlu0 %v3175
      %v3177 = vpop.xlane.xlu0 %3176
      %v3178 = vsel %vm2955, %v3105, 0.0
      %3179 = vadd.xlane.f32.xlu0 %v3178
      %v3180 = vpop.xlane.xlu0 %3179
      %v3181 = vsel %vm2955, %v3107, 0.0
      %3182 = vadd.xlane.f32.xlu0 %v3181
      %v3183 = vpop.xlane.xlu0 %3182
      %v3184 = vsel %vm2955, %v3109, 0.0
      %3185 = vadd.xlane.f32.xlu0 %v3184
      %v3186 = vpop.xlane.xlu0 %3185
      %v3187 = vsel %vm2955, %v3111, 0.0
      %3188 = vadd.xlane.f32.xlu0 %v3187
      %v3189 = vpop.xlane.xlu0 %3188
      %v3190 = vsel %vm2955, %v3113, 0.0
      %3191 = vadd.xlane.f32.xlu0 %v3190
      %v3192 = vpop.xlane.xlu0 %3191
      %v3193 = vsel %vm2955, %v3115, 0.0
      %3194 = vadd.xlane.f32.xlu0 %v3193
      %v3195 = vpop.xlane.xlu0 %3194
      %v3196 = vsel %vm2955, %v3117, 0.0
      %3197 = vadd.xlane.f32.xlu0 %v3196
      %v3198 = vpop.xlane.xlu0 %3197
      %v3199 = vsel %vm2955, %v3119, 0.0
      %3200 = vadd.xlane.f32.xlu0 %v3199
      %v3201 = vpop.xlane.xlu0 %3200
      %v3202 = vsel %vm2955, %v3121, 0.0
      %3203 = vadd.xlane.f32.xlu0 %v3202
      %v3204 = vpop.xlane.xlu0 %3203
      %v3205 = vsel %vm2955, %v3123, 0.0
      %3206 = vadd.xlane.f32.xlu0 %v3205
      %v3207 = vpop.xlane.xlu0 %3206
      %v3208 = vsel %vm2955, %v3125, 0.0
      %3209 = vadd.xlane.f32.xlu0 %v3208
      %v3210 = vpop.xlane.xlu0 %3209
      %v3211 = vsel %vm2955, %v3127, 0.0
      %3212 = vadd.xlane.f32.xlu0 %v3211
      %v3213 = vpop.xlane.xlu0 %3212
      %v3214 = vsel %vm2955, %v3129, 0.0
      %3215 = vadd.xlane.f32.xlu0 %v3214
      %v3216 = vpop.xlane.xlu0 %3215
      %v3217 = vsel %vm2955, %v3131, 0.0
      %3218 = vadd.xlane.f32.xlu0 %v3217
      %v3219 = vpop.xlane.xlu0 %3218
      %v3220 = vsel %vm2955, %v3133, 0.0
      %3221 = vadd.xlane.f32.xlu0 %v3220
      %v3222 = vpop.xlane.xlu0 %3221
      %v3223 = vsel %vm2955, %v3135, 0.0
      %3224 = vadd.xlane.f32.xlu0 %v3223
      %v3225 = vpop.xlane.xlu0 %3224
      %v3226 = vsel %vm2955, %v3137, 0.0
      %3227 = vadd.xlane.f32.xlu0 %v3226
      %v3228 = vpop.xlane.xlu0 %3227
      %v3229 = vsel %vm2955, %v3139, 0.0
      %3230 = vadd.xlane.f32.xlu0 %v3229
      %v3231 = vpop.xlane.xlu0 %3230
      %v3232 = vsel %vm2955, %v3141, 0.0
      %3233 = vadd.xlane.f32.xlu0 %v3232
      %v3234 = vpop.xlane.xlu0 %3233
      %v3235 = vsel %vm2955, %v3143, 0.0
      %3236 = vadd.xlane.f32.xlu0 %v3235
      %v3237 = vpop.xlane.xlu0 %3236
      %v3238 = vsel %vm2955, %v3145, 0.0
      %3239 = vadd.xlane.f32.xlu0 %v3238
      %v3240 = vpop.xlane.xlu0 %3239
      %v3241 = vsel %vm2955, %v3147, 0.0
      %3242 = vadd.xlane.f32.xlu0 %v3241
      %v3243 = vpop.xlane.xlu0 %3242
      %v3244 = vrcp.pop %v3150
      %v3245 = vrcp.pop %v3153
      %v3246 = vrcp.pop %v3156
      %v3247 = vrcp.pop %v3159
      %v3248 = vrcp.pop %v3162
      %v3249 = vrcp.pop %v3165
      %v3250 = vrcp.pop %v3168
      %v3251 = vrcp.pop %v3171
      %v3252 = vrcp.pop %v3174
      %v3253 = vrcp.pop %v3177
      %v3254 = vrcp.pop %v3180
      %v3255 = vrcp.pop %v3183
      %v3256 = vrcp.pop %v3186
      %v3257 = vrcp.pop %v3189
      %v3258 = vrcp.pop %v3192
      %v3259 = vrcp.pop %v3195
      %v3260 = vrcp.pop %v3198
      %v3261 = vrcp.pop %v3201
      %v3262 = vrcp.pop %v3204
      %v3263 = vrcp.pop %v3207
      %v3264 = vrcp.pop %v3210
      %v3265 = vrcp.pop %v3213
      %v3266 = vrcp.pop %v3216
      %v3267 = vrcp.pop %v3219
      %v3268 = vrcp.pop %v3222
      %v3269 = vrcp.pop %v3225
      %v3270 = vrcp.pop %v3228
      %v3271 = vrcp.pop %v3231
      %v3272 = vrcp.pop %v3234
      %v3273 = vrcp.pop %v3237
      %v3274 = vrcp.pop %v3240
      %v3275 = vrcp.pop %v3243
      %v3276 = vmul.f32 %v3085, %v3244
      %v3277 = vmul.f32 %v3087, %v3245
      %v3278 = vmul.f32 %v3089, %v3246
      %v3279 = vmul.f32 %v3091, %v3247
      %v3280 = vmul.f32 %v3093, %v3248
      %v3281 = vmul.f32 %v3095, %v3249
      %v3282 = vmul.f32 %v3097, %v3250
      %v3283 = vmul.f32 %v3099, %v3251
      %v3284 = vmul.f32 %v3101, %v3252
      %v3285 = vmul.f32 %v3103, %v3253
      %v3286 = vmul.f32 %v3105, %v3254
      %v3287 = vmul.f32 %v3107, %v3255
      %v3288 = vmul.f32 %v3109, %v3256
      %v3289 = vmul.f32 %v3111, %v3257
      %v3290 = vmul.f32 %v3113, %v3258
      %v3291 = vmul.f32 %v3115, %v3259
      %v3292 = vmul.f32 %v3117, %v3260
      %v3293 = vmul.f32 %v3119, %v3261
      %v3294 = vmul.f32 %v3121, %v3262
      %v3295 = vmul.f32 %v3123, %v3263
      %v3296 = vmul.f32 %v3125, %v3264
      %v3297 = vmul.f32 %v3127, %v3265
      %v3298 = vmul.f32 %v3129, %v3266
      %v3299 = vmul.f32 %v3131, %v3267
      %v3300 = vmul.f32 %v3133, %v3268
      %v3301 = vmul.f32 %v3135, %v3269
      %v3302 = vmul.f32 %v3137, %v3270
      %v3303 = vmul.f32 %v3139, %v3271
      %v3304 = vmul.f32 %v3141, %v3272
      %v3305 = vmul.f32 %v3143, %v3273
      %v3306 = vmul.f32 %v3145, %v3274
      %v3307 = vmul.f32 %v3147, %v3275
      %v3309 = vsel %vm2955, %v3276, 0
      %v3312 = vsel %vm2955, %v3277, 0
      %v3315 = vsel %vm2955, %v3278, 0
      %v3318 = vsel %vm2955, %v3279, 0
      %v3321 = vsel %vm2955, %v3280, 0
      %v3324 = vsel %vm2955, %v3281, 0
      %v3327 = vsel %vm2955, %v3282, 0
      %v3330 = vsel %vm2955, %v3283, 0
      %3332 = vmatprep.subr.mxu0 0.0
      %3333 = vmatpush1.msra.mxu0 %v1495
      %3334 = vmatprep.subr.mxu0 0.0
      %3335 = vmatpush1.msra.mxu0 %v1500
      %3336 = vmatprep.subr.mxu0 0.0
      %3337 = vmatpush1.msra.mxu0 %v1505
      %3338 = vmatprep.subr.mxu0 0.0
      %3339 = vmatpush1.msra.mxu0 %v1510
      %3340 = vmatprep.subr.mxu0 0.0
      %3341 = vmatpush1.msra.mxu0 %v1515
      %3342 = vmatprep.subr.mxu0 0.0
      %3343 = vmatpush1.msra.mxu0 %v1520
      %3344 = vmatprep.subr.mxu0 0.0
      %3345 = vmatpush1.msra.mxu0 %v1525
      %3346 = vmatprep.subr.mxu0 0.0
      %3347 = vmatpush1.msra.mxu0 %v1530
      %3348 = vmatprep.subr.mxu0 0.0
      %3349 = vmatpush1.msra.mxu0 0.0
      %3350 = vmatprep.subr.mxu0 0.0
      %3351 = vmatpush1.msra.mxu0 0.0
      %3352 = vmatprep.subr.mxu0 0.0
      %3353 = vmatpush1.msra.mxu0 0.0
      %3354 = vmatprep.subr.mxu0 0.0
      %3355 = vmatpush1.msra.mxu0 0.0
      %3356 = vmatprep.subr.mxu0 0.0
      %3357 = vmatpush1.msra.mxu0 0.0
      %3358 = vmatprep.subr.mxu0 0.0
      %3359 = vmatpush1.msra.mxu0 0.0
      %3360 = vmatprep.subr.mxu0 0.0
      %3361 = vmatpush1.msra.mxu0 0.0
      %3362 = vmatprep.subr.mxu0 0.0
      %3363 = vmatpush1.msra.mxu0 0.0
      %3364 = vmatprep.subr.mxu0 0.0
      %3365 = vmatpush1.msra.mxu0 0.0
      %3366 = vmatprep.subr.mxu0 0.0
      %3367 = vmatpush1.msra.mxu0 0.0
      %3368 = vmatprep.subr.mxu0 0.0
      %3369 = vmatpush1.msra.mxu0 0.0
      %3370 = vmatprep.subr.mxu0 0.0
      %3371 = vmatpush1.msra.mxu0 0.0
      %3372 = vmatprep.subr.mxu0 0.0
      %3373 = vmatpush1.msra.mxu0 0.0
      %3374 = vmatprep.subr.mxu0 0.0
      %3375 = vmatpush1.msra.mxu0 0.0
      %3376 = vmatprep.subr.mxu0 0.0
      %3377 = vmatpush1.msra.mxu0 0.0
      %3378 = vmatprep.subr.mxu0 0.0
      %3379 = vmatpush1.msra.mxu0 0.0
      %3380 = vmatprep.subr.mxu0 0.0
      %3381 = vmatpush1.msra.mxu0 0.0
      %3382 = vmatprep.subr.mxu0 0.0
      %3383 = vmatpush1.msra.mxu0 0.0
      %3384 = vmatprep.subr.mxu0 0.0
      %3385 = vmatpush1.msra.mxu0 0.0
      %3386 = vmatprep.subr.mxu0 0.0
      %3387 = vmatpush1.msra.mxu0 0.0
      %3388 = vmatprep.subr.mxu0 0.0
      %3389 = vmatpush1.msra.mxu0 0.0
      %3390 = vmatprep.subr.mxu0 0.0
      %3391 = vmatpush1.msra.mxu0 0.0
      %3392 = vmatprep.subr.mxu0 0.0
      %3393 = vmatpush1.msra.mxu0 0.0
      %3394 = vmatprep.subr.mxu0 0.0
      %3395 = vmatpush1.msra.mxu0 0.0
      %3396 = vmatprep.mubr.f32.mxu0 0.0
      %3397 = vmatmul.mubr.f32.gmra.mrb[0].mxu0 %v3309
      %v3398 = vpop.f32.mrb[0].mxu0
      %v3399 = vadd.f32 0.0, %v3398
      %v3400 = vpop.f32.mrb[0].mxu0
      %3401 = vmatprep.mubr.f32.mxu0 0.0
      %3402 = vmatmul.mubr.f32.gmra.mrb[0].mxu0 %v3312
      %v3403 = vpop.f32.mrb[0].mxu0
      %v3404 = vadd.f32 0.0, %v3403
      %v3405 = vpop.f32.mrb[0].mxu0
      %3406 = vmatprep.mubr.f32.mxu0 0.0
      %3407 = vmatmul.mubr.f32.gmra.mrb[0].mxu0 %v3315
      %v3408 = vpop.f32.mrb[0].mxu0
      %v3409 = vadd.f32 0.0, %v3408
      %v3410 = vpop.f32.mrb[0].mxu0
      %3411 = vmatprep.mubr.f32.mxu0 0.0
      %3412 = vmatmul.mubr.f32.gmra.mrb[0].mxu0 %v3318
      %v3413 = vpop.f32.mrb[0].mxu0
      %v3414 = vadd.f32 0.0, %v3413
      %v3415 = vpop.f32.mrb[0].mxu0
      %3416 = vmatprep.mubr.f32.mxu0 0.0
      %3417 = vmatmul.mubr.f32.gmra.mrb[0].mxu0 %v3321
      %v3418 = vpop.f32.mrb[0].mxu0
      %v3419 = vadd.f32 0.0, %v3418
      %v3420 = vpop.f32.mrb[0].mxu0
      %3421 = vmatprep.mubr.f32.mxu0 0.0
      %3422 = vmatmul.mubr.f32.gmra.mrb[0].mxu0 %v3324
      %v3423 = vpop.f32.mrb[0].mxu0
      %v3424 = vadd.f32 0.0, %v3423
      %v3425 = vpop.f32.mrb[0].mxu0
      %3426 = vmatprep.mubr.f32.mxu0 0.0
      %3427 = vmatmul.mubr.f32.gmra.mrb[0].mxu0 %v3327
      %v3428 = vpop.f32.mrb[0].mxu0
      %v3429 = vadd.f32 0.0, %v3428
      %v3430 = vpop.f32.mrb[0].mxu0
      %3431 = vmatprep.mubr.f32.mxu0 0.0
      %3432 = vmatmul.mubr.f32.gmra.mrb[0].mxu0 %v3330
      %v3433 = vpop.f32.mrb[0].mxu0
      %v3434 = vadd.f32 0.0, %v3433
      %v3435 = vpop.f32.mrb[0].mxu0
      %3436 = vdwg.mxu0
      %v3438 = vsel %vm2955, %v3284, 0
      %v3441 = vsel %vm2955, %v3285, 0
      %v3444 = vsel %vm2955, %v3286, 0
      %v3447 = vsel %vm2955, %v3287, 0
      %v3450 = vsel %vm2955, %v3288, 0
      %v3453 = vsel %vm2955, %v3289, 0
      %v3456 = vsel %vm2955, %v3290, 0
      %v3459 = vsel %vm2955, %v3291, 0
      %3461 = vmatprep.subr.mxu0 0.0
      %3462 = vmatpush1.msra.mxu0 %v1600
      %3463 = vmatprep.subr.mxu0 0.0
      %3464 = vmatpush1.msra.mxu0 %v1605
      %3465 = vmatprep.subr.mxu0 0.0
      %3466 = vmatpush1.msra.mxu0 %v1610
      %3467 = vmatprep.subr.mxu0 0.0
      %3468 = vmatpush1.msra.mxu0 %v1615
      %3469 = vmatprep.subr.mxu0 0.0
      %3470 = vmatpush1.msra.mxu0 %v1620
      %3471 = vmatprep.subr.mxu0 0.0
      %3472 = vmatpush1.msra.mxu0 %v1625
      %3473 = vmatprep.subr.mxu0 0.0
      %3474 = vmatpush1.msra.mxu0 %v1630
      %3475 = vmatprep.subr.mxu0 0.0
      %3476 = vmatpush1.msra.mxu0 %v1635
      %3477 = vmatprep.subr.mxu0 0.0
      %3478 = vmatpush1.msra.mxu0 0.0
      %3479 = vmatprep.subr.mxu0 0.0
      %3480 = vmatpush1.msra.mxu0 0.0
      %3481 = vmatprep.subr.mxu0 0.0
      %3482 = vmatpush1.msra.mxu0 0.0
      %3483 = vmatprep.subr.mxu0 0.0
      %3484 = vmatpush1.msra.mxu0 0.0
      %3485 = vmatprep.subr.mxu0 0.0
      %3486 = vmatpush1.msra.mxu0 0.0
      %3487 = vmatprep.subr.mxu0 0.0
      %3488 = vmatpush1.msra.mxu0 0.0
      %3489 = vmatprep.subr.mxu0 0.0
      %3490 = vmatpush1.msra.mxu0 0.0
      %3491 = vmatprep.subr.mxu0 0.0
      %3492 = vmatpush1.msra.mxu0 0.0
      %3493 = vmatprep.subr.mxu0 0.0
      %3494 = vmatpush1.msra.mxu0 0.0
      %3495 = vmatprep.subr.mxu0 0.0
      %3496 = vmatpush1.msra.mxu0 0.0
      %3497 = vmatprep.subr.mxu0 0.0
      %3498 = vmatpush1.msra.mxu0 0.0
      %3499 = vmatprep.subr.mxu0 0.0
      %3500 = vmatpush1.msra.mxu0 0.0
      %3501 = vmatprep.subr.mxu0 0.0
      %3502 = vmatpush1.msra.mxu0 0.0
      %3503 = vmatprep.subr.mxu0 0.0
      %3504 = vmatpush1.msra.mxu0 0.0
      %3505 = vmatprep.subr.mxu0 0.0
      %3506 = vmatpush1.msra.mxu0 0.0
      %3507 = vmatprep.subr.mxu0 0.0
      %3508 = vmatpush1.msra.mxu0 0.0
      %3509 = vmatprep.subr.mxu0 0.0
      %3510 = vmatpush1.msra.mxu0 0.0
      %3511 = vmatprep.subr.mxu0 0.0
      %3512 = vmatpush1.msra.mxu0 0.0
      %3513 = vmatprep.subr.mxu0 0.0
      %3514 = vmatpush1.msra.mxu0 0.0
      %3515 = vmatprep.subr.mxu0 0.0
      %3516 = vmatpush1.msra.mxu0 0.0
      %3517 = vmatprep.subr.mxu0 0.0
      %3518 = vmatpush1.msra.mxu0 0.0
      %3519 = vmatprep.subr.mxu0 0.0
      %3520 = vmatpush1.msra.mxu0 0.0
      %3521 = vmatprep.subr.mxu0 0.0
      %3522 = vmatpush1.msra.mxu0 0.0
      %3523 = vmatprep.subr.mxu0 0.0
      %3524 = vmatpush1.msra.mxu0 0.0
      %3525 = vmatprep.mubr.f32.mxu0 0.0
      %3526 = vmatmul.mubr.f32.gmra.mrb[0].mxu0 %v3438
      %v3527 = vpop.f32.mrb[0].mxu0
      %v3528 = vadd.f32 0.0, %v3527
      %v3529 = vpop.f32.mrb[0].mxu0
      %3530 = vmatprep.mubr.f32.mxu0 0.0
      %3531 = vmatmul.mubr.f32.gmra.mrb[0].mxu0 %v3441
      %v3532 = vpop.f32.mrb[0].mxu0
      %v3533 = vadd.f32 0.0, %v3532
      %v3534 = vpop.f32.mrb[0].mxu0
      %3535 = vmatprep.mubr.f32.mxu0 0.0
      %3536 = vmatmul.mubr.f32.gmra.mrb[0].mxu0 %v3444
      %v3537 = vpop.f32.mrb[0].mxu0
      %v3538 = vadd.f32 0.0, %v3537
      %v3539 = vpop.f32.mrb[0].mxu0
      %3540 = vmatprep.mubr.f32.mxu0 0.0
      %3541 = vmatmul.mubr.f32.gmra.mrb[0].mxu0 %v3447
      %v3542 = vpop.f32.mrb[0].mxu0
      %v3543 = vadd.f32 0.0, %v3542
      %v3544 = vpop.f32.mrb[0].mxu0
      %3545 = vmatprep.mubr.f32.mxu0 0.0
      %3546 = vmatmul.mubr.f32.gmra.mrb[0].mxu0 %v3450
      %v3547 = vpop.f32.mrb[0].mxu0
      %v3548 = vadd.f32 0.0, %v3547
      %v3549 = vpop.f32.mrb[0].mxu0
      %3550 = vmatprep.mubr.f32.mxu0 0.0
      %3551 = vmatmul.mubr.f32.gmra.mrb[0].mxu0 %v3453
      %v3552 = vpop.f32.mrb[0].mxu0
      %v3553 = vadd.f32 0.0, %v3552
      %v3554 = vpop.f32.mrb[0].mxu0
      %3555 = vmatprep.mubr.f32.mxu0 0.0
      %3556 = vmatmul.mubr.f32.gmra.mrb[0].mxu0 %v3456
      %v3557 = vpop.f32.mrb[0].mxu0
      %v3558 = vadd.f32 0.0, %v3557
      %v3559 = vpop.f32.mrb[0].mxu0
      %3560 = vmatprep.mubr.f32.mxu0 0.0
      %3561 = vmatmul.mubr.f32.gmra.mrb[0].mxu0 %v3459
      %v3562 = vpop.f32.mrb[0].mxu0
      %v3563 = vadd.f32 0.0, %v3562
      %v3564 = vpop.f32.mrb[0].mxu0
      %3565 = vdwg.mxu0
      %v3567 = vsel %vm2955, %v3292, 0
      %v3570 = vsel %vm2955, %v3293, 0
      %v3573 = vsel %vm2955, %v3294, 0
      %v3576 = vsel %vm2955, %v3295, 0
      %v3579 = vsel %vm2955, %v3296, 0
      %v3582 = vsel %vm2955, %v3297, 0
      %v3585 = vsel %vm2955, %v3298, 0
      %v3588 = vsel %vm2955, %v3299, 0
      %3590 = vmatprep.subr.mxu0 0.0
      %3591 = vmatpush1.msra.mxu0 %v1705
      %3592 = vmatprep.subr.mxu0 0.0
      %3593 = vmatpush1.msra.mxu0 %v1710
      %3594 = vmatprep.subr.mxu0 0.0
      %3595 = vmatpush1.msra.mxu0 %v1715
      %3596 = vmatprep.subr.mxu0 0.0
      %3597 = vmatpush1.msra.mxu0 %v1720
      %3598 = vmatprep.subr.mxu0 0.0
      %3599 = vmatpush1.msra.mxu0 %v1725
      %3600 = vmatprep.subr.mxu0 0.0
      %3601 = vmatpush1.msra.mxu0 %v1730
      %3602 = vmatprep.subr.mxu0 0.0
      %3603 = vmatpush1.msra.mxu0 %v1735
      %3604 = vmatprep.subr.mxu0 0.0
      %3605 = vmatpush1.msra.mxu0 %v1740
      %3606 = vmatprep.subr.mxu0 0.0
      %3607 = vmatpush1.msra.mxu0 0.0
      %3608 = vmatprep.subr.mxu0 0.0
      %3609 = vmatpush1.msra.mxu0 0.0
      %3610 = vmatprep.subr.mxu0 0.0
      %3611 = vmatpush1.msra.mxu0 0.0
      %3612 = vmatprep.subr.mxu0 0.0
      %3613 = vmatpush1.msra.mxu0 0.0
      %3614 = vmatprep.subr.mxu0 0.0
      %3615 = vmatpush1.msra.mxu0 0.0
      %3616 = vmatprep.subr.mxu0 0.0
      %3617 = vmatpush1.msra.mxu0 0.0
      %3618 = vmatprep.subr.mxu0 0.0
      %3619 = vmatpush1.msra.mxu0 0.0
      %3620 = vmatprep.subr.mxu0 0.0
      %3621 = vmatpush1.msra.mxu0 0.0
      %3622 = vmatprep.subr.mxu0 0.0
      %3623 = vmatpush1.msra.mxu0 0.0
      %3624 = vmatprep.subr.mxu0 0.0
      %3625 = vmatpush1.msra.mxu0 0.0
      %3626 = vmatprep.subr.mxu0 0.0
      %3627 = vmatpush1.msra.mxu0 0.0
      %3628 = vmatprep.subr.mxu0 0.0
      %3629 = vmatpush1.msra.mxu0 0.0
      %3630 = vmatprep.subr.mxu0 0.0
      %3631 = vmatpush1.msra.mxu0 0.0
      %3632 = vmatprep.subr.mxu0 0.0
      %3633 = vmatpush1.msra.mxu0 0.0
      %3634 = vmatprep.subr.mxu0 0.0
      %3635 = vmatpush1.msra.mxu0 0.0
      %3636 = vmatprep.subr.mxu0 0.0
      %3637 = vmatpush1.msra.mxu0 0.0
      %3638 = vmatprep.subr.mxu0 0.0
      %3639 = vmatpush1.msra.mxu0 0.0
      %3640 = vmatprep.subr.mxu0 0.0
      %3641 = vmatpush1.msra.mxu0 0.0
      %3642 = vmatprep.subr.mxu0 0.0
      %3643 = vmatpush1.msra.mxu0 0.0
      %3644 = vmatprep.subr.mxu0 0.0
      %3645 = vmatpush1.msra.mxu0 0.0
      %3646 = vmatprep.subr.mxu0 0.0
      %3647 = vmatpush1.msra.mxu0 0.0
      %3648 = vmatprep.subr.mxu0 0.0
      %3649 = vmatpush1.msra.mxu0 0.0
      %3650 = vmatprep.subr.mxu0 0.0
      %3651 = vmatpush1.msra.mxu0 0.0
      %3652 = vmatprep.subr.mxu0 0.0
      %3653 = vmatpush1.msra.mxu0 0.0
      %3654 = vmatprep.mubr.f32.mxu0 0.0
      %3655 = vmatmul.mubr.f32.gmra.mrb[0].mxu0 %v3567
      %v3656 = vpop.f32.mrb[0].mxu0
      %v3657 = vadd.f32 0.0, %v3656
      %v3658 = vpop.f32.mrb[0].mxu0
      %3659 = vmatprep.mubr.f32.mxu0 0.0
      %3660 = vmatmul.mubr.f32.gmra.mrb[0].mxu0 %v3570
      %v3661 = vpop.f32.mrb[0].mxu0
      %v3662 = vadd.f32 0.0, %v3661
      %v3663 = vpop.f32.mrb[0].mxu0
      %3664 = vmatprep.mubr.f32.mxu0 0.0
      %3665 = vmatmul.mubr.f32.gmra.mrb[0].mxu0 %v3573
      %v3666 = vpop.f32.mrb[0].mxu0
      %v3667 = vadd.f32 0.0, %v3666
      %v3668 = vpop.f32.mrb[0].mxu0
      %3669 = vmatprep.mubr.f32.mxu0 0.0
      %3670 = vmatmul.mubr.f32.gmra.mrb[0].mxu0 %v3576
      %v3671 = vpop.f32.mrb[0].mxu0
      %v3672 = vadd.f32 0.0, %v3671
      %v3673 = vpop.f32.mrb[0].mxu0
      %3674 = vmatprep.mubr.f32.mxu0 0.0
      %3675 = vmatmul.mubr.f32.gmra.mrb[0].mxu0 %v3579
      %v3676 = vpop.f32.mrb[0].mxu0
      %v3677 = vadd.f32 0.0, %v3676
      %v3678 = vpop.f32.mrb[0].mxu0
      %3679 = vmatprep.mubr.f32.mxu0 0.0
      %3680 = vmatmul.mubr.f32.gmra.mrb[0].mxu0 %v3582
      %v3681 = vpop.f32.mrb[0].mxu0
      %v3682 = vadd.f32 0.0, %v3681
      %v3683 = vpop.f32.mrb[0].mxu0
      %3684 = vmatprep.mubr.f32.mxu0 0.0
      %3685 = vmatmul.mubr.f32.gmra.mrb[0].mxu0 %v3585
      %v3686 = vpop.f32.mrb[0].mxu0
      %v3687 = vadd.f32 0.0, %v3686
      %v3688 = vpop.f32.mrb[0].mxu0
      %3689 = vmatprep.mubr.f32.mxu0 0.0
      %3690 = vmatmul.mubr.f32.gmra.mrb[0].mxu0 %v3588
      %v3691 = vpop.f32.mrb[0].mxu0
      %v3692 = vadd.f32 0.0, %v3691
      %v3693 = vpop.f32.mrb[0].mxu0
      %3694 = vdwg.mxu0
      %v3696 = vsel %vm2955, %v3300, 0
      %v3699 = vsel %vm2955, %v3301, 0
      %v3702 = vsel %vm2955, %v3302, 0
      %v3705 = vsel %vm2955, %v3303, 0
      %v3708 = vsel %vm2955, %v3304, 0
      %v3711 = vsel %vm2955, %v3305, 0
      %v3714 = vsel %vm2955, %v3306, 0
      %v3717 = vsel %vm2955, %v3307, 0
      %3719 = vmatprep.subr.mxu0 0.0
      %3720 = vmatpush1.msra.mxu0 %v1810
      %3721 = vmatprep.subr.mxu0 0.0
      %3722 = vmatpush1.msra.mxu0 %v1815
      %3723 = vmatprep.subr.mxu0 0.0
      %3724 = vmatpush1.msra.mxu0 %v1820
      %3725 = vmatprep.subr.mxu0 0.0
      %3726 = vmatpush1.msra.mxu0 %v1825
      %3727 = vmatprep.subr.mxu0 0.0
      %3728 = vmatpush1.msra.mxu0 %v1830
      %3729 = vmatprep.subr.mxu0 0.0
      %3730 = vmatpush1.msra.mxu0 %v1835
      %3731 = vmatprep.subr.mxu0 0.0
      %3732 = vmatpush1.msra.mxu0 %v1840
      %3733 = vmatprep.subr.mxu0 0.0
      %3734 = vmatpush1.msra.mxu0 %v1845
      %3735 = vmatprep.subr.mxu0 0.0
      %3736 = vmatpush1.msra.mxu0 0.0
      %3737 = vmatprep.subr.mxu0 0.0
      %3738 = vmatpush1.msra.mxu0 0.0
      %3739 = vmatprep.subr.mxu0 0.0
      %3740 = vmatpush1.msra.mxu0 0.0
      %3741 = vmatprep.subr.mxu0 0.0
      %3742 = vmatpush1.msra.mxu0 0.0
      %3743 = vmatprep.subr.mxu0 0.0
      %3744 = vmatpush1.msra.mxu0 0.0
      %3745 = vmatprep.subr.mxu0 0.0
      %3746 = vmatpush1.msra.mxu0 0.0
      %3747 = vmatprep.subr.mxu0 0.0
      %3748 = vmatpush1.msra.mxu0 0.0
      %3749 = vmatprep.subr.mxu0 0.0
      %3750 = vmatpush1.msra.mxu0 0.0
      %3751 = vmatprep.subr.mxu0 0.0
      %3752 = vmatpush1.msra.mxu0 0.0
      %3753 = vmatprep.subr.mxu0 0.0
      %3754 = vmatpush1.msra.mxu0 0.0
      %3755 = vmatprep.subr.mxu0 0.0
      %3756 = vmatpush1.msra.mxu0 0.0
      %3757 = vmatprep.subr.mxu0 0.0
      %3758 = vmatpush1.msra.mxu0 0.0
      %3759 = vmatprep.subr.mxu0 0.0
      %3760 = vmatpush1.msra.mxu0 0.0
      %3761 = vmatprep.subr.mxu0 0.0
      %3762 = vmatpush1.msra.mxu0 0.0
      %3763 = vmatprep.subr.mxu0 0.0
      %3764 = vmatpush1.msra.mxu0 0.0
      %3765 = vmatprep.subr.mxu0 0.0
      %3766 = vmatpush1.msra.mxu0 0.0
      %3767 = vmatprep.subr.mxu0 0.0
      %3768 = vmatpush1.msra.mxu0 0.0
      %3769 = vmatprep.subr.mxu0 0.0
      %3770 = vmatpush1.msra.mxu0 0.0
      %3771 = vmatprep.subr.mxu0 0.0
      %3772 = vmatpush1.msra.mxu0 0.0
      %3773 = vmatprep.subr.mxu0 0.0
      %3774 = vmatpush1.msra.mxu0 0.0
      %3775 = vmatprep.subr.mxu0 0.0
      %3776 = vmatpush1.msra.mxu0 0.0
      %3777 = vmatprep.subr.mxu0 0.0
      %3778 = vmatpush1.msra.mxu0 0.0
      %3779 = vmatprep.subr.mxu0 0.0
      %3780 = vmatpush1.msra.mxu0 0.0
      %3781 = vmatprep.subr.mxu0 0.0
      %3782 = vmatpush1.msra.mxu0 0.0
      %3783 = vmatprep.mubr.f32.mxu0 0.0
      %3784 = vmatmul.mubr.f32.gmra.mrb[0].mxu0 %v3696
      %v3785 = vpop.f32.mrb[0].mxu0
      %v3786 = vadd.f32 0.0, %v3785
      %v3787 = vpop.f32.mrb[0].mxu0
      %3788 = vmatprep.mubr.f32.mxu0 0.0
      %3789 = vmatmul.mubr.f32.gmra.mrb[0].mxu0 %v3699
      %v3790 = vpop.f32.mrb[0].mxu0
      %v3791 = vadd.f32 0.0, %v3790
      %v3792 = vpop.f32.mrb[0].mxu0
      %3793 = vmatprep.mubr.f32.mxu0 0.0
      %3794 = vmatmul.mubr.f32.gmra.mrb[0].mxu0 %v3702
      %v3795 = vpop.f32.mrb[0].mxu0
      %v3796 = vadd.f32 0.0, %v3795
      %v3797 = vpop.f32.mrb[0].mxu0
      %3798 = vmatprep.mubr.f32.mxu0 0.0
      %3799 = vmatmul.mubr.f32.gmra.mrb[0].mxu0 %v3705
      %v3800 = vpop.f32.mrb[0].mxu0
      %v3801 = vadd.f32 0.0, %v3800
      %v3802 = vpop.f32.mrb[0].mxu0
      %3803 = vmatprep.mubr.f32.mxu0 0.0
      %3804 = vmatmul.mubr.f32.gmra.mrb[0].mxu0 %v3708
      %v3805 = vpop.f32.mrb[0].mxu0
      %v3806 = vadd.f32 0.0, %v3805
      %v3807 = vpop.f32.mrb[0].mxu0
      %3808 = vmatprep.mubr.f32.mxu0 0.0
      %3809 = vmatmul.mubr.f32.gmra.mrb[0].mxu0 %v3711
      %v3810 = vpop.f32.mrb[0].mxu0
      %v3811 = vadd.f32 0.0, %v3810
      %v3812 = vpop.f32.mrb[0].mxu0
      %3813 = vmatprep.mubr.f32.mxu0 0.0
      %3814 = vmatmul.mubr.f32.gmra.mrb[0].mxu0 %v3714
      %v3815 = vpop.f32.mrb[0].mxu0
      %v3816 = vadd.f32 0.0, %v3815
      %v3817 = vpop.f32.mrb[0].mxu0
      %3818 = vmatprep.mubr.f32.mxu0 0.0
      %3819 = vmatmul.mubr.f32.gmra.mrb[0].mxu0 %v3717
      %v3820 = vpop.f32.mrb[0].mxu0
      %v3821 = vadd.f32 0.0, %v3820
      %v3822 = vpop.f32.mrb[0].mxu0
      %3823 = vdwg.mxu0
      %3824 = vmatprep.subr.mxu0 0.0
      %3825 = vmatpush1.msra.mxu0 %v1948
      %3826 = vmatprep.subr.mxu0 0.0
      %3827 = vmatpush1.msra.mxu0 %v1953
      %3828 = vmatprep.subr.mxu0 0.0
      %3829 = vmatpush1.msra.mxu0 %v1958
      %3830 = vmatprep.subr.mxu0 0.0
      %3831 = vmatpush1.msra.mxu0 %v1963
      %3832 = vmatprep.subr.mxu0 0.0
      %3833 = vmatpush1.msra.mxu0 %v1968
      %3834 = vmatprep.subr.mxu0 0.0
      %3835 = vmatpush1.msra.mxu0 %v1973
      %3836 = vmatprep.subr.mxu0 0.0
      %3837 = vmatpush1.msra.mxu0 %v1978
      %3838 = vmatprep.subr.mxu0 0.0
      %3839 = vmatpush1.msra.mxu0 %v1983
      %3840 = vmatprep.subr.mxu0 0.0
      %3841 = vmatpush1.msra.mxu0 0.0
      %3842 = vmatprep.subr.mxu0 0.0
      %3843 = vmatpush1.msra.mxu0 0.0
      %3844 = vmatprep.subr.mxu0 0.0
      %3845 = vmatpush1.msra.mxu0 0.0
      %3846 = vmatprep.subr.mxu0 0.0
      %3847 = vmatpush1.msra.mxu0 0.0
      %3848 = vmatprep.subr.mxu0 0.0
      %3849 = vmatpush1.msra.mxu0 0.0
      %3850 = vmatprep.subr.mxu0 0.0
      %3851 = vmatpush1.msra.mxu0 0.0
      %3852 = vmatprep.subr.mxu0 0.0
      %3853 = vmatpush1.msra.mxu0 0.0
      %3854 = vmatprep.subr.mxu0 0.0
      %3855 = vmatpush1.msra.mxu0 0.0
      %3856 = vmatprep.subr.mxu0 0.0
      %3857 = vmatpush1.msra.mxu0 0.0
      %3858 = vmatprep.subr.mxu0 0.0
      %3859 = vmatpush1.msra.mxu0 0.0
      %3860 = vmatprep.subr.mxu0 0.0
      %3861 = vmatpush1.msra.mxu0 0.0
      %3862 = vmatprep.subr.mxu0 0.0
      %3863 = vmatpush1.msra.mxu0 0.0
      %3864 = vmatprep.subr.mxu0 0.0
      %3865 = vmatpush1.msra.mxu0 0.0
      %3866 = vmatprep.subr.mxu0 0.0
      %3867 = vmatpush1.msra.mxu0 0.0
      %3868 = vmatprep.subr.mxu0 0.0
      %3869 = vmatpush1.msra.mxu0 0.0
      %3870 = vmatprep.subr.mxu0 0.0
      %3871 = vmatpush1.msra.mxu0 0.0
      %3872 = vmatprep.subr.mxu0 0.0
      %3873 = vmatpush1.msra.mxu0 0.0
      %3874 = vmatprep.subr.mxu0 0.0
      %3875 = vmatpush1.msra.mxu0 0.0
      %3876 = vmatprep.subr.mxu0 0.0
      %3877 = vmatpush1.msra.mxu0 0.0
      %3878 = vmatprep.subr.mxu0 0.0
      %3879 = vmatpush1.msra.mxu0 0.0
      %3880 = vmatprep.subr.mxu0 0.0
      %3881 = vmatpush1.msra.mxu0 0.0
      %3882 = vmatprep.subr.mxu0 0.0
      %3883 = vmatpush1.msra.mxu0 0.0
      %3884 = vmatprep.subr.mxu0 0.0
      %3885 = vmatpush1.msra.mxu0 0.0
      %3886 = vmatprep.subr.mxu0 0.0
      %3887 = vmatpush1.msra.mxu0 0.0
      %3888 = vmatprep.mubr.f32.mxu0 0.0
      %3889 = vmatmul.mubr.f32.gmra.mrb[0].mxu0 %v3309
      %v3890 = vpop.f32.mrb[0].mxu0
      %v3891 = vadd.f32 0.0, %v3890
      %v3892 = vpop.f32.mrb[0].mxu0
      %3893 = vmatprep.mubr.f32.mxu0 0.0
      %3894 = vmatmul.mubr.f32.gmra.mrb[0].mxu0 %v3312
      %v3895 = vpop.f32.mrb[0].mxu0
      %v3896 = vadd.f32 0.0, %v3895
      %v3897 = vpop.f32.mrb[0].mxu0
      %3898 = vmatprep.mubr.f32.mxu0 0.0
      %3899 = vmatmul.mubr.f32.gmra.mrb[0].mxu0 %v3315
      %v3900 = vpop.f32.mrb[0].mxu0
      %v3901 = vadd.f32 0.0, %v3900
      %v3902 = vpop.f32.mrb[0].mxu0
      %3903 = vmatprep.mubr.f32.mxu0 0.0
      %3904 = vmatmul.mubr.f32.gmra.mrb[0].mxu0 %v3318
      %v3905 = vpop.f32.mrb[0].mxu0
      %v3906 = vadd.f32 0.0, %v3905
      %v3907 = vpop.f32.mrb[0].mxu0
      %3908 = vmatprep.mubr.f32.mxu0 0.0
      %3909 = vmatmul.mubr.f32.gmra.mrb[0].mxu0 %v3321
      %v3910 = vpop.f32.mrb[0].mxu0
      %v3911 = vadd.f32 0.0, %v3910
      %v3912 = vpop.f32.mrb[0].mxu0
      %3913 = vmatprep.mubr.f32.mxu0 0.0
      %3914 = vmatmul.mubr.f32.gmra.mrb[0].mxu0 %v3324
      %v3915 = vpop.f32.mrb[0].mxu0
      %v3916 = vadd.f32 0.0, %v3915
      %v3917 = vpop.f32.mrb[0].mxu0
      %3918 = vmatprep.mubr.f32.mxu0 0.0
      %3919 = vmatmul.mubr.f32.gmra.mrb[0].mxu0 %v3327
      %v3920 = vpop.f32.mrb[0].mxu0
      %v3921 = vadd.f32 0.0, %v3920
      %v3922 = vpop.f32.mrb[0].mxu0
      %3923 = vmatprep.mubr.f32.mxu0 0.0
      %3924 = vmatmul.mubr.f32.gmra.mrb[0].mxu0 %v3330
      %v3925 = vpop.f32.mrb[0].mxu0
      %v3926 = vadd.f32 0.0, %v3925
      %v3927 = vpop.f32.mrb[0].mxu0
      %3928 = vdwg.mxu0
      %3929 = vmatprep.subr.mxu0 0.0
      %3930 = vmatpush1.msra.mxu0 %v2056
      %3931 = vmatprep.subr.mxu0 0.0
      %3932 = vmatpush1.msra.mxu0 %v2061
      %3933 = vmatprep.subr.mxu0 0.0
      %3934 = vmatpush1.msra.mxu0 %v2066
      %3935 = vmatprep.subr.mxu0 0.0
      %3936 = vmatpush1.msra.mxu0 %v2071
      %3937 = vmatprep.subr.mxu0 0.0
      %3938 = vmatpush1.msra.mxu0 %v2076
      %3939 = vmatprep.subr.mxu0 0.0
      %3940 = vmatpush1.msra.mxu0 %v2081
      %3941 = vmatprep.subr.mxu0 0.0
      %3942 = vmatpush1.msra.mxu0 %v2086
      %3943 = vmatprep.subr.mxu0 0.0
      %3944 = vmatpush1.msra.mxu0 %v2091
      %3945 = vmatprep.subr.mxu0 0.0
      %3946 = vmatpush1.msra.mxu0 0.0
      %3947 = vmatprep.subr.mxu0 0.0
      %3948 = vmatpush1.msra.mxu0 0.0
      %3949 = vmatprep.subr.mxu0 0.0
      %3950 = vmatpush1.msra.mxu0 0.0
      %3951 = vmatprep.subr.mxu0 0.0
      %3952 = vmatpush1.msra.mxu0 0.0
      %3953 = vmatprep.subr.mxu0 0.0
      %3954 = vmatpush1.msra.mxu0 0.0
      %3955 = vmatprep.subr.mxu0 0.0
      %3956 = vmatpush1.msra.mxu0 0.0
      %3957 = vmatprep.subr.mxu0 0.0
      %3958 = vmatpush1.msra.mxu0 0.0
      %3959 = vmatprep.subr.mxu0 0.0
      %3960 = vmatpush1.msra.mxu0 0.0
      %3961 = vmatprep.subr.mxu0 0.0
      %3962 = vmatpush1.msra.mxu0 0.0
      %3963 = vmatprep.subr.mxu0 0.0
      %3964 = vmatpush1.msra.mxu0 0.0
      %3965 = vmatprep.subr.mxu0 0.0
      %3966 = vmatpush1.msra.mxu0 0.0
      %3967 = vmatprep.subr.mxu0 0.0
      %3968 = vmatpush1.msra.mxu0 0.0
      %3969 = vmatprep.subr.mxu0 0.0
      %3970 = vmatpush1.msra.mxu0 0.0
      %3971 = vmatprep.subr.mxu0 0.0
      %3972 = vmatpush1.msra.mxu0 0.0
      %3973 = vmatprep.subr.mxu0 0.0
      %3974 = vmatpush1.msra.mxu0 0.0
      %3975 = vmatprep.subr.mxu0 0.0
      %3976 = vmatpush1.msra.mxu0 0.0
      %3977 = vmatprep.subr.mxu0 0.0
      %3978 = vmatpush1.msra.mxu0 0.0
      %3979 = vmatprep.subr.mxu0 0.0
      %3980 = vmatpush1.msra.mxu0 0.0
      %3981 = vmatprep.subr.mxu0 0.0
      %3982 = vmatpush1.msra.mxu0 0.0
      %3983 = vmatprep.subr.mxu0 0.0
      %3984 = vmatpush1.msra.mxu0 0.0
      %3985 = vmatprep.subr.mxu0 0.0
      %3986 = vmatpush1.msra.mxu0 0.0
      %3987 = vmatprep.subr.mxu0 0.0
      %3988 = vmatpush1.msra.mxu0 0.0
      %3989 = vmatprep.subr.mxu0 0.0
      %3990 = vmatpush1.msra.mxu0 0.0
      %3991 = vmatprep.subr.mxu0 0.0
      %3992 = vmatpush1.msra.mxu0 0.0
      %3993 = vmatprep.mubr.f32.mxu0 0.0
      %3994 = vmatmul.mubr.f32.gmra.mrb[0].mxu0 %v3438
      %v3995 = vpop.f32.mrb[0].mxu0
      %v3996 = vadd.f32 0.0, %v3995
      %v3997 = vpop.f32.mrb[0].mxu0
      %3998 = vmatprep.mubr.f32.mxu0 0.0
      %3999 = vmatmul.mubr.f32.gmra.mrb[0].mxu0 %v3441
      %v4000 = vpop.f32.mrb[0].mxu0
      %v4001 = vadd.f32 0.0, %v4000
      %v4002 = vpop.f32.mrb[0].mxu0
      %4003 = vmatprep.mubr.f32.mxu0 0.0
      %4004 = vmatmul.mubr.f32.gmra.mrb[0].mxu0 %v3444
      %v4005 = vpop.f32.mrb[0].mxu0
      %v4006 = vadd.f32 0.0, %v4005
      %v4007 = vpop.f32.mrb[0].mxu0
      %4008 = vmatprep.mubr.f32.mxu0 0.0
      %4009 = vmatmul.mubr.f32.gmra.mrb[0].mxu0 %v3447
      %v4010 = vpop.f32.mrb[0].mxu0
      %v4011 = vadd.f32 0.0, %v4010
      %v4012 = vpop.f32.mrb[0].mxu0
      %4013 = vmatprep.mubr.f32.mxu0 0.0
      %4014 = vmatmul.mubr.f32.gmra.mrb[0].mxu0 %v3450
      %v4015 = vpop.f32.mrb[0].mxu0
      %v4016 = vadd.f32 0.0, %v4015
      %v4017 = vpop.f32.mrb[0].mxu0
      %4018 = vmatprep.mubr.f32.mxu0 0.0
      %4019 = vmatmul.mubr.f32.gmra.mrb[0].mxu0 %v3453
      %v4020 = vpop.f32.mrb[0].mxu0
      %v4021 = vadd.f32 0.0, %v4020
      %v4022 = vpop.f32.mrb[0].mxu0
      %4023 = vmatprep.mubr.f32.mxu0 0.0
      %4024 = vmatmul.mubr.f32.gmra.mrb[0].mxu0 %v3456
      %v4025 = vpop.f32.mrb[0].mxu0
      %v4026 = vadd.f32 0.0, %v4025
      %v4027 = vpop.f32.mrb[0].mxu0
      %4028 = vmatprep.mubr.f32.mxu0 0.0
      %4029 = vmatmul.mubr.f32.gmra.mrb[0].mxu0 %v3459
      %v4030 = vpop.f32.mrb[0].mxu0
      %v4031 = vadd.f32 0.0, %v4030
      %v4032 = vpop.f32.mrb[0].mxu0
      %4033 = vdwg.mxu0
      %4034 = vmatprep.subr.mxu0 0.0
      %4035 = vmatpush1.msra.mxu0 %v2164
      %4036 = vmatprep.subr.mxu0 0.0
      %4037 = vmatpush1.msra.mxu0 %v2169
      %4038 = vmatprep.subr.mxu0 0.0
      %4039 = vmatpush1.msra.mxu0 %v2174
      %4040 = vmatprep.subr.mxu0 0.0
      %4041 = vmatpush1.msra.mxu0 %v2179
      %4042 = vmatprep.subr.mxu0 0.0
      %4043 = vmatpush1.msra.mxu0 %v2184
      %4044 = vmatprep.subr.mxu0 0.0
      %4045 = vmatpush1.msra.mxu0 %v2189
      %4046 = vmatprep.subr.mxu0 0.0
      %4047 = vmatpush1.msra.mxu0 %v2194
      %4048 = vmatprep.subr.mxu0 0.0
      %4049 = vmatpush1.msra.mxu0 %v2199
      %4050 = vmatprep.subr.mxu0 0.0
      %4051 = vmatpush1.msra.mxu0 0.0
      %4052 = vmatprep.subr.mxu0 0.0
      %4053 = vmatpush1.msra.mxu0 0.0
      %4054 = vmatprep.subr.mxu0 0.0
      %4055 = vmatpush1.msra.mxu0 0.0
      %4056 = vmatprep.subr.mxu0 0.0
      %4057 = vmatpush1.msra.mxu0 0.0
      %4058 = vmatprep.subr.mxu0 0.0
      %4059 = vmatpush1.msra.mxu0 0.0
      %4060 = vmatprep.subr.mxu0 0.0
      %4061 = vmatpush1.msra.mxu0 0.0
      %4062 = vmatprep.subr.mxu0 0.0
      %4063 = vmatpush1.msra.mxu0 0.0
      %4064 = vmatprep.subr.mxu0 0.0
      %4065 = vmatpush1.msra.mxu0 0.0
      %4066 = vmatprep.subr.mxu0 0.0
      %4067 = vmatpush1.msra.mxu0 0.0
      %4068 = vmatprep.subr.mxu0 0.0
      %4069 = vmatpush1.msra.mxu0 0.0
      %4070 = vmatprep.subr.mxu0 0.0
      %4071 = vmatpush1.msra.mxu0 0.0
      %4072 = vmatprep.subr.mxu0 0.0
      %4073 = vmatpush1.msra.mxu0 0.0
      %4074 = vmatprep.subr.mxu0 0.0
      %4075 = vmatpush1.msra.mxu0 0.0
      %4076 = vmatprep.subr.mxu0 0.0
      %4077 = vmatpush1.msra.mxu0 0.0
      %4078 = vmatprep.subr.mxu0 0.0
      %4079 = vmatpush1.msra.mxu0 0.0
      %4080 = vmatprep.subr.mxu0 0.0
      %4081 = vmatpush1.msra.mxu0 0.0
      %4082 = vmatprep.subr.mxu0 0.0
      %4083 = vmatpush1.msra.mxu0 0.0
      %4084 = vmatprep.subr.mxu0 0.0
      %4085 = vmatpush1.msra.mxu0 0.0
      %4086 = vmatprep.subr.mxu0 0.0
      %4087 = vmatpush1.msra.mxu0 0.0
      %4088 = vmatprep.subr.mxu0 0.0
      %4089 = vmatpush1.msra.mxu0 0.0
      %4090 = vmatprep.subr.mxu0 0.0
      %4091 = vmatpush1.msra.mxu0 0.0
      %4092 = vmatprep.subr.mxu0 0.0
      %4093 = vmatpush1.msra.mxu0 0.0
      %4094 = vmatprep.subr.mxu0 0.0
      %4095 = vmatpush1.msra.mxu0 0.0
      %4096 = vmatprep.subr.mxu0 0.0
      %4097 = vmatpush1.msra.mxu0 0.0
      %4098 = vmatprep.mubr.f32.mxu0 0.0
      %4099 = vmatmul.mubr.f32.gmra.mrb[0].mxu0 %v3567
      %v4100 = vpop.f32.mrb[0].mxu0
      %v4101 = vadd.f32 0.0, %v4100
      %v4102 = vpop.f32.mrb[0].mxu0
      %4103 = vmatprep.mubr.f32.mxu0 0.0
      %4104 = vmatmul.mubr.f32.gmra.mrb[0].mxu0 %v3570
      %v4105 = vpop.f32.mrb[0].mxu0
      %v4106 = vadd.f32 0.0, %v4105
      %v4107 = vpop.f32.mrb[0].mxu0
      %4108 = vmatprep.mubr.f32.mxu0 0.0
      %4109 = vmatmul.mubr.f32.gmra.mrb[0].mxu0 %v3573
      %v4110 = vpop.f32.mrb[0].mxu0
      %v4111 = vadd.f32 0.0, %v4110
      %v4112 = vpop.f32.mrb[0].mxu0
      %4113 = vmatprep.mubr.f32.mxu0 0.0
      %4114 = vmatmul.mubr.f32.gmra.mrb[0].mxu0 %v3576
      %v4115 = vpop.f32.mrb[0].mxu0
      %v4116 = vadd.f32 0.0, %v4115
      %v4117 = vpop.f32.mrb[0].mxu0
      %4118 = vmatprep.mubr.f32.mxu0 0.0
      %4119 = vmatmul.mubr.f32.gmra.mrb[0].mxu0 %v3579
      %v4120 = vpop.f32.mrb[0].mxu0
      %v4121 = vadd.f32 0.0, %v4120
      %v4122 = vpop.f32.mrb[0].mxu0
      %4123 = vmatprep.mubr.f32.mxu0 0.0
      %4124 = vmatmul.mubr.f32.gmra.mrb[0].mxu0 %v3582
      %v4125 = vpop.f32.mrb[0].mxu0
      %v4126 = vadd.f32 0.0, %v4125
      %v4127 = vpop.f32.mrb[0].mxu0
      %4128 = vmatprep.mubr.f32.mxu0 0.0
      %4129 = vmatmul.mubr.f32.gmra.mrb[0].mxu0 %v3585
      %v4130 = vpop.f32.mrb[0].mxu0
      %v4131 = vadd.f32 0.0, %v4130
      %v4132 = vpop.f32.mrb[0].mxu0
      %4133 = vmatprep.mubr.f32.mxu0 0.0
      %4134 = vmatmul.mubr.f32.gmra.mrb[0].mxu0 %v3588
      %v4135 = vpop.f32.mrb[0].mxu0
      %v4136 = vadd.f32 0.0, %v4135
      %v4137 = vpop.f32.mrb[0].mxu0
      %4138 = vdwg.mxu0
      %4139 = vmatprep.subr.mxu0 0.0
      %4140 = vmatpush1.msra.mxu0 %v2272
      %4141 = vmatprep.subr.mxu0 0.0
      %4142 = vmatpush1.msra.mxu0 %v2277
      %4143 = vmatprep.subr.mxu0 0.0
      %4144 = vmatpush1.msra.mxu0 %v2282
      %4145 = vmatprep.subr.mxu0 0.0
      %4146 = vmatpush1.msra.mxu0 %v2287
      %4147 = vmatprep.subr.mxu0 0.0
      %4148 = vmatpush1.msra.mxu0 %v2292
      %4149 = vmatprep.subr.mxu0 0.0
      %4150 = vmatpush1.msra.mxu0 %v2297
      %4151 = vmatprep.subr.mxu0 0.0
      %4152 = vmatpush1.msra.mxu0 %v2302
      %4153 = vmatprep.subr.mxu0 0.0
      %4154 = vmatpush1.msra.mxu0 %v2307
      %4155 = vmatprep.subr.mxu0 0.0
      %4156 = vmatpush1.msra.mxu0 0.0
      %4157 = vmatprep.subr.mxu0 0.0
      %4158 = vmatpush1.msra.mxu0 0.0
      %4159 = vmatprep.subr.mxu0 0.0
      %4160 = vmatpush1.msra.mxu0 0.0
      %4161 = vmatprep.subr.mxu0 0.0
      %4162 = vmatpush1.msra.mxu0 0.0
      %4163 = vmatprep.subr.mxu0 0.0
      %4164 = vmatpush1.msra.mxu0 0.0
      %4165 = vmatprep.subr.mxu0 0.0
      %4166 = vmatpush1.msra.mxu0 0.0
      %4167 = vmatprep.subr.mxu0 0.0
      %4168 = vmatpush1.msra.mxu0 0.0
      %4169 = vmatprep.subr.mxu0 0.0
      %4170 = vmatpush1.msra.mxu0 0.0
      %4171 = vmatprep.subr.mxu0 0.0
      %4172 = vmatpush1.msra.mxu0 0.0
      %4173 = vmatprep.subr.mxu0 0.0
      %4174 = vmatpush1.msra.mxu0 0.0
      %4175 = vmatprep.subr.mxu0 0.0
      %4176 = vmatpush1.msra.mxu0 0.0
      %4177 = vmatprep.subr.mxu0 0.0
      %4178 = vmatpush1.msra.mxu0 0.0
      %4179 = vmatprep.subr.mxu0 0.0
      %4180 = vmatpush1.msra.mxu0 0.0
      %4181 = vmatprep.subr.mxu0 0.0
      %4182 = vmatpush1.msra.mxu0 0.0
      %4183 = vmatprep.subr.mxu0 0.0
      %4184 = vmatpush1.msra.mxu0 0.0
      %4185 = vmatprep.subr.mxu0 0.0
      %4186 = vmatpush1.msra.mxu0 0.0
      %4187 = vmatprep.subr.mxu0 0.0
      %4188 = vmatpush1.msra.mxu0 0.0
      %4189 = vmatprep.subr.mxu0 0.0
      %4190 = vmatpush1.msra.mxu0 0.0
      %4191 = vmatprep.subr.mxu0 0.0
      %4192 = vmatpush1.msra.mxu0 0.0
      %4193 = vmatprep.subr.mxu0 0.0
      %4194 = vmatpush1.msra.mxu0 0.0
      %4195 = vmatprep.subr.mxu0 0.0
      %4196 = vmatpush1.msra.mxu0 0.0
      %4197 = vmatprep.subr.mxu0 0.0
      %4198 = vmatpush1.msra.mxu0 0.0
      %4199 = vmatprep.subr.mxu0 0.0
      %4200 = vmatpush1.msra.mxu0 0.0
      %4201 = vmatprep.subr.mxu0 0.0
      %4202 = vmatpush1.msra.mxu0 0.0
      %4203 = vmatprep.mubr.f32.mxu0 0.0
      %4204 = vmatmul.mubr.f32.gmra.mrb[0].mxu0 %v3696
      %v4205 = vpop.f32.mrb[0].mxu0
      %v4206 = vadd.f32 0.0, %v4205
      %v4207 = vpop.f32.mrb[0].mxu0
      %4208 = vmatprep.mubr.f32.mxu0 0.0
      %4209 = vmatmul.mubr.f32.gmra.mrb[0].mxu0 %v3699
      %v4210 = vpop.f32.mrb[0].mxu0
      %v4211 = vadd.f32 0.0, %v4210
      %v4212 = vpop.f32.mrb[0].mxu0
      %4213 = vmatprep.mubr.f32.mxu0 0.0
      %4214 = vmatmul.mubr.f32.gmra.mrb[0].mxu0 %v3702
      %v4215 = vpop.f32.mrb[0].mxu0
      %v4216 = vadd.f32 0.0, %v4215
      %v4217 = vpop.f32.mrb[0].mxu0
      %4218 = vmatprep.mubr.f32.mxu0 0.0
      %4219 = vmatmul.mubr.f32.gmra.mrb[0].mxu0 %v3705
      %v4220 = vpop.f32.mrb[0].mxu0
      %v4221 = vadd.f32 0.0, %v4220
      %v4222 = vpop.f32.mrb[0].mxu0
      %4223 = vmatprep.mubr.f32.mxu0 0.0
      %4224 = vmatmul.mubr.f32.gmra.mrb[0].mxu0 %v3708
      %v4225 = vpop.f32.mrb[0].mxu0
      %v4226 = vadd.f32 0.0, %v4225
      %v4227 = vpop.f32.mrb[0].mxu0
      %4228 = vmatprep.mubr.f32.mxu0 0.0
      %4229 = vmatmul.mubr.f32.gmra.mrb[0].mxu0 %v3711
      %v4230 = vpop.f32.mrb[0].mxu0
      %v4231 = vadd.f32 0.0, %v4230
      %v4232 = vpop.f32.mrb[0].mxu0
      %4233 = vmatprep.mubr.f32.mxu0 0.0
      %4234 = vmatmul.mubr.f32.gmra.mrb[0].mxu0 %v3714
      %v4235 = vpop.f32.mrb[0].mxu0
      %v4236 = vadd.f32 0.0, %v4235
      %v4237 = vpop.f32.mrb[0].mxu0
      %4238 = vmatprep.mubr.f32.mxu0 0.0
      %4239 = vmatmul.mubr.f32.gmra.mrb[0].mxu0 %v3717
      %v4240 = vpop.f32.mrb[0].mxu0
      %v4241 = vadd.f32 0.0, %v4240
      %v4242 = vpop.f32.mrb[0].mxu0
      %4243 = vdwg.mxu0
      %v4244 = vld [vmem:[%s7] sm:$0xff]
      %v4245 = vld [vmem:[%s7 + $0x8] sm:$0xff]
      %v4246 = vld [vmem:[%s7 + $0x10] sm:$0xff]
      %v4247 = vld [vmem:[%s7 + $0x18] sm:$0xff]
      %v4249 = vsel %vm2310, %v3399, 0
      %v4252 = vsel %vm2310, %v3404, 0
      %v4255 = vsel %vm2310, %v3409, 0
      %v4258 = vsel %vm2310, %v3414, 0
      %v4261 = vsel %vm2310, %v3419, 0
      %v4264 = vsel %vm2310, %v3424, 0
      %v4267 = vsel %vm2310, %v3429, 0
      %v4270 = vsel %vm2310, %v3434, 0
      %4272 = vmatprep.subr.mxu0 0.0
      %4273 = vmatpush1.msra.mxu0 %v4244
      %4274 = vmatprep.subr.mxu0 0.0
      %4275 = vmatpush1.msra.mxu0 0.0
      %4276 = vmatprep.subr.mxu0 0.0
      %4277 = vmatpush1.msra.mxu0 0.0
      %4278 = vmatprep.subr.mxu0 0.0
      %4279 = vmatpush1.msra.mxu0 0.0
      %4280 = vmatprep.subr.mxu0 0.0
      %4281 = vmatpush1.msra.mxu0 0.0
      %4282 = vmatprep.subr.mxu0 0.0
      %4283 = vmatpush1.msra.mxu0 0.0
      %4284 = vmatprep.subr.mxu0 0.0
      %4285 = vmatpush1.msra.mxu0 0.0
      %4286 = vmatprep.subr.mxu0 0.0
      %4287 = vmatpush1.msra.mxu0 0.0
      %4288 = vmatprep.subr.mxu0 0.0
      %4289 = vmatpush1.msra.mxu0 0.0
      %4290 = vmatprep.subr.mxu0 0.0
      %4291 = vmatpush1.msra.mxu0 0.0
      %4292 = vmatprep.subr.mxu0 0.0
      %4293 = vmatpush1.msra.mxu0 0.0
      %4294 = vmatprep.subr.mxu0 0.0
      %4295 = vmatpush1.msra.mxu0 0.0
      %4296 = vmatprep.subr.mxu0 0.0
      %4297 = vmatpush1.msra.mxu0 0.0
      %4298 = vmatprep.subr.mxu0 0.0
      %4299 = vmatpush1.msra.mxu0 0.0
      %4300 = vmatprep.subr.mxu0 0.0
      %4301 = vmatpush1.msra.mxu0 0.0
      %4302 = vmatprep.subr.mxu0 0.0
      %4303 = vmatpush1.msra.mxu0 0.0
      %4304 = vmatprep.subr.mxu0 0.0
      %4305 = vmatpush1.msra.mxu0 0.0
      %4306 = vmatprep.subr.mxu0 0.0
      %4307 = vmatpush1.msra.mxu0 0.0
      %4308 = vmatprep.subr.mxu0 0.0
      %4309 = vmatpush1.msra.mxu0 0.0
      %4310 = vmatprep.subr.mxu0 0.0
      %4311 = vmatpush1.msra.mxu0 0.0
      %4312 = vmatprep.subr.mxu0 0.0
      %4313 = vmatpush1.msra.mxu0 0.0
      %4314 = vmatprep.subr.mxu0 0.0
      %4315 = vmatpush1.msra.mxu0 0.0
      %4316 = vmatprep.subr.mxu0 0.0
      %4317 = vmatpush1.msra.mxu0 0.0
      %4318 = vmatprep.subr.mxu0 0.0
      %4319 = vmatpush1.msra.mxu0 0.0
      %4320 = vmatprep.subr.mxu0 0.0
      %4321 = vmatpush1.msra.mxu0 0.0
      %4322 = vmatprep.subr.mxu0 0.0
      %4323 = vmatpush1.msra.mxu0 0.0
      %4324 = vmatprep.subr.mxu0 0.0
      %4325 = vmatpush1.msra.mxu0 0.0
      %4326 = vmatprep.subr.mxu0 0.0
      %4327 = vmatpush1.msra.mxu0 0.0
      %4328 = vmatprep.subr.mxu0 0.0
      %4329 = vmatpush1.msra.mxu0 0.0
      %4330 = vmatprep.subr.mxu0 0.0
      %4331 = vmatpush1.msra.mxu0 0.0
      %4332 = vmatprep.subr.mxu0 0.0
      %4333 = vmatpush1.msra.mxu0 0.0
      %4334 = vmatprep.subr.mxu0 0.0
      %4335 = vmatpush1.msra.mxu0 0.0
      %4336 = vmatprep.mubr.f32.mxu0 0.0
      %4337 = vmatmul.mubr.f32.gmra.mrb[0].mxu0 %v4249
      %v4338 = vpop.f32.mrb[0].mxu0
      %v4339 = vadd.f32 0.0, %v4338
      %v4340 = vpop.f32.mrb[0].mxu0
      %4341 = vmatprep.mubr.f32.mxu0 0.0
      %4342 = vmatmul.mubr.f32.gmra.mrb[0].mxu0 %v4252
      %v4343 = vpop.f32.mrb[0].mxu0
      %v4344 = vadd.f32 0.0, %v4343
      %v4345 = vpop.f32.mrb[0].mxu0
      %4346 = vmatprep.mubr.f32.mxu0 0.0
      %4347 = vmatmul.mubr.f32.gmra.mrb[0].mxu0 %v4255
      %v4348 = vpop.f32.mrb[0].mxu0
      %v4349 = vadd.f32 0.0, %v4348
      %v4350 = vpop.f32.mrb[0].mxu0
      %4351 = vmatprep.mubr.f32.mxu0 0.0
      %4352 = vmatmul.mubr.f32.gmra.mrb[0].mxu0 %v4258
      %v4353 = vpop.f32.mrb[0].mxu0
      %v4354 = vadd.f32 0.0, %v4353
      %v4355 = vpop.f32.mrb[0].mxu0
      %4356 = vmatprep.mubr.f32.mxu0 0.0
      %4357 = vmatmul.mubr.f32.gmra.mrb[0].mxu0 %v4261
      %v4358 = vpop.f32.mrb[0].mxu0
      %v4359 = vadd.f32 0.0, %v4358
      %v4360 = vpop.f32.mrb[0].mxu0
      %4361 = vmatprep.mubr.f32.mxu0 0.0
      %4362 = vmatmul.mubr.f32.gmra.mrb[0].mxu0 %v4264
      %v4363 = vpop.f32.mrb[0].mxu0
      %v4364 = vadd.f32 0.0, %v4363
      %v4365 = vpop.f32.mrb[0].mxu0
      %4366 = vmatprep.mubr.f32.mxu0 0.0
      %4367 = vmatmul.mubr.f32.gmra.mrb[0].mxu0 %v4267
      %v4368 = vpop.f32.mrb[0].mxu0
      %v4369 = vadd.f32 0.0, %v4368
      %v4370 = vpop.f32.mrb[0].mxu0
      %4371 = vmatprep.mubr.f32.mxu0 0.0
      %4372 = vmatmul.mubr.f32.gmra.mrb[0].mxu0 %v4270
      %v4373 = vpop.f32.mrb[0].mxu0
      %v4374 = vadd.f32 0.0, %v4373
      %v4375 = vpop.f32.mrb[0].mxu0
      %4376 = vdwg.mxu0
      %v4378 = vsel %vm2310, %v3528, 0
      %v4381 = vsel %vm2310, %v3533, 0
      %v4384 = vsel %vm2310, %v3538, 0
      %v4387 = vsel %vm2310, %v3543, 0
      %v4390 = vsel %vm2310, %v3548, 0
      %v4393 = vsel %vm2310, %v3553, 0
      %v4396 = vsel %vm2310, %v3558, 0
      %v4399 = vsel %vm2310, %v3563, 0
      %4401 = vmatprep.subr.mxu0 0.0
      %4402 = vmatpush1.msra.mxu0 %v4245
      %4403 = vmatprep.subr.mxu0 0.0
      %4404 = vmatpush1.msra.mxu0 0.0
      %4405 = vmatprep.subr.mxu0 0.0
      %4406 = vmatpush1.msra.mxu0 0.0
      %4407 = vmatprep.subr.mxu0 0.0
      %4408 = vmatpush1.msra.mxu0 0.0
      %4409 = vmatprep.subr.mxu0 0.0
      %4410 = vmatpush1.msra.mxu0 0.0
      %4411 = vmatprep.subr.mxu0 0.0
      %4412 = vmatpush1.msra.mxu0 0.0
      %4413 = vmatprep.subr.mxu0 0.0
      %4414 = vmatpush1.msra.mxu0 0.0
      %4415 = vmatprep.subr.mxu0 0.0
      %4416 = vmatpush1.msra.mxu0 0.0
      %4417 = vmatprep.subr.mxu0 0.0
      %4418 = vmatpush1.msra.mxu0 0.0
      %4419 = vmatprep.subr.mxu0 0.0
      %4420 = vmatpush1.msra.mxu0 0.0
      %4421 = vmatprep.subr.mxu0 0.0
      %4422 = vmatpush1.msra.mxu0 0.0
      %4423 = vmatprep.subr.mxu0 0.0
      %4424 = vmatpush1.msra.mxu0 0.0
      %4425 = vmatprep.subr.mxu0 0.0
      %4426 = vmatpush1.msra.mxu0 0.0
      %4427 = vmatprep.subr.mxu0 0.0
      %4428 = vmatpush1.msra.mxu0 0.0
      %4429 = vmatprep.subr.mxu0 0.0
      %4430 = vmatpush1.msra.mxu0 0.0
      %4431 = vmatprep.subr.mxu0 0.0
      %4432 = vmatpush1.msra.mxu0 0.0
      %4433 = vmatprep.subr.mxu0 0.0
      %4434 = vmatpush1.msra.mxu0 0.0
      %4435 = vmatprep.subr.mxu0 0.0
      %4436 = vmatpush1.msra.mxu0 0.0
      %4437 = vmatprep.subr.mxu0 0.0
      %4438 = vmatpush1.msra.mxu0 0.0
      %4439 = vmatprep.subr.mxu0 0.0
      %4440 = vmatpush1.msra.mxu0 0.0
      %4441 = vmatprep.subr.mxu0 0.0
      %4442 = vmatpush1.msra.mxu0 0.0
      %4443 = vmatprep.subr.mxu0 0.0
      %4444 = vmatpush1.msra.mxu0 0.0
      %4445 = vmatprep.subr.mxu0 0.0
      %4446 = vmatpush1.msra.mxu0 0.0
      %4447 = vmatprep.subr.mxu0 0.0
      %4448 = vmatpush1.msra.mxu0 0.0
      %4449 = vmatprep.subr.mxu0 0.0
      %4450 = vmatpush1.msra.mxu0 0.0
      %4451 = vmatprep.subr.mxu0 0.0
      %4452 = vmatpush1.msra.mxu0 0.0
      %4453 = vmatprep.subr.mxu0 0.0
      %4454 = vmatpush1.msra.mxu0 0.0
      %4455 = vmatprep.subr.mxu0 0.0
      %4456 = vmatpush1.msra.mxu0 0.0
      %4457 = vmatprep.subr.mxu0 0.0
      %4458 = vmatpush1.msra.mxu0 0.0
      %4459 = vmatprep.subr.mxu0 0.0
      %4460 = vmatpush1.msra.mxu0 0.0
      %4461 = vmatprep.subr.mxu0 0.0
      %4462 = vmatpush1.msra.mxu0 0.0
      %4463 = vmatprep.subr.mxu0 0.0
      %4464 = vmatpush1.msra.mxu0 0.0
      %4465 = vmatprep.mubr.f32.mxu0 0.0
      %4466 = vmatmul.mubr.f32.gmra.mrb[0].mxu0 %v4378
      %v4467 = vpop.f32.mrb[0].mxu0
      %v4468 = vadd.f32 0.0, %v4467
      %v4469 = vpop.f32.mrb[0].mxu0
      %4470 = vmatprep.mubr.f32.mxu0 0.0
      %4471 = vmatmul.mubr.f32.gmra.mrb[0].mxu0 %v4381
      %v4472 = vpop.f32.mrb[0].mxu0
      %v4473 = vadd.f32 0.0, %v4472
      %v4474 = vpop.f32.mrb[0].mxu0
      %4475 = vmatprep.mubr.f32.mxu0 0.0
      %4476 = vmatmul.mubr.f32.gmra.mrb[0].mxu0 %v4384
      %v4477 = vpop.f32.mrb[0].mxu0
      %v4478 = vadd.f32 0.0, %v4477
      %v4479 = vpop.f32.mrb[0].mxu0
      %4480 = vmatprep.mubr.f32.mxu0 0.0
      %4481 = vmatmul.mubr.f32.gmra.mrb[0].mxu0 %v4387
      %v4482 = vpop.f32.mrb[0].mxu0
      %v4483 = vadd.f32 0.0, %v4482
      %v4484 = vpop.f32.mrb[0].mxu0
      %4485 = vmatprep.mubr.f32.mxu0 0.0
      %4486 = vmatmul.mubr.f32.gmra.mrb[0].mxu0 %v4390
      %v4487 = vpop.f32.mrb[0].mxu0
      %v4488 = vadd.f32 0.0, %v4487
      %v4489 = vpop.f32.mrb[0].mxu0
      %4490 = vmatprep.mubr.f32.mxu0 0.0
      %4491 = vmatmul.mubr.f32.gmra.mrb[0].mxu0 %v4393
      %v4492 = vpop.f32.mrb[0].mxu0
      %v4493 = vadd.f32 0.0, %v4492
      %v4494 = vpop.f32.mrb[0].mxu0
      %4495 = vmatprep.mubr.f32.mxu0 0.0
      %4496 = vmatmul.mubr.f32.gmra.mrb[0].mxu0 %v4396
      %v4497 = vpop.f32.mrb[0].mxu0
      %v4498 = vadd.f32 0.0, %v4497
      %v4499 = vpop.f32.mrb[0].mxu0
      %4500 = vmatprep.mubr.f32.mxu0 0.0
      %4501 = vmatmul.mubr.f32.gmra.mrb[0].mxu0 %v4399
      %v4502 = vpop.f32.mrb[0].mxu0
      %v4503 = vadd.f32 0.0, %v4502
      %v4504 = vpop.f32.mrb[0].mxu0
      %4505 = vdwg.mxu0
      %v4507 = vsel %vm2310, %v3657, 0
      %v4510 = vsel %vm2310, %v3662, 0
      %v4513 = vsel %vm2310, %v3667, 0
      %v4516 = vsel %vm2310, %v3672, 0
      %v4519 = vsel %vm2310, %v3677, 0
      %v4522 = vsel %vm2310, %v3682, 0
      %v4525 = vsel %vm2310, %v3687, 0
      %v4528 = vsel %vm2310, %v3692, 0
      %4530 = vmatprep.subr.mxu0 0.0
      %4531 = vmatpush1.msra.mxu0 %v4246
      %4532 = vmatprep.subr.mxu0 0.0
      %4533 = vmatpush1.msra.mxu0 0.0
      %4534 = vmatprep.subr.mxu0 0.0
      %4535 = vmatpush1.msra.mxu0 0.0
      %4536 = vmatprep.subr.mxu0 0.0
      %4537 = vmatpush1.msra.mxu0 0.0
      %4538 = vmatprep.subr.mxu0 0.0
      %4539 = vmatpush1.msra.mxu0 0.0
      %4540 = vmatprep.subr.mxu0 0.0
      %4541 = vmatpush1.msra.mxu0 0.0
      %4542 = vmatprep.subr.mxu0 0.0
      %4543 = vmatpush1.msra.mxu0 0.0
      %4544 = vmatprep.subr.mxu0 0.0
      %4545 = vmatpush1.msra.mxu0 0.0
      %4546 = vmatprep.subr.mxu0 0.0
      %4547 = vmatpush1.msra.mxu0 0.0
      %4548 = vmatprep.subr.mxu0 0.0
      %4549 = vmatpush1.msra.mxu0 0.0
      %4550 = vmatprep.subr.mxu0 0.0
      %4551 = vmatpush1.msra.mxu0 0.0
      %4552 = vmatprep.subr.mxu0 0.0
      %4553 = vmatpush1.msra.mxu0 0.0
      %4554 = vmatprep.subr.mxu0 0.0
      %4555 = vmatpush1.msra.mxu0 0.0
      %4556 = vmatprep.subr.mxu0 0.0
      %4557 = vmatpush1.msra.mxu0 0.0
      %4558 = vmatprep.subr.mxu0 0.0
      %4559 = vmatpush1.msra.mxu0 0.0
      %4560 = vmatprep.subr.mxu0 0.0
      %4561 = vmatpush1.msra.mxu0 0.0
      %4562 = vmatprep.subr.mxu0 0.0
      %4563 = vmatpush1.msra.mxu0 0.0
      %4564 = vmatprep.subr.mxu0 0.0
      %4565 = vmatpush1.msra.mxu0 0.0
      %4566 = vmatprep.subr.mxu0 0.0
      %4567 = vmatpush1.msra.mxu0 0.0
      %4568 = vmatprep.subr.mxu0 0.0
      %4569 = vmatpush1.msra.mxu0 0.0
      %4570 = vmatprep.subr.mxu0 0.0
      %4571 = vmatpush1.msra.mxu0 0.0
      %4572 = vmatprep.subr.mxu0 0.0
      %4573 = vmatpush1.msra.mxu0 0.0
      %4574 = vmatprep.subr.mxu0 0.0
      %4575 = vmatpush1.msra.mxu0 0.0
      %4576 = vmatprep.subr.mxu0 0.0
      %4577 = vmatpush1.msra.mxu0 0.0
      %4578 = vmatprep.subr.mxu0 0.0
      %4579 = vmatpush1.msra.mxu0 0.0
      %4580 = vmatprep.subr.mxu0 0.0
      %4581 = vmatpush1.msra.mxu0 0.0
      %4582 = vmatprep.subr.mxu0 0.0
      %4583 = vmatpush1.msra.mxu0 0.0
      %4584 = vmatprep.subr.mxu0 0.0
      %4585 = vmatpush1.msra.mxu0 0.0
      %4586 = vmatprep.subr.mxu0 0.0
      %4587 = vmatpush1.msra.mxu0 0.0
      %4588 = vmatprep.subr.mxu0 0.0
      %4589 = vmatpush1.msra.mxu0 0.0
      %4590 = vmatprep.subr.mxu0 0.0
      %4591 = vmatpush1.msra.mxu0 0.0
      %4592 = vmatprep.subr.mxu0 0.0
      %4593 = vmatpush1.msra.mxu0 0.0
      %4594 = vmatprep.mubr.f32.mxu0 0.0
      %4595 = vmatmul.mubr.f32.gmra.mrb[0].mxu0 %v4507
      %v4596 = vpop.f32.mrb[0].mxu0
      %v4597 = vadd.f32 0.0, %v4596
      %v4598 = vpop.f32.mrb[0].mxu0
      %4599 = vmatprep.mubr.f32.mxu0 0.0
      %4600 = vmatmul.mubr.f32.gmra.mrb[0].mxu0 %v4510
      %v4601 = vpop.f32.mrb[0].mxu0
      %v4602 = vadd.f32 0.0, %v4601
      %v4603 = vpop.f32.mrb[0].mxu0
      %4604 = vmatprep.mubr.f32.mxu0 0.0
      %4605 = vmatmul.mubr.f32.gmra.mrb[0].mxu0 %v4513
      %v4606 = vpop.f32.mrb[0].mxu0
      %v4607 = vadd.f32 0.0, %v4606
      %v4608 = vpop.f32.mrb[0].mxu0
      %4609 = vmatprep.mubr.f32.mxu0 0.0
      %4610 = vmatmul.mubr.f32.gmra.mrb[0].mxu0 %v4516
      %v4611 = vpop.f32.mrb[0].mxu0
      %v4612 = vadd.f32 0.0, %v4611
      %v4613 = vpop.f32.mrb[0].mxu0
      %4614 = vmatprep.mubr.f32.mxu0 0.0
      %4615 = vmatmul.mubr.f32.gmra.mrb[0].mxu0 %v4519
      %v4616 = vpop.f32.mrb[0].mxu0
      %v4617 = vadd.f32 0.0, %v4616
      %v4618 = vpop.f32.mrb[0].mxu0
      %4619 = vmatprep.mubr.f32.mxu0 0.0
      %4620 = vmatmul.mubr.f32.gmra.mrb[0].mxu0 %v4522
      %v4621 = vpop.f32.mrb[0].mxu0
      %v4622 = vadd.f32 0.0, %v4621
      %v4623 = vpop.f32.mrb[0].mxu0
      %4624 = vmatprep.mubr.f32.mxu0 0.0
      %4625 = vmatmul.mubr.f32.gmra.mrb[0].mxu0 %v4525
      %v4626 = vpop.f32.mrb[0].mxu0
      %v4627 = vadd.f32 0.0, %v4626
      %v4628 = vpop.f32.mrb[0].mxu0
      %4629 = vmatprep.mubr.f32.mxu0 0.0
      %4630 = vmatmul.mubr.f32.gmra.mrb[0].mxu0 %v4528
      %v4631 = vpop.f32.mrb[0].mxu0
      %v4632 = vadd.f32 0.0, %v4631
      %v4633 = vpop.f32.mrb[0].mxu0
      %4634 = vdwg.mxu0
      %v4636 = vsel %vm2310, %v3786, 0
      %v4639 = vsel %vm2310, %v3791, 0
      %v4642 = vsel %vm2310, %v3796, 0
      %v4645 = vsel %vm2310, %v3801, 0
      %v4648 = vsel %vm2310, %v3806, 0
      %v4651 = vsel %vm2310, %v3811, 0
      %v4654 = vsel %vm2310, %v3816, 0
      %v4657 = vsel %vm2310, %v3821, 0
      %4659 = vmatprep.subr.mxu0 0.0
      %4660 = vmatpush1.msra.mxu0 %v4247
      %4661 = vmatprep.subr.mxu0 0.0
      %4662 = vmatpush1.msra.mxu0 0.0
      %4663 = vmatprep.subr.mxu0 0.0
      %4664 = vmatpush1.msra.mxu0 0.0
      %4665 = vmatprep.subr.mxu0 0.0
      %4666 = vmatpush1.msra.mxu0 0.0
      %4667 = vmatprep.subr.mxu0 0.0
      %4668 = vmatpush1.msra.mxu0 0.0
      %4669 = vmatprep.subr.mxu0 0.0
      %4670 = vmatpush1.msra.mxu0 0.0
      %4671 = vmatprep.subr.mxu0 0.0
      %4672 = vmatpush1.msra.mxu0 0.0
      %4673 = vmatprep.subr.mxu0 0.0
      %4674 = vmatpush1.msra.mxu0 0.0
      %4675 = vmatprep.subr.mxu0 0.0
      %4676 = vmatpush1.msra.mxu0 0.0
      %4677 = vmatprep.subr.mxu0 0.0
      %4678 = vmatpush1.msra.mxu0 0.0
      %4679 = vmatprep.subr.mxu0 0.0
      %4680 = vmatpush1.msra.mxu0 0.0
      %4681 = vmatprep.subr.mxu0 0.0
      %4682 = vmatpush1.msra.mxu0 0.0
      %4683 = vmatprep.subr.mxu0 0.0
      %4684 = vmatpush1.msra.mxu0 0.0
      %4685 = vmatprep.subr.mxu0 0.0
      %4686 = vmatpush1.msra.mxu0 0.0
      %4687 = vmatprep.subr.mxu0 0.0
      %4688 = vmatpush1.msra.mxu0 0.0
      %4689 = vmatprep.subr.mxu0 0.0
      %4690 = vmatpush1.msra.mxu0 0.0
      %4691 = vmatprep.subr.mxu0 0.0
      %4692 = vmatpush1.msra.mxu0 0.0
      %4693 = vmatprep.subr.mxu0 0.0
      %4694 = vmatpush1.msra.mxu0 0.0
      %4695 = vmatprep.subr.mxu0 0.0
      %4696 = vmatpush1.msra.mxu0 0.0
      %4697 = vmatprep.subr.mxu0 0.0
      %4698 = vmatpush1.msra.mxu0 0.0
      %4699 = vmatprep.subr.mxu0 0.0
      %4700 = vmatpush1.msra.mxu0 0.0
      %4701 = vmatprep.subr.mxu0 0.0
      %4702 = vmatpush1.msra.mxu0 0.0
      %4703 = vmatprep.subr.mxu0 0.0
      %4704 = vmatpush1.msra.mxu0 0.0
      %4705 = vmatprep.subr.mxu0 0.0
      %4706 = vmatpush1.msra.mxu0 0.0
      %4707 = vmatprep.subr.mxu0 0.0
      %4708 = vmatpush1.msra.mxu0 0.0
      %4709 = vmatprep.subr.mxu0 0.0
      %4710 = vmatpush1.msra.mxu0 0.0
      %4711 = vmatprep.subr.mxu0 0.0
      %4712 = vmatpush1.msra.mxu0 0.0
      %4713 = vmatprep.subr.mxu0 0.0
      %4714 = vmatpush1.msra.mxu0 0.0
      %4715 = vmatprep.subr.mxu0 0.0
      %4716 = vmatpush1.msra.mxu0 0.0
      %4717 = vmatprep.subr.mxu0 0.0
      %4718 = vmatpush1.msra.mxu0 0.0
      %4719 = vmatprep.subr.mxu0 0.0
      %4720 = vmatpush1.msra.mxu0 0.0
      %4721 = vmatprep.subr.mxu0 0.0
      %4722 = vmatpush1.msra.mxu0 0.0
      %4723 = vmatprep.mubr.f32.mxu0 0.0
      %4724 = vmatmul.mubr.f32.gmra.mrb[0].mxu0 %v4636
      %v4725 = vpop.f32.mrb[0].mxu0
      %v4726 = vadd.f32 0.0, %v4725
      %v4727 = vpop.f32.mrb[0].mxu0
      %4728 = vmatprep.mubr.f32.mxu0 0.0
      %4729 = vmatmul.mubr.f32.gmra.mrb[0].mxu0 %v4639
      %v4730 = vpop.f32.mrb[0].mxu0
      %v4731 = vadd.f32 0.0, %v4730
      %v4732 = vpop.f32.mrb[0].mxu0
      %4733 = vmatprep.mubr.f32.mxu0 0.0
      %4734 = vmatmul.mubr.f32.gmra.mrb[0].mxu0 %v4642
      %v4735 = vpop.f32.mrb[0].mxu0
      %v4736 = vadd.f32 0.0, %v4735
      %v4737 = vpop.f32.mrb[0].mxu0
      %4738 = vmatprep.mubr.f32.mxu0 0.0
      %4739 = vmatmul.mubr.f32.gmra.mrb[0].mxu0 %v4645
      %v4740 = vpop.f32.mrb[0].mxu0
      %v4741 = vadd.f32 0.0, %v4740
      %v4742 = vpop.f32.mrb[0].mxu0
      %4743 = vmatprep.mubr.f32.mxu0 0.0
      %4744 = vmatmul.mubr.f32.gmra.mrb[0].mxu0 %v4648
      %v4745 = vpop.f32.mrb[0].mxu0
      %v4746 = vadd.f32 0.0, %v4745
      %v4747 = vpop.f32.mrb[0].mxu0
      %4748 = vmatprep.mubr.f32.mxu0 0.0
      %4749 = vmatmul.mubr.f32.gmra.mrb[0].mxu0 %v4651
      %v4750 = vpop.f32.mrb[0].mxu0
      %v4751 = vadd.f32 0.0, %v4750
      %v4752 = vpop.f32.mrb[0].mxu0
      %4753 = vmatprep.mubr.f32.mxu0 0.0
      %4754 = vmatmul.mubr.f32.gmra.mrb[0].mxu0 %v4654
      %v4755 = vpop.f32.mrb[0].mxu0
      %v4756 = vadd.f32 0.0, %v4755
      %v4757 = vpop.f32.mrb[0].mxu0
      %4758 = vmatprep.mubr.f32.mxu0 0.0
      %4759 = vmatmul.mubr.f32.gmra.mrb[0].mxu0 %v4657
      %v4760 = vpop.f32.mrb[0].mxu0
      %v4761 = vadd.f32 0.0, %v4760
      %v4762 = vpop.f32.mrb[0].mxu0
      %4763 = vdwg.mxu0
      %v4764 = vsel %vm507, %v4339, 0.0
      %v4765 = vsel %vm507, %v4468, 0.0
      %v4766 = vadd.f32 %v4764, %v4765
      %v4767 = vsel %vm507, %v4597, 0.0
      %v4768 = vadd.f32 %v4766, %v4767
      %v4769 = vsel %vm507, %v4726, 0.0
      %v4770 = vadd.f32 %v4768, %v4769
      %v4771 = vsel %vm507, %v4344, 0.0
      %v4772 = vsel %vm507, %v4473, 0.0
      %v4773 = vadd.f32 %v4771, %v4772
      %v4774 = vsel %vm507, %v4602, 0.0
      %v4775 = vadd.f32 %v4773, %v4774
      %v4776 = vsel %vm507, %v4731, 0.0
      %v4777 = vadd.f32 %v4775, %v4776
      %v4778 = vsel %vm507, %v4349, 0.0
      %v4779 = vsel %vm507, %v4478, 0.0
      %v4780 = vadd.f32 %v4778, %v4779
      %v4781 = vsel %vm507, %v4607, 0.0
      %v4782 = vadd.f32 %v4780, %v4781
      %v4783 = vsel %vm507, %v4736, 0.0
      %v4784 = vadd.f32 %v4782, %v4783
      %v4785 = vsel %vm507, %v4354, 0.0
      %v4786 = vsel %vm507, %v4483, 0.0
      %v4787 = vadd.f32 %v4785, %v4786
      %v4788 = vsel %vm507, %v4612, 0.0
      %v4789 = vadd.f32 %v4787, %v4788
      %v4790 = vsel %vm507, %v4741, 0.0
      %v4791 = vadd.f32 %v4789, %v4790
      %v4792 = vsel %vm507, %v4359, 0.0
      %v4793 = vsel %vm507, %v4488, 0.0
      %v4794 = vadd.f32 %v4792, %v4793
      %v4795 = vsel %vm507, %v4617, 0.0
      %v4796 = vadd.f32 %v4794, %v4795
      %v4797 = vsel %vm507, %v4746, 0.0
      %v4798 = vadd.f32 %v4796, %v4797
      %v4799 = vsel %vm507, %v4364, 0.0
      %v4800 = vsel %vm507, %v4493, 0.0
      %v4801 = vadd.f32 %v4799, %v4800
      %v4802 = vsel %vm507, %v4622, 0.0
      %v4803 = vadd.f32 %v4801, %v4802
      %v4804 = vsel %vm507, %v4751, 0.0
      %v4805 = vadd.f32 %v4803, %v4804
      %v4806 = vsel %vm507, %v4369, 0.0
      %v4807 = vsel %vm507, %v4498, 0.0
      %v4808 = vadd.f32 %v4806, %v4807
      %v4809 = vsel %vm507, %v4627, 0.0
      %v4810 = vadd.f32 %v4808, %v4809
      %v4811 = vsel %vm507, %v4756, 0.0
      %v4812 = vadd.f32 %v4810, %v4811
      %v4813 = vsel %vm507, %v4374, 0.0
      %v4814 = vsel %vm507, %v4503, 0.0
      %v4815 = vadd.f32 %v4813, %v4814
      %v4816 = vsel %vm507, %v4632, 0.0
      %v4817 = vadd.f32 %v4815, %v4816
      %v4818 = vsel %vm507, %v4761, 0.0
      %v4819 = vadd.f32 %v4817, %v4818
      %v4820 = vld [vmem:[%s8] sm:$0x1]
      %v4822 = vlaneseq
      %v4823 = vshrl.u32 %v4822, 7
      %v4824 = vsub.s32 0, %v4823
      %v4825 = vrot.slane %v4820, %v4824
      %v4827 = vadd.f32 %v4770, %v4825
      %v4828 = vadd.f32 %v4777, %v4825
      %v4829 = vadd.f32 %v4784, %v4825
      %v4830 = vadd.f32 %v4791, %v4825
      %v4831 = vadd.f32 %v4798, %v4825
      %v4832 = vadd.f32 %v4805, %v4825
      %v4833 = vadd.f32 %v4812, %v4825
      %v4834 = vadd.f32 %v4819, %v4825
      %v4835 = vsub.f32 %v3891, %v1948
      %v4836 = vsub.f32 %v3896, %v1953
      %v4837 = vsub.f32 %v3901, %v1958
      %v4838 = vsub.f32 %v3906, %v1963
      %v4839 = vsub.f32 %v3911, %v1968
      %v4840 = vsub.f32 %v3916, %v1973
      %v4841 = vsub.f32 %v3921, %v1978
      %v4842 = vsub.f32 %v3926, %v1983
      %v4843 = vsub.f32 %v3996, %v2056
      %v4844 = vsub.f32 %v4001, %v2061
      %v4845 = vsub.f32 %v4006, %v2066
      %v4846 = vsub.f32 %v4011, %v2071
      %v4847 = vsub.f32 %v4016, %v2076
      %v4848 = vsub.f32 %v4021, %v2081
      %v4849 = vsub.f32 %v4026, %v2086
      %v4850 = vsub.f32 %v4031, %v2091
      %v4851 = vsub.f32 %v4101, %v2164
      %v4852 = vsub.f32 %v4106, %v2169
      %v4853 = vsub.f32 %v4111, %v2174
      %v4854 = vsub.f32 %v4116, %v2179
      %v4855 = vsub.f32 %v4121, %v2184
      %v4856 = vsub.f32 %v4126, %v2189
      %v4857 = vsub.f32 %v4131, %v2194
      %v4858 = vsub.f32 %v4136, %v2199
      %v4859 = vsub.f32 %v4206, %v2272
      %v4860 = vsub.f32 %v4211, %v2277
      %v4861 = vsub.f32 %v4216, %v2282
      %v4862 = vsub.f32 %v4221, %v2287
      %v4863 = vsub.f32 %v4226, %v2292
      %v4864 = vsub.f32 %v4231, %v2297
      %v4865 = vsub.f32 %v4236, %v2302
      %v4866 = vsub.f32 %v4241, %v2307
      %v4867 = vld [vmem:[%s9] sm:$0xf]
      %v4868 = vld [vmem:[%s9 + $0x4] sm:$0xf]
      %v4869 = vld [vmem:[%s9 + $0x8] sm:$0xf]
      %v4870 = vld [vmem:[%s9 + $0xc] sm:$0xf]
      %vm4871 = vcmask 31744
      %v4873 = vsel %vm4871, %v4835, 0
      %v4876 = vsel %vm4871, %v4836, 0
      %v4879 = vsel %vm4871, %v4837, 0
      %v4882 = vsel %vm4871, %v4838, 0
      %v4885 = vsel %vm4871, %v4839, 0
      %v4888 = vsel %vm4871, %v4840, 0
      %v4891 = vsel %vm4871, %v4841, 0
      %v4894 = vsel %vm4871, %v4842, 0
      %vm4896 = vcmask 1043456
      %v4898 = vsel %vm4896, %v4867, 0
      %4900 = vmatprep.subr.mxu0 0.0
      %4901 = vmatpush1.msra.mxu0 %v4898
      %4902 = vmatprep.subr.mxu0 0.0
      %4903 = vmatpush1.msra.mxu0 0.0
      %4904 = vmatprep.subr.mxu0 0.0
      %4905 = vmatpush1.msra.mxu0 0.0
      %4906 = vmatprep.subr.mxu0 0.0
      %4907 = vmatpush1.msra.mxu0 0.0
      %4908 = vmatprep.subr.mxu0 0.0
      %4909 = vmatpush1.msra.mxu0 0.0
      %4910 = vmatprep.subr.mxu0 0.0
      %4911 = vmatpush1.msra.mxu0 0.0
      %4912 = vmatprep.subr.mxu0 0.0
      %4913 = vmatpush1.msra.mxu0 0.0
      %4914 = vmatprep.subr.mxu0 0.0
      %4915 = vmatpush1.msra.mxu0 0.0
      %4916 = vmatprep.subr.mxu0 0.0
      %4917 = vmatpush1.msra.mxu0 0.0
      %4918 = vmatprep.subr.mxu0 0.0
      %4919 = vmatpush1.msra.mxu0 0.0
      %4920 = vmatprep.subr.mxu0 0.0
      %4921 = vmatpush1.msra.mxu0 0.0
      %4922 = vmatprep.subr.mxu0 0.0
      %4923 = vmatpush1.msra.mxu0 0.0
      %4924 = vmatprep.subr.mxu0 0.0
      %4925 = vmatpush1.msra.mxu0 0.0
      %4926 = vmatprep.subr.mxu0 0.0
      %4927 = vmatpush1.msra.mxu0 0.0
      %4928 = vmatprep.subr.mxu0 0.0
      %4929 = vmatpush1.msra.mxu0 0.0
      %4930 = vmatprep.subr.mxu0 0.0
      %4931 = vmatpush1.msra.mxu0 0.0
      %4932 = vmatprep.subr.mxu0 0.0
      %4933 = vmatpush1.msra.mxu0 0.0
      %4934 = vmatprep.subr.mxu0 0.0
      %4935 = vmatpush1.msra.mxu0 0.0
      %4936 = vmatprep.subr.mxu0 0.0
      %4937 = vmatpush1.msra.mxu0 0.0
      %4938 = vmatprep.subr.mxu0 0.0
      %4939 = vmatpush1.msra.mxu0 0.0
      %4940 = vmatprep.subr.mxu0 0.0
      %4941 = vmatpush1.msra.mxu0 0.0
      %4942 = vmatprep.subr.mxu0 0.0
      %4943 = vmatpush1.msra.mxu0 0.0
      %4944 = vmatprep.subr.mxu0 0.0
      %4945 = vmatpush1.msra.mxu0 0.0
      %4946 = vmatprep.subr.mxu0 0.0
      %4947 = vmatpush1.msra.mxu0 0.0
      %4948 = vmatprep.subr.mxu0 0.0
      %4949 = vmatpush1.msra.mxu0 0.0
      %4950 = vmatprep.subr.mxu0 0.0
      %4951 = vmatpush1.msra.mxu0 0.0
      %4952 = vmatprep.subr.mxu0 0.0
      %4953 = vmatpush1.msra.mxu0 0.0
      %4954 = vmatprep.subr.mxu0 0.0
      %4955 = vmatpush1.msra.mxu0 0.0
      %4956 = vmatprep.subr.mxu0 0.0
      %4957 = vmatpush1.msra.mxu0 0.0
      %4958 = vmatprep.subr.mxu0 0.0
      %4959 = vmatpush1.msra.mxu0 0.0
      %4960 = vmatprep.subr.mxu0 0.0
      %4961 = vmatpush1.msra.mxu0 0.0
      %4962 = vmatprep.subr.mxu0 0.0
      %4963 = vmatpush1.msra.mxu0 0.0
      %4964 = vmatprep.mubr.f32.mxu0 0.0
      %4965 = vmatmul.mubr.f32.gmra.mrb[0].mxu0 %v4873
      %v4966 = vpop.f32.mrb[0].mxu0
      %v4967 = vadd.f32 0.0, %v4966
      %v4968 = vpop.f32.mrb[0].mxu0
      %4969 = vmatprep.mubr.f32.mxu0 0.0
      %4970 = vmatmul.mubr.f32.gmra.mrb[0].mxu0 %v4876
      %v4971 = vpop.f32.mrb[0].mxu0
      %v4972 = vadd.f32 0.0, %v4971
      %v4973 = vpop.f32.mrb[0].mxu0
      %4974 = vmatprep.mubr.f32.mxu0 0.0
      %4975 = vmatmul.mubr.f32.gmra.mrb[0].mxu0 %v4879
      %v4976 = vpop.f32.mrb[0].mxu0
      %v4977 = vadd.f32 0.0, %v4976
      %v4978 = vpop.f32.mrb[0].mxu0
      %4979 = vmatprep.mubr.f32.mxu0 0.0
      %4980 = vmatmul.mubr.f32.gmra.mrb[0].mxu0 %v4882
      %v4981 = vpop.f32.mrb[0].mxu0
      %v4982 = vadd.f32 0.0, %v4981
      %v4983 = vpop.f32.mrb[0].mxu0
      %4984 = vmatprep.mubr.f32.mxu0 0.0
      %4985 = vmatmul.mubr.f32.gmra.mrb[0].mxu0 %v4885
      %v4986 = vpop.f32.mrb[0].mxu0
      %v4987 = vadd.f32 0.0, %v4986
      %v4988 = vpop.f32.mrb[0].mxu0
      %4989 = vmatprep.mubr.f32.mxu0 0.0
      %4990 = vmatmul.mubr.f32.gmra.mrb[0].mxu0 %v4888
      %v4991 = vpop.f32.mrb[0].mxu0
      %v4992 = vadd.f32 0.0, %v4991
      %v4993 = vpop.f32.mrb[0].mxu0
      %4994 = vmatprep.mubr.f32.mxu0 0.0
      %4995 = vmatmul.mubr.f32.gmra.mrb[0].mxu0 %v4891
      %v4996 = vpop.f32.mrb[0].mxu0
      %v4997 = vadd.f32 0.0, %v4996
      %v4998 = vpop.f32.mrb[0].mxu0
      %4999 = vmatprep.mubr.f32.mxu0 0.0
      %5000 = vmatmul.mubr.f32.gmra.mrb[0].mxu0 %v4894
      %v5001 = vpop.f32.mrb[0].mxu0
      %v5002 = vadd.f32 0.0, %v5001
      %v5003 = vpop.f32.mrb[0].mxu0
      %5004 = vdwg.mxu0
      %v5006 = vsel %vm4871, %v4843, 0
      %v5009 = vsel %vm4871, %v4844, 0
      %v5012 = vsel %vm4871, %v4845, 0
      %v5015 = vsel %vm4871, %v4846, 0
      %v5018 = vsel %vm4871, %v4847, 0
      %v5021 = vsel %vm4871, %v4848, 0
      %v5024 = vsel %vm4871, %v4849, 0
      %v5027 = vsel %vm4871, %v4850, 0
      %v5030 = vsel %vm4896, %v4868, 0
      %5032 = vmatprep.subr.mxu0 0.0
      %5033 = vmatpush1.msra.mxu0 %v5030
      %5034 = vmatprep.subr.mxu0 0.0
      %5035 = vmatpush1.msra.mxu0 0.0
      %5036 = vmatprep.subr.mxu0 0.0
      %5037 = vmatpush1.msra.mxu0 0.0
      %5038 = vmatprep.subr.mxu0 0.0
      %5039 = vmatpush1.msra.mxu0 0.0
      %5040 = vmatprep.subr.mxu0 0.0
      %5041 = vmatpush1.msra.mxu0 0.0
      %5042 = vmatprep.subr.mxu0 0.0
      %5043 = vmatpush1.msra.mxu0 0.0
      %5044 = vmatprep.subr.mxu0 0.0
      %5045 = vmatpush1.msra.mxu0 0.0
      %5046 = vmatprep.subr.mxu0 0.0
      %5047 = vmatpush1.msra.mxu0 0.0
      %5048 = vmatprep.subr.mxu0 0.0
      %5049 = vmatpush1.msra.mxu0 0.0
      %5050 = vmatprep.subr.mxu0 0.0
      %5051 = vmatpush1.msra.mxu0 0.0
      %5052 = vmatprep.subr.mxu0 0.0
      %5053 = vmatpush1.msra.mxu0 0.0
      %5054 = vmatprep.subr.mxu0 0.0
      %5055 = vmatpush1.msra.mxu0 0.0
      %5056 = vmatprep.subr.mxu0 0.0
      %5057 = vmatpush1.msra.mxu0 0.0
      %5058 = vmatprep.subr.mxu0 0.0
      %5059 = vmatpush1.msra.mxu0 0.0
      %5060 = vmatprep.subr.mxu0 0.0
      %5061 = vmatpush1.msra.mxu0 0.0
      %5062 = vmatprep.subr.mxu0 0.0
      %5063 = vmatpush1.msra.mxu0 0.0
      %5064 = vmatprep.subr.mxu0 0.0
      %5065 = vmatpush1.msra.mxu0 0.0
      %5066 = vmatprep.subr.mxu0 0.0
      %5067 = vmatpush1.msra.mxu0 0.0
      %5068 = vmatprep.subr.mxu0 0.0
      %5069 = vmatpush1.msra.mxu0 0.0
      %5070 = vmatprep.subr.mxu0 0.0
      %5071 = vmatpush1.msra.mxu0 0.0
      %5072 = vmatprep.subr.mxu0 0.0
      %5073 = vmatpush1.msra.mxu0 0.0
      %5074 = vmatprep.subr.mxu0 0.0
      %5075 = vmatpush1.msra.mxu0 0.0
      %5076 = vmatprep.subr.mxu0 0.0
      %5077 = vmatpush1.msra.mxu0 0.0
      %5078 = vmatprep.subr.mxu0 0.0
      %5079 = vmatpush1.msra.mxu0 0.0
      %5080 = vmatprep.subr.mxu0 0.0
      %5081 = vmatpush1.msra.mxu0 0.0
      %5082 = vmatprep.subr.mxu0 0.0
      %5083 = vmatpush1.msra.mxu0 0.0
      %5084 = vmatprep.subr.mxu0 0.0
      %5085 = vmatpush1.msra.mxu0 0.0
      %5086 = vmatprep.subr.mxu0 0.0
      %5087 = vmatpush1.msra.mxu0 0.0
      %5088 = vmatprep.subr.mxu0 0.0
      %5089 = vmatpush1.msra.mxu0 0.0
      %5090 = vmatprep.subr.mxu0 0.0
      %5091 = vmatpush1.msra.mxu0 0.0
      %5092 = vmatprep.subr.mxu0 0.0
      %5093 = vmatpush1.msra.mxu0 0.0
      %5094 = vmatprep.subr.mxu0 0.0
      %5095 = vmatpush1.msra.mxu0 0.0
      %5096 = vmatprep.mubr.f32.mxu0 0.0
      %5097 = vmatmul.mubr.f32.gmra.mrb[0].mxu0 %v5006
      %v5098 = vpop.f32.mrb[0].mxu0
      %v5099 = vadd.f32 0.0, %v5098
      %v5100 = vpop.f32.mrb[0].mxu0
      %5101 = vmatprep.mubr.f32.mxu0 0.0
      %5102 = vmatmul.mubr.f32.gmra.mrb[0].mxu0 %v5009
      %v5103 = vpop.f32.mrb[0].mxu0
      %v5104 = vadd.f32 0.0, %v5103
      %v5105 = vpop.f32.mrb[0].mxu0
      %5106 = vmatprep.mubr.f32.mxu0 0.0
      %5107 = vmatmul.mubr.f32.gmra.mrb[0].mxu0 %v5012
      %v5108 = vpop.f32.mrb[0].mxu0
      %v5109 = vadd.f32 0.0, %v5108
      %v5110 = vpop.f32.mrb[0].mxu0
      %5111 = vmatprep.mubr.f32.mxu0 0.0
      %5112 = vmatmul.mubr.f32.gmra.mrb[0].mxu0 %v5015
      %v5113 = vpop.f32.mrb[0].mxu0
      %v5114 = vadd.f32 0.0, %v5113
      %v5115 = vpop.f32.mrb[0].mxu0
      %5116 = vmatprep.mubr.f32.mxu0 0.0
      %5117 = vmatmul.mubr.f32.gmra.mrb[0].mxu0 %v5018
      %v5118 = vpop.f32.mrb[0].mxu0
      %v5119 = vadd.f32 0.0, %v5118
      %v5120 = vpop.f32.mrb[0].mxu0
      %5121 = vmatprep.mubr.f32.mxu0 0.0
      %5122 = vmatmul.mubr.f32.gmra.mrb[0].mxu0 %v5021
      %v5123 = vpop.f32.mrb[0].mxu0
      %v5124 = vadd.f32 0.0, %v5123
      %v5125 = vpop.f32.mrb[0].mxu0
      %5126 = vmatprep.mubr.f32.mxu0 0.0
      %5127 = vmatmul.mubr.f32.gmra.mrb[0].mxu0 %v5024
      %v5128 = vpop.f32.mrb[0].mxu0
      %v5129 = vadd.f32 0.0, %v5128
      %v5130 = vpop.f32.mrb[0].mxu0
      %5131 = vmatprep.mubr.f32.mxu0 0.0
      %5132 = vmatmul.mubr.f32.gmra.mrb[0].mxu0 %v5027
      %v5133 = vpop.f32.mrb[0].mxu0
      %v5134 = vadd.f32 0.0, %v5133
      %v5135 = vpop.f32.mrb[0].mxu0
      %5136 = vdwg.mxu0
      %v5138 = vsel %vm4871, %v4851, 0
      %v5141 = vsel %vm4871, %v4852, 0
      %v5144 = vsel %vm4871, %v4853, 0
      %v5147 = vsel %vm4871, %v4854, 0
      %v5150 = vsel %vm4871, %v4855, 0
      %v5153 = vsel %vm4871, %v4856, 0
      %v5156 = vsel %vm4871, %v4857, 0
      %v5159 = vsel %vm4871, %v4858, 0
      %v5162 = vsel %vm4896, %v4869, 0
      %5164 = vmatprep.subr.mxu0 0.0
      %5165 = vmatpush1.msra.mxu0 %v5162
      %5166 = vmatprep.subr.mxu0 0.0
      %5167 = vmatpush1.msra.mxu0 0.0
      %5168 = vmatprep.subr.mxu0 0.0
      %5169 = vmatpush1.msra.mxu0 0.0
      %5170 = vmatprep.subr.mxu0 0.0
      %5171 = vmatpush1.msra.mxu0 0.0
      %5172 = vmatprep.subr.mxu0 0.0
      %5173 = vmatpush1.msra.mxu0 0.0
      %5174 = vmatprep.subr.mxu0 0.0
      %5175 = vmatpush1.msra.mxu0 0.0
      %5176 = vmatprep.subr.mxu0 0.0
      %5177 = vmatpush1.msra.mxu0 0.0
      %5178 = vmatprep.subr.mxu0 0.0
      %5179 = vmatpush1.msra.mxu0 0.0
      %5180 = vmatprep.subr.mxu0 0.0
      %5181 = vmatpush1.msra.mxu0 0.0
      %5182 = vmatprep.subr.mxu0 0.0
      %5183 = vmatpush1.msra.mxu0 0.0
      %5184 = vmatprep.subr.mxu0 0.0
      %5185 = vmatpush1.msra.mxu0 0.0
      %5186 = vmatprep.subr.mxu0 0.0
      %5187 = vmatpush1.msra.mxu0 0.0
      %5188 = vmatprep.subr.mxu0 0.0
      %5189 = vmatpush1.msra.mxu0 0.0
      %5190 = vmatprep.subr.mxu0 0.0
      %5191 = vmatpush1.msra.mxu0 0.0
      %5192 = vmatprep.subr.mxu0 0.0
      %5193 = vmatpush1.msra.mxu0 0.0
      %5194 = vmatprep.subr.mxu0 0.0
      %5195 = vmatpush1.msra.mxu0 0.0
      %5196 = vmatprep.subr.mxu0 0.0
      %5197 = vmatpush1.msra.mxu0 0.0
      %5198 = vmatprep.subr.mxu0 0.0
      %5199 = vmatpush1.msra.mxu0 0.0
      %5200 = vmatprep.subr.mxu0 0.0
      %5201 = vmatpush1.msra.mxu0 0.0
      %5202 = vmatprep.subr.mxu0 0.0
      %5203 = vmatpush1.msra.mxu0 0.0
      %5204 = vmatprep.subr.mxu0 0.0
      %5205 = vmatpush1.msra.mxu0 0.0
      %5206 = vmatprep.subr.mxu0 0.0
      %5207 = vmatpush1.msra.mxu0 0.0
      %5208 = vmatprep.subr.mxu0 0.0
      %5209 = vmatpush1.msra.mxu0 0.0
      %5210 = vmatprep.subr.mxu0 0.0
      %5211 = vmatpush1.msra.mxu0 0.0
      %5212 = vmatprep.subr.mxu0 0.0
      %5213 = vmatpush1.msra.mxu0 0.0
      %5214 = vmatprep.subr.mxu0 0.0
      %5215 = vmatpush1.msra.mxu0 0.0
      %5216 = vmatprep.subr.mxu0 0.0
      %5217 = vmatpush1.msra.mxu0 0.0
      %5218 = vmatprep.subr.mxu0 0.0
      %5219 = vmatpush1.msra.mxu0 0.0
      %5220 = vmatprep.subr.mxu0 0.0
      %5221 = vmatpush1.msra.mxu0 0.0
      %5222 = vmatprep.subr.mxu0 0.0
      %5223 = vmatpush1.msra.mxu0 0.0
      %5224 = vmatprep.subr.mxu0 0.0
      %5225 = vmatpush1.msra.mxu0 0.0
      %5226 = vmatprep.subr.mxu0 0.0
      %5227 = vmatpush1.msra.mxu0 0.0
      %5228 = vmatprep.mubr.f32.mxu0 0.0
      %5229 = vmatmul.mubr.f32.gmra.mrb[0].mxu0 %v5138
      %v5230 = vpop.f32.mrb[0].mxu0
      %v5231 = vadd.f32 0.0, %v5230
      %v5232 = vpop.f32.mrb[0].mxu0
      %5233 = vmatprep.mubr.f32.mxu0 0.0
      %5234 = vmatmul.mubr.f32.gmra.mrb[0].mxu0 %v5141
      %v5235 = vpop.f32.mrb[0].mxu0
      %v5236 = vadd.f32 0.0, %v5235
      %v5237 = vpop.f32.mrb[0].mxu0
      %5238 = vmatprep.mubr.f32.mxu0 0.0
      %5239 = vmatmul.mubr.f32.gmra.mrb[0].mxu0 %v5144
      %v5240 = vpop.f32.mrb[0].mxu0
      %v5241 = vadd.f32 0.0, %v5240
      %v5242 = vpop.f32.mrb[0].mxu0
      %5243 = vmatprep.mubr.f32.mxu0 0.0
      %5244 = vmatmul.mubr.f32.gmra.mrb[0].mxu0 %v5147
      %v5245 = vpop.f32.mrb[0].mxu0
      %v5246 = vadd.f32 0.0, %v5245
      %v5247 = vpop.f32.mrb[0].mxu0
      %5248 = vmatprep.mubr.f32.mxu0 0.0
      %5249 = vmatmul.mubr.f32.gmra.mrb[0].mxu0 %v5150
      %v5250 = vpop.f32.mrb[0].mxu0
      %v5251 = vadd.f32 0.0, %v5250
      %v5252 = vpop.f32.mrb[0].mxu0
      %5253 = vmatprep.mubr.f32.mxu0 0.0
      %5254 = vmatmul.mubr.f32.gmra.mrb[0].mxu0 %v5153
      %v5255 = vpop.f32.mrb[0].mxu0
      %v5256 = vadd.f32 0.0, %v5255
      %v5257 = vpop.f32.mrb[0].mxu0
      %5258 = vmatprep.mubr.f32.mxu0 0.0
      %5259 = vmatmul.mubr.f32.gmra.mrb[0].mxu0 %v5156
      %v5260 = vpop.f32.mrb[0].mxu0
      %v5261 = vadd.f32 0.0, %v5260
      %v5262 = vpop.f32.mrb[0].mxu0
      %5263 = vmatprep.mubr.f32.mxu0 0.0
      %5264 = vmatmul.mubr.f32.gmra.mrb[0].mxu0 %v5159
      %v5265 = vpop.f32.mrb[0].mxu0
      %v5266 = vadd.f32 0.0, %v5265
      %v5267 = vpop.f32.mrb[0].mxu0
      %5268 = vdwg.mxu0
      %v5270 = vsel %vm4871, %v4859, 0
      %v5273 = vsel %vm4871, %v4860, 0
      %v5276 = vsel %vm4871, %v4861, 0
      %v5279 = vsel %vm4871, %v4862, 0
      %v5282 = vsel %vm4871, %v4863, 0
      %v5285 = vsel %vm4871, %v4864, 0
      %v5288 = vsel %vm4871, %v4865, 0
      %v5291 = vsel %vm4871, %v4866, 0
      %v5294 = vsel %vm4896, %v4870, 0
      %5296 = vmatprep.subr.mxu0 0.0
      %5297 = vmatpush1.msra.mxu0 %v5294
      %5298 = vmatprep.subr.mxu0 0.0
      %5299 = vmatpush1.msra.mxu0 0.0
      %5300 = vmatprep.subr.mxu0 0.0
      %5301 = vmatpush1.msra.mxu0 0.0
      %5302 = vmatprep.subr.mxu0 0.0
      %5303 = vmatpush1.msra.mxu0 0.0
      %5304 = vmatprep.subr.mxu0 0.0
      %5305 = vmatpush1.msra.mxu0 0.0
      %5306 = vmatprep.subr.mxu0 0.0
      %5307 = vmatpush1.msra.mxu0 0.0
      %5308 = vmatprep.subr.mxu0 0.0
      %5309 = vmatpush1.msra.mxu0 0.0
      %5310 = vmatprep.subr.mxu0 0.0
      %5311 = vmatpush1.msra.mxu0 0.0
      %5312 = vmatprep.subr.mxu0 0.0
      %5313 = vmatpush1.msra.mxu0 0.0
      %5314 = vmatprep.subr.mxu0 0.0
      %5315 = vmatpush1.msra.mxu0 0.0
      %5316 = vmatprep.subr.mxu0 0.0
      %5317 = vmatpush1.msra.mxu0 0.0
      %5318 = vmatprep.subr.mxu0 0.0
      %5319 = vmatpush1.msra.mxu0 0.0
      %5320 = vmatprep.subr.mxu0 0.0
      %5321 = vmatpush1.msra.mxu0 0.0
      %5322 = vmatprep.subr.mxu0 0.0
      %5323 = vmatpush1.msra.mxu0 0.0
      %5324 = vmatprep.subr.mxu0 0.0
      %5325 = vmatpush1.msra.mxu0 0.0
      %5326 = vmatprep.subr.mxu0 0.0
      %5327 = vmatpush1.msra.mxu0 0.0
      %5328 = vmatprep.subr.mxu0 0.0
      %5329 = vmatpush1.msra.mxu0 0.0
      %5330 = vmatprep.subr.mxu0 0.0
      %5331 = vmatpush1.msra.mxu0 0.0
      %5332 = vmatprep.subr.mxu0 0.0
      %5333 = vmatpush1.msra.mxu0 0.0
      %5334 = vmatprep.subr.mxu0 0.0
      %5335 = vmatpush1.msra.mxu0 0.0
      %5336 = vmatprep.subr.mxu0 0.0
      %5337 = vmatpush1.msra.mxu0 0.0
      %5338 = vmatprep.subr.mxu0 0.0
      %5339 = vmatpush1.msra.mxu0 0.0
      %5340 = vmatprep.subr.mxu0 0.0
      %5341 = vmatpush1.msra.mxu0 0.0
      %5342 = vmatprep.subr.mxu0 0.0
      %5343 = vmatpush1.msra.mxu0 0.0
      %5344 = vmatprep.subr.mxu0 0.0
      %5345 = vmatpush1.msra.mxu0 0.0
      %5346 = vmatprep.subr.mxu0 0.0
      %5347 = vmatpush1.msra.mxu0 0.0
      %5348 = vmatprep.subr.mxu0 0.0
      %5349 = vmatpush1.msra.mxu0 0.0
      %5350 = vmatprep.subr.mxu0 0.0
      %5351 = vmatpush1.msra.mxu0 0.0
      %5352 = vmatprep.subr.mxu0 0.0
      %5353 = vmatpush1.msra.mxu0 0.0
      %5354 = vmatprep.subr.mxu0 0.0
      %5355 = vmatpush1.msra.mxu0 0.0
      %5356 = vmatprep.subr.mxu0 0.0
      %5357 = vmatpush1.msra.mxu0 0.0
      %5358 = vmatprep.subr.mxu0 0.0
      %5359 = vmatpush1.msra.mxu0 0.0
      %5360 = vmatprep.mubr.f32.mxu0 0.0
      %5361 = vmatmul.mubr.f32.gmra.mrb[0].mxu0 %v5270
      %v5362 = vpop.f32.mrb[0].mxu0
      %v5363 = vadd.f32 0.0, %v5362
      %v5364 = vpop.f32.mrb[0].mxu0
      %5365 = vmatprep.mubr.f32.mxu0 0.0
      %5366 = vmatmul.mubr.f32.gmra.mrb[0].mxu0 %v5273
      %v5367 = vpop.f32.mrb[0].mxu0
      %v5368 = vadd.f32 0.0, %v5367
      %v5369 = vpop.f32.mrb[0].mxu0
      %5370 = vmatprep.mubr.f32.mxu0 0.0
      %5371 = vmatmul.mubr.f32.gmra.mrb[0].mxu0 %v5276
      %v5372 = vpop.f32.mrb[0].mxu0
      %v5373 = vadd.f32 0.0, %v5372
      %v5374 = vpop.f32.mrb[0].mxu0
      %5375 = vmatprep.mubr.f32.mxu0 0.0
      %5376 = vmatmul.mubr.f32.gmra.mrb[0].mxu0 %v5279
      %v5377 = vpop.f32.mrb[0].mxu0
      %v5378 = vadd.f32 0.0, %v5377
      %v5379 = vpop.f32.mrb[0].mxu0
      %5380 = vmatprep.mubr.f32.mxu0 0.0
      %5381 = vmatmul.mubr.f32.gmra.mrb[0].mxu0 %v5282
      %v5382 = vpop.f32.mrb[0].mxu0
      %v5383 = vadd.f32 0.0, %v5382
      %v5384 = vpop.f32.mrb[0].mxu0
      %5385 = vmatprep.mubr.f32.mxu0 0.0
      %5386 = vmatmul.mubr.f32.gmra.mrb[0].mxu0 %v5285
      %v5387 = vpop.f32.mrb[0].mxu0
      %v5388 = vadd.f32 0.0, %v5387
      %v5389 = vpop.f32.mrb[0].mxu0
      %5390 = vmatprep.mubr.f32.mxu0 0.0
      %5391 = vmatmul.mubr.f32.gmra.mrb[0].mxu0 %v5288
      %v5392 = vpop.f32.mrb[0].mxu0
      %v5393 = vadd.f32 0.0, %v5392
      %v5394 = vpop.f32.mrb[0].mxu0
      %5395 = vmatprep.mubr.f32.mxu0 0.0
      %5396 = vmatmul.mubr.f32.gmra.mrb[0].mxu0 %v5291
      %v5397 = vpop.f32.mrb[0].mxu0
      %v5398 = vadd.f32 0.0, %v5397
      %v5399 = vpop.f32.mrb[0].mxu0
      %5400 = vdwg.mxu0
      %vm5401 = vcmask 130048
      %v5402 = vsel %vm5401, %v4967, 0.0
      %v5403 = vsel %vm5401, %v5099, 0.0
      %v5404 = vadd.f32 %v5402, %v5403
      %v5405 = vsel %vm5401, %v5231, 0.0
      %v5406 = vadd.f32 %v5404, %v5405
      %v5407 = vsel %vm5401, %v5363, 0.0
      %v5408 = vadd.f32 %v5406, %v5407
      %v5409 = vsel %vm5401, %v4972, 0.0
      %v5410 = vsel %vm5401, %v5104, 0.0
      %v5411 = vadd.f32 %v5409, %v5410
      %v5412 = vsel %vm5401, %v5236, 0.0
      %v5413 = vadd.f32 %v5411, %v5412
      %v5414 = vsel %vm5401, %v5368, 0.0
      %v5415 = vadd.f32 %v5413, %v5414
      %v5416 = vsel %vm5401, %v4977, 0.0
      %v5417 = vsel %vm5401, %v5109, 0.0
      %v5418 = vadd.f32 %v5416, %v5417
      %v5419 = vsel %vm5401, %v5241, 0.0
      %v5420 = vadd.f32 %v5418, %v5419
      %v5421 = vsel %vm5401, %v5373, 0.0
      %v5422 = vadd.f32 %v5420, %v5421
      %v5423 = vsel %vm5401, %v4982, 0.0
      %v5424 = vsel %vm5401, %v5114, 0.0
      %v5425 = vadd.f32 %v5423, %v5424
      %v5426 = vsel %vm5401, %v5246, 0.0
      %v5427 = vadd.f32 %v5425, %v5426
      %v5428 = vsel %vm5401, %v5378, 0.0
      %v5429 = vadd.f32 %v5427, %v5428
      %v5430 = vsel %vm5401, %v4987, 0.0
      %v5431 = vsel %vm5401, %v5119, 0.0
      %v5432 = vadd.f32 %v5430, %v5431
      %v5433 = vsel %vm5401, %v5251, 0.0
      %v5434 = vadd.f32 %v5432, %v5433
      %v5435 = vsel %vm5401, %v5383, 0.0
      %v5436 = vadd.f32 %v5434, %v5435
      %v5437 = vsel %vm5401, %v4992, 0.0
      %v5438 = vsel %vm5401, %v5124, 0.0
      %v5439 = vadd.f32 %v5437, %v5438
      %v5440 = vsel %vm5401, %v5256, 0.0
      %v5441 = vadd.f32 %v5439, %v5440
      %v5442 = vsel %vm5401, %v5388, 0.0
      %v5443 = vadd.f32 %v5441, %v5442
      %v5444 = vsel %vm5401, %v4997, 0.0
      %v5445 = vsel %vm5401, %v5129, 0.0
      %v5446 = vadd.f32 %v5444, %v5445
      %v5447 = vsel %vm5401, %v5261, 0.0
      %v5448 = vadd.f32 %v5446, %v5447
      %v5449 = vsel %vm5401, %v5393, 0.0
      %v5450 = vadd.f32 %v5448, %v5449
      %v5451 = vsel %vm5401, %v5002, 0.0
      %v5452 = vsel %vm5401, %v5134, 0.0
      %v5453 = vadd.f32 %v5451, %v5452
      %v5454 = vsel %vm5401, %v5266, 0.0
      %v5455 = vadd.f32 %v5453, %v5454
      %v5456 = vsel %vm5401, %v5398, 0.0
      %v5457 = vadd.f32 %v5455, %v5456
      %v5458 = vld [vmem:[%s10] sm:$0x1]
      %v5460 = vlaneseq
      %v5461 = vshrl.u32 %v5460, 7
      %v5462 = vsub.s32 0, %v5461
      %v5463 = vrot.slane %v5458, %v5462
      %v5465 = vadd.f32 %v5408, %v5463
      %v5466 = vadd.f32 %v5415, %v5463
      %v5467 = vadd.f32 %v5422, %v5463
      %v5468 = vadd.f32 %v5429, %v5463
      %v5469 = vadd.f32 %v5436, %v5463
      %v5470 = vadd.f32 %v5443, %v5463
      %v5471 = vadd.f32 %v5450, %v5463
      %v5472 = vadd.f32 %v5457, %v5463
      %5473 = vst.msk [vmem:[%s461] sm:$0xff] %vm507, %v4827
      %5474 = vst.msk [vmem:[%s461 + $0x8] sm:$0xff] %vm507, %v4828
      %5475 = vst.msk [vmem:[%s461 + $0x10] sm:$0xff] %vm507, %v4829
      %5476 = vst.msk [vmem:[%s461 + $0x18] sm:$0xff] %vm507, %v4830
      %5477 = vst.msk [vmem:[%s461 + $0x20] sm:$0xff] %vm507, %v4831
      %5478 = vst.msk [vmem:[%s461 + $0x28] sm:$0xff] %vm507, %v4832
      %5479 = vst.msk [vmem:[%s461 + $0x30] sm:$0xff] %vm507, %v4833
      %5480 = vst.msk [vmem:[%s461 + $0x38] sm:$0xff] %vm507, %v4834
      %5481 = vst.msk [vmem:[%s466] sm:$0xff] %vm5401, %v5465
      %5482 = vst.msk [vmem:[%s466 + $0x8] sm:$0xff] %vm5401, %v5466
      %5483 = vst.msk [vmem:[%s466 + $0x10] sm:$0xff] %vm5401, %v5467
      %5484 = vst.msk [vmem:[%s466 + $0x18] sm:$0xff] %vm5401, %v5468
      %5485 = vst.msk [vmem:[%s466 + $0x20] sm:$0xff] %vm5401, %v5469
      %5486 = vst.msk [vmem:[%s466 + $0x28] sm:$0xff] %vm5401, %v5470
      %5487 = vst.msk [vmem:[%s466 + $0x30] sm:$0xff] %vm5401, %v5471
      %5488 = vst.msk [vmem:[%s466 + $0x38] sm:$0xff] %vm5401, %v5472
      %p5489 = scmp.lt.s32.totalorder %s24, 1
      %s5490 = scalar_select %p5489, %s24, 1
      %s5491 = smul.addr %s5490, 8
      %s5492 = smul.addr %s5491, 8
      %s5493 = scalar_lea.vmem %s11, %s5492
      %p5494 = scmp.lt.s32.totalorder %s24, 1
      %s5495 = scalar_select %p5494, %s24, 1
      %s5496 = smul.addr %s5495, 8
      %s5497 = smul.addr %s5496, 8
      %s5498 = scalar_lea.vmem %s12, %s5497
      // Predicated region
      $region65: #{interframe_attention.1} parent=63 // pred_check
        %p5499 = pneg %p288
      $region66: #{interframe_attention.1} parent=63 // pred_check_branch
        %5501 = sbr.rel (%p5499) target = $region68
      $region67: #{interframe_attention.1} parent=63 // pred_region
        _
      $region68: #{interframe_attention.1} parent=63 // pred_fallthru
        _
      // Predicated region
      $region69: #{interframe_attention.1} parent=63 // pred_check
        %p5502 = pneg %p314
      $region70: #{interframe_attention.1} parent=63 // pred_check_branch
        %5504 = sbr.rel (%p5502) target = $region72
      $region71: #{interframe_attention.1} parent=63 // pred_region
        _
      $region72: #{interframe_attention.1} parent=63 // pred_fallthru
        _
    $region64: #{interframe_attention.1} parent=5 // pred_fallthru
      _
    %p5505 = scmp.le.s32.totalorder 2, %s19
    // Predicated region
    $region73: #{interframe_attention.1} parent=5 // pred_check
      %p5506 = pneg %p5505
    $region74: #{interframe_attention.1} parent=5 // pred_check_branch
      %5508 = sbr.rel (%p5506) target = $region76
    $region75: #{interframe_attention.1} parent=5 // pred_region
      %s5509 = ssub.s32 %s19, 2
      // Predicated region
      $region77: #{interframe_attention.1} parent=75 // pred_check
        %p5510 = pneg %p294
      $region78: #{interframe_attention.1} parent=75 // pred_check_branch
        %5512 = sbr.rel (%p5510) target = $region80
      $region79: #{interframe_attention.1} parent=75 // pred_region
        %p5513 = scmp.lt.s32.totalorder %s25, 1
        %s5514 = scalar_select %p5513, %s25, 1
        %s5515 = smul.addr %s5514, 8
        %s5516 = smul.addr %s5515, 8
        %s5517 = scalar_lea.vmem %s11, %s5516
      $region80: #{interframe_attention.1} parent=75 // pred_fallthru
        _
      // Predicated region
      $region81: #{interframe_attention.1} parent=75 // pred_check
        %p5518 = pneg %p320
      $region82: #{interframe_attention.1} parent=75 // pred_check_branch
        %5520 = sbr.rel (%p5518) target = $region84
      $region83: #{interframe_attention.1} parent=75 // pred_region
        %p5521 = scmp.lt.s32.totalorder %s25, 1
        %s5522 = scalar_select %p5521, %s25, 1
        %s5523 = smul.addr %s5522, 8
        %s5524 = smul.addr %s5523, 8
        %s5525 = scalar_lea.vmem %s12, %s5524
      $region84: #{interframe_attention.1} parent=75 // pred_fallthru
        _
    $region76: #{interframe_attention.1} parent=5 // pred_fallthru
      _
  $region6: #{interframe_attention.1} parent=0 // loop_footer
    %s23 = sadd.s32 1, %s19
  $region7: #{interframe_attention.1} parent=0 // loop_footer_branch
    %18 = sbr.rel target = $region3
  $region8: #{interframe_attention.1} parent=0 // loop_exit
    _

</llo_original>
